<compile_context>
chip_gen: v5e
topology: v5e:2x2
jax: 0.10.0
libtpu: 0.0.40
codegen_flags: <defaults>
</compile_context>

<pallas_src>
import jax
import jax.numpy as jnp
from jax.experimental import pallas as pl
from jax.experimental.pallas import tpu as pltpu

KSIZE = 3           # conv kernel size (DoubleConvBlock default)
NEG_SLOPE = 0.01    # LeakyReLU default negative slope
LPAD = 8            # sublane-aligned pad-block width inside the padded scratch


def _fill_padded(pad_ref, interior, H, W):
    """Replicate-pad `interior` (H, W, C) into pad_ref (H+2, W+2*LPAD, C).

    Conceptual padded image X~[i, j] = interior[clamp(i-1), clamp(j-1)] lives
    at pad_ref[i, j + (LPAD - 1)].  All stores are sublane-tile aligned; only
    the column adjacent to the interior inside each 8-wide pad block is ever
    read by the conv taps.
    """
    C = interior.shape[-1]
    # interior at rows [1:H+1], sublanes [LPAD:LPAD+W] (offset 8 -> aligned)
    pad_ref[1:H + 1, LPAD:LPAD + W, :] = interior
    # top / bottom replicated rows (outer-dim offsets only -> always fine)
    pad_ref[0:1, LPAD:LPAD + W, :] = interior[0:1, :, :]
    pad_ref[H + 1:H + 2, LPAD:LPAD + W, :] = interior[H - 1:H, :, :]
    # left / right replicated columns: broadcast first / last interior column
    # (already including the replicated top/bottom rows -> corners correct)
    # over an aligned 8-wide block.
    pad_ref[:, 0:LPAD, :] = jnp.broadcast_to(
        pad_ref[:, LPAD:LPAD + 1, :], (H + 2, LPAD, C))
    pad_ref[:, LPAD + W:2 * LPAD + W, :] = jnp.broadcast_to(
        pad_ref[:, LPAD + W - 1:LPAD + W, :], (H + 2, LPAD, C))


def _conv3x3_bias_lrelu(pad_ref, w_ref, bias, H, W, Cin, Cout):
    """3x3 conv (9 shifted MXU matmuls) + bias + LeakyReLU from padded scratch."""
    acc = None
    for kh in range(KSIZE):
        for kw in range(KSIZE):
            patch = pad_ref[kh:kh + H, LPAD - 1 + kw:LPAD - 1 + kw + W, :]
            patch = patch.reshape(H * W, Cin)
            d = jnp.dot(patch, w_ref[kh, kw],
                        preferred_element_type=jnp.float32)
            acc = d if acc is None else acc + d
    acc = acc + bias                                   # (H*W, Cout) + (1, Cout)
    return jnp.where(acc > 0, acc, NEG_SLOPE * acc)


def double_conv_kernel(x_ref, w1_ref, b1_ref, w2_ref, b2_ref, o_ref,
                       xpad_ref, a1pad_ref, hpool_ref):
    # x_ref: (1, H, W, Cin)   w*: (3, 3, Ci, Co)   b*: (1, Co)
    # o_ref: (1, H//2, W//2, Cout)
    H, W, Cin = x_ref.shape[1], x_ref.shape[2], x_ref.shape[3]
    Cmid = w1_ref.shape[3]
    Cout = w2_ref.shape[3]
    Hp, Wp = H // 2, W // 2

    # ---- conv1: replicate-pad input in VMEM, conv + bias + LeakyReLU -------
    _fill_padded(xpad_ref, x_ref[0], H, W)
    act1 = _conv3x3_bias_lrelu(xpad_ref, w1_ref, b1_ref[...],
                               H, W, Cin, Cmid)        # (H*W, Cmid)

    # ---- conv2: pad the fused intermediate (never leaves VMEM) -------------
    _fill_padded(a1pad_ref, act1.reshape(H, W, Cmid), H, W)
    act2 = _conv3x3_bias_lrelu(a1pad_ref, w2_ref, b2_ref[...],
                               H, W, Cmid, Cout)       # (H*W, Cout)

    # ---- 2x2 max-pool, stride 2 --------------------------------------------
    # H direction directly on the value: (H*W, C) -> (Hp, 2W, C) is a
    # layout-preserving split of the leading dim.
    r = act2.reshape(Hp, 2 * W, Cout)
    hmax = jnp.maximum(r[:, 0:W, :], r[:, W:2 * W, :])          # (Hp, W, Cout)
    # W direction via a half-size scratch and two stride-2 reads.
    hpool_ref[...] = hmax
    pooled = jnp.maximum(hpool_ref[:, pl.ds(0, Wp, stride=2), :],
                         hpool_ref[:, pl.ds(1, Wp, stride=2), :])
    o_ref[0] = pooled.astype(o_ref.dtype)


def double_conv_block(x_nchw, w1, b1, w2, b2):
    """Forward of DoubleConvBlock (defaults: normalization=False, pooling=True).

    x_nchw: (N, Cin, H, W) float32
    w1: (3, 3, Cin, Cmid)  b1: (1, Cmid)
    w2: (3, 3, Cmid, Cout) b2: (1, Cout)
    returns: (N, Cout, H//2, W//2)
    """
    N, Cin, H, W = x_nchw.shape
    Cmid = w1.shape[3]
    Cout = w2.shape[3]
    assert H % 2 == 0 and W % 2 == 0, "2x2/stride-2 pooling needs even H, W"
    assert W % 8 == 0, "W must be a multiple of 8 (sublane tile) for this kernel"
    # TODO(synk): for large images add an H-tiled grid axis with a 1-row halo so
    # one step's blocks + scratch stay within v7x's 64 MiB VMEM.

    x = jnp.transpose(x_nchw, (0, 2, 3, 1)).astype(jnp.float32)  # NHWC
    Hp, Wp = H // 2, W // 2

    y = pl.pallas_call(
        double_conv_kernel,
        out_shape=jax.ShapeDtypeStruct((N, Hp, Wp, Cout), jnp.float32),
        grid=(N,),
        in_specs=[
            pl.BlockSpec((1, H, W, Cin), lambda n: (n, 0, 0, 0)),
            pl.BlockSpec((KSIZE, KSIZE, Cin, Cmid), lambda n: (0, 0, 0, 0)),
            pl.BlockSpec((1, Cmid), lambda n: (0, 0)),
            pl.BlockSpec((KSIZE, KSIZE, Cmid, Cout), lambda n: (0, 0, 0, 0)),
            pl.BlockSpec((1, Cout), lambda n: (0, 0)),
        ],
        out_specs=pl.BlockSpec((1, Hp, Wp, Cout), lambda n: (n, 0, 0, 0)),
        scratch_shapes=[
            pltpu.VMEM((H + 2, W + 2 * LPAD, Cin), jnp.float32),   # padded input
            pltpu.VMEM((H + 2, W + 2 * LPAD, Cmid), jnp.float32),  # padded act1
            pltpu.VMEM((Hp, W, Cout), jnp.float32),                # H-pooled act2
        ],
        compiler_params=pltpu.CompilerParams(
            dimension_semantics=("parallel",),        # batch is independent -> 2 TCs on v7x
            vmem_limit_bytes=32 * 1024 * 1024),
    )(x, w1, b1, w2, b2)

    return jnp.transpose(y, (0, 3, 1, 2))  # back to NCHW


# ---------------------------------------------------------------------------
# Pure-JAX reference (for correctness check only)
# ---------------------------------------------------------------------------
def _ref_conv_block(x_nhwc, w, b):
    xp = jnp.pad(x_nhwc, ((0, 0), (1, 1), (1, 1), (0, 0)), mode="edge")
    out = jax.lax.conv_general_dilated(
        xp, w, window_strides=(1, 1), padding="VALID",
        dimension_numbers=("NHWC", "HWIO", "NHWC"))
    out = out + b.reshape(1, 1, 1, -1)
    return jnp.where(out > 0, out, NEG_SLOPE * out)


def _ref_forward(x_nchw, w1, b1, w2, b2):
    x = jnp.transpose(x_nchw, (0, 2, 3, 1)).astype(jnp.float32)
    a1 = _ref_conv_block(x, w1, b1)
    a2 = _ref_conv_block(a1, w2, b2)
    pooled = jax.lax.reduce_window(
        a2, -jnp.inf, jax.lax.max,
        window_dimensions=(1, 2, 2, 1), window_strides=(1, 2, 2, 1),
        padding="VALID")
    return jnp.transpose(pooled, (0, 3, 1, 2))


def _kaiming_normal(key, shape):
    # shape = (kh, kw, in, out); fan_in = kh * kw * in, gain = sqrt(2)
    fan_in = shape[0] * shape[1] * shape[2]
    std = (2.0 / fan_in) ** 0.5
    return std * jax.random.normal(key, shape, dtype=jnp.float32)


if __name__ == "__main__":
    # Shapes consistent with DoubleConvBlock(in_depth=4, out_depth=8)
    N, Cin, H, W = 2, 4, 16, 16
    Cmid, Cout = 8, 8

    key = jax.random.PRNGKey(0)
    kx, kw1, kw2 = jax.random.split(key, 3)

    x = jax.random.normal(kx, (N, Cin, H, W), dtype=jnp.float32)
    w1 = _kaiming_normal(kw1, (KSIZE, KSIZE, Cin, Cmid))
    b1 = jnp.zeros((1, Cmid), jnp.float32)          # bias_initialization='zeros'
    w2 = _kaiming_normal(kw2, (KSIZE, KSIZE, Cmid, Cout))
    b2 = jnp.zeros((1, Cout), jnp.float32)

    out = jax.jit(double_conv_block)(x, w1, b1, w2, b2)
    out = jax.block_until_ready(out)

    ref = jax.block_until_ready(_ref_forward(x, w1, b1, w2, b2))
    assert out.shape == (N, Cout, H // 2, W // 2), out.shape
    assert jnp.allclose(out, ref, rtol=1e-4, atol=1e-4), \
        float(jnp.max(jnp.abs(out - ref)))

    print("KERNEL_OK")
</pallas_src>

<mosaic_0001>
module attributes {stable_mosaic.version = 11 : i64} {
  func.func @double_conv_kernel(%arg0: i32, %arg1: memref<1x16x16x4xf32, #tpu.memory_space<vmem>>, %arg2: memref<3x3x4x8xf32, #tpu.memory_space<vmem>>, %arg3: memref<1x8xf32, #tpu.memory_space<vmem>>, %arg4: memref<3x3x8x8xf32, #tpu.memory_space<vmem>>, %arg5: memref<1x8xf32, #tpu.memory_space<vmem>>, %arg6: memref<1x8x8x8xf32, #tpu.memory_space<vmem>>, %arg7: memref<18x32x4xf32, #tpu.memory_space<vmem>>, %arg8: memref<18x32x8xf32, #tpu.memory_space<vmem>>, %arg9: memref<8x16x8xf32, #tpu.memory_space<vmem>>) attributes {dimension_semantics = [#tpu.dimension_semantics<parallel>], iteration_bounds = array<i64: 2>, scalar_prefetch = 0 : i64, scratch_operands = 3 : i64, tpu.core_type = #tpu.core_type<tc>, window_params = [{transform_indices = @transform_0, window_bounds = array<i64: 1, 16, 16, 4>}, {pipeline_mode = #tpu.pipeline_mode<synchronous>, transform_indices = @transform_1, window_bounds = array<i64: 3, 3, 4, 8>}, {pipeline_mode = #tpu.pipeline_mode<synchronous>, transform_indices = @transform_2, window_bounds = array<i64: 1, 8>}, {pipeline_mode = #tpu.pipeline_mode<synchronous>, transform_indices = @transform_3, window_bounds = array<i64: 3, 3, 8, 8>}, {pipeline_mode = #tpu.pipeline_mode<synchronous>, transform_indices = @transform_4, window_bounds = array<i64: 1, 8>}, {transform_indices = @transform_5, window_bounds = array<i64: 1, 8, 8, 8>}]} {
    %c0 = arith.constant 0 : index
    %c0_0 = arith.constant 0 : index
    %c0_1 = arith.constant 0 : index
    %c0_2 = arith.constant 0 : index
    %0 = vector.load %arg1[%c0, %c0_0, %c0_1, %c0_2] : memref<1x16x16x4xf32, #tpu.memory_space<vmem>>, vector<1x16x16x4xf32>
    %1 = vector.shape_cast %0 : vector<1x16x16x4xf32> to vector<16x16x4xf32>
    %c1 = arith.constant 1 : index
    %c8 = arith.constant 8 : index
    %c0_3 = arith.constant 0 : index
    %2 = vector.load %arg7[%c1, %c8, %c0_3] : memref<18x32x4xf32, #tpu.memory_space<vmem>>, vector<16x16x4xf32>
    tpu.vector_store %arg7[%c1, %c8, %c0_3], %1 {strides = array<i32>} : memref<18x32x4xf32, #tpu.memory_space<vmem>>, vector<16x16x4xf32>,
    %3 = vector.extract_strided_slice %1 {offsets = [0, 0, 0], sizes = [1, 16, 4], strides = [1, 1, 1]} : vector<16x16x4xf32> to vector<1x16x4xf32>
    %c0_4 = arith.constant 0 : index
    %c8_5 = arith.constant 8 : index
    %c0_6 = arith.constant 0 : index
    %4 = vector.load %arg7[%c0_4, %c8_5, %c0_6] : memref<18x32x4xf32, #tpu.memory_space<vmem>>, vector<1x16x4xf32>
    tpu.vector_store %arg7[%c0_4, %c8_5, %c0_6], %3 {strides = array<i32>} : memref<18x32x4xf32, #tpu.memory_space<vmem>>, vector<1x16x4xf32>,
    %5 = vector.extract_strided_slice %1 {offsets = [15, 0, 0], sizes = [1, 16, 4], strides = [1, 1, 1]} : vector<16x16x4xf32> to vector<1x16x4xf32>
    %c17 = arith.constant 17 : index
    %c8_7 = arith.constant 8 : index
    %c0_8 = arith.constant 0 : index
    %6 = vector.load %arg7[%c17, %c8_7, %c0_8] : memref<18x32x4xf32, #tpu.memory_space<vmem>>, vector<1x16x4xf32>
    tpu.vector_store %arg7[%c17, %c8_7, %c0_8], %5 {strides = array<i32>} : memref<18x32x4xf32, #tpu.memory_space<vmem>>, vector<1x16x4xf32>,
    %c0_9 = arith.constant 0 : index
    %c8_10 = arith.constant 8 : index
    %c0_11 = arith.constant 0 : index
    %7 = vector.load %arg7[%c0_9, %c8_10, %c0_11] : memref<18x32x4xf32, #tpu.memory_space<vmem>>, vector<18x1x4xf32>
    %8 = vector.shape_cast %7 : vector<18x1x4xf32> to vector<18x1x4xf32>
    %9 = vector.broadcast %8 : vector<18x1x4xf32> to vector<18x8x4xf32>
    %c0_12 = arith.constant 0 : index
    %c0_13 = arith.constant 0 : index
    %c0_14 = arith.constant 0 : index
    %10 = vector.load %arg7[%c0_12, %c0_13, %c0_14] : memref<18x32x4xf32, #tpu.memory_space<vmem>>, vector<18x8x4xf32>
    tpu.vector_store %arg7[%c0_12, %c0_13, %c0_14], %9 {strides = array<i32>} : memref<18x32x4xf32, #tpu.memory_space<vmem>>, vector<18x8x4xf32>,
    %c0_15 = arith.constant 0 : index
    %c23 = arith.constant 23 : index
    %c0_16 = arith.constant 0 : index
    %11 = vector.load %arg7[%c0_15, %c23, %c0_16] : memref<18x32x4xf32, #tpu.memory_space<vmem>>, vector<18x1x4xf32>
    %12 = vector.shape_cast %11 : vector<18x1x4xf32> to vector<18x1x4xf32>
    %13 = vector.broadcast %12 : vector<18x1x4xf32> to vector<18x8x4xf32>
    %c0_17 = arith.constant 0 : index
    %c24 = arith.constant 24 : index
    %c0_18 = arith.constant 0 : index
    %14 = vector.load %arg7[%c0_17, %c24, %c0_18] : memref<18x32x4xf32, #tpu.memory_space<vmem>>, vector<18x8x4xf32>
    tpu.vector_store %arg7[%c0_17, %c24, %c0_18], %13 {strides = array<i32>} : memref<18x32x4xf32, #tpu.memory_space<vmem>>, vector<18x8x4xf32>,
    %c0_19 = arith.constant 0 : index
    %c0_20 = arith.constant 0 : index
    %15 = vector.load %arg3[%c0_19, %c0_20] : memref<1x8xf32, #tpu.memory_space<vmem>>, vector<1x8xf32>
    %c0_21 = arith.constant 0 : index
    %c7 = arith.constant 7 : index
    %c0_22 = arith.constant 0 : index
    %16 = vector.load %arg7[%c0_21, %c7, %c0_22] : memref<18x32x4xf32, #tpu.memory_space<vmem>>, vector<16x16x4xf32>
    %17 = vector.shape_cast %16 : vector<16x16x4xf32> to vector<256x4xf32>
    %c0_23 = arith.constant 0 : index
    %c0_24 = arith.constant 0 : index
    %c0_25 = arith.constant 0 : index
    %c0_26 = arith.constant 0 : index
    %18 = vector.load %arg2[%c0_23, %c0_24, %c0_25, %c0_26] : memref<3x3x4x8xf32, #tpu.memory_space<vmem>>, vector<1x1x4x8xf32>
    %19 = vector.shape_cast %18 : vector<1x1x4x8xf32> to vector<4x8xf32>
    %cst = arith.constant dense<0.000000e+00> : vector<256x8xf32>
    %20 = tpu.matmul %17, %19, %cst {dimension_numbers = #tpu.dot_dimension_numbers<[1], [0], [0], [1], [0, 0, 1, 1], [], []>} : vector<256x4xf32>, vector<4x8xf32>, vector<256x8xf32> -> vector<256x8xf32>
    %c0_27 = arith.constant 0 : index
    %c8_28 = arith.constant 8 : index
    %c0_29 = arith.constant 0 : index
    %21 = vector.load %arg7[%c0_27, %c8_28, %c0_29] : memref<18x32x4xf32, #tpu.memory_space<vmem>>, vector<16x16x4xf32>
    %22 = vector.shape_cast %21 : vector<16x16x4xf32> to vector<256x4xf32>
    %c0_30 = arith.constant 0 : index
    %c1_31 = arith.constant 1 : index
    %c0_32 = arith.constant 0 : index
    %c0_33 = arith.constant 0 : index
    %23 = vector.load %arg2[%c0_30, %c1_31, %c0_32, %c0_33] : memref<3x3x4x8xf32, #tpu.memory_space<vmem>>, vector<1x1x4x8xf32>
    %24 = vector.shape_cast %23 : vector<1x1x4x8xf32> to vector<4x8xf32>
    %cst_34 = arith.constant dense<0.000000e+00> : vector<256x8xf32>
    %25 = tpu.matmul %22, %24, %cst_34 {dimension_numbers = #tpu.dot_dimension_numbers<[1], [0], [0], [1], [0, 0, 1, 1], [], []>} : vector<256x4xf32>, vector<4x8xf32>, vector<256x8xf32> -> vector<256x8xf32>
    %26 = arith.addf %20, %25 : vector<256x8xf32>
    %c0_35 = arith.constant 0 : index
    %c9 = arith.constant 9 : index
    %c0_36 = arith.constant 0 : index
    %27 = vector.load %arg7[%c0_35, %c9, %c0_36] : memref<18x32x4xf32, #tpu.memory_space<vmem>>, vector<16x16x4xf32>
    %28 = vector.shape_cast %27 : vector<16x16x4xf32> to vector<256x4xf32>
    %c0_37 = arith.constant 0 : index
    %c2 = arith.constant 2 : index
    %c0_38 = arith.constant 0 : index
    %c0_39 = arith.constant 0 : index
    %29 = vector.load %arg2[%c0_37, %c2, %c0_38, %c0_39] : memref<3x3x4x8xf32, #tpu.memory_space<vmem>>, vector<1x1x4x8xf32>
    %30 = vector.shape_cast %29 : vector<1x1x4x8xf32> to vector<4x8xf32>
    %cst_40 = arith.constant dense<0.000000e+00> : vector<256x8xf32>
    %31 = tpu.matmul %28, %30, %cst_40 {dimension_numbers = #tpu.dot_dimension_numbers<[1], [0], [0], [1], [0, 0, 1, 1], [], []>} : vector<256x4xf32>, vector<4x8xf32>, vector<256x8xf32> -> vector<256x8xf32>
    %32 = arith.addf %26, %31 : vector<256x8xf32>
    %c1_41 = arith.constant 1 : index
    %c7_42 = arith.constant 7 : index
    %c0_43 = arith.constant 0 : index
    %33 = vector.load %arg7[%c1_41, %c7_42, %c0_43] : memref<18x32x4xf32, #tpu.memory_space<vmem>>, vector<16x16x4xf32>
    %34 = vector.shape_cast %33 : vector<16x16x4xf32> to vector<256x4xf32>
    %c1_44 = arith.constant 1 : index
    %c0_45 = arith.constant 0 : index
    %c0_46 = arith.constant 0 : index
    %c0_47 = arith.constant 0 : index
    %35 = vector.load %arg2[%c1_44, %c0_45, %c0_46, %c0_47] : memref<3x3x4x8xf32, #tpu.memory_space<vmem>>, vector<1x1x4x8xf32>
    %36 = vector.shape_cast %35 : vector<1x1x4x8xf32> to vector<4x8xf32>
    %cst_48 = arith.constant dense<0.000000e+00> : vector<256x8xf32>
    %37 = tpu.matmul %34, %36, %cst_48 {dimension_numbers = #tpu.dot_dimension_numbers<[1], [0], [0], [1], [0, 0, 1, 1], [], []>} : vector<256x4xf32>, vector<4x8xf32>, vector<256x8xf32> -> vector<256x8xf32>
    %38 = arith.addf %32, %37 : vector<256x8xf32>
    %c1_49 = arith.constant 1 : index
    %c8_50 = arith.constant 8 : index
    %c0_51 = arith.constant 0 : index
    %39 = vector.load %arg7[%c1_49, %c8_50, %c0_51] : memref<18x32x4xf32, #tpu.memory_space<vmem>>, vector<16x16x4xf32>
    %40 = vector.shape_cast %39 : vector<16x16x4xf32> to vector<256x4xf32>
    %c1_52 = arith.constant 1 : index
    %c1_53 = arith.constant 1 : index
    %c0_54 = arith.constant 0 : index
    %c0_55 = arith.constant 0 : index
    %41 = vector.load %arg2[%c1_52, %c1_53, %c0_54, %c0_55] : memref<3x3x4x8xf32, #tpu.memory_space<vmem>>, vector<1x1x4x8xf32>
    %42 = vector.shape_cast %41 : vector<1x1x4x8xf32> to vector<4x8xf32>
    %cst_56 = arith.constant dense<0.000000e+00> : vector<256x8xf32>
    %43 = tpu.matmul %40, %42, %cst_56 {dimension_numbers = #tpu.dot_dimension_numbers<[1], [0], [0], [1], [0, 0, 1, 1], [], []>} : vector<256x4xf32>, vector<4x8xf32>, vector<256x8xf32> -> vector<256x8xf32>
    %44 = arith.addf %38, %43 : vector<256x8xf32>
    %c1_57 = arith.constant 1 : index
    %c9_58 = arith.constant 9 : index
    %c0_59 = arith.constant 0 : index
    %45 = vector.load %arg7[%c1_57, %c9_58, %c0_59] : memref<18x32x4xf32, #tpu.memory_space<vmem>>, vector<16x16x4xf32>
    %46 = vector.shape_cast %45 : vector<16x16x4xf32> to vector<256x4xf32>
    %c1_60 = arith.constant 1 : index
    %c2_61 = arith.constant 2 : index
    %c0_62 = arith.constant 0 : index
    %c0_63 = arith.constant 0 : index
    %47 = vector.load %arg2[%c1_60, %c2_61, %c0_62, %c0_63] : memref<3x3x4x8xf32, #tpu.memory_space<vmem>>, vector<1x1x4x8xf32>
    %48 = vector.shape_cast %47 : vector<1x1x4x8xf32> to vector<4x8xf32>
    %cst_64 = arith.constant dense<0.000000e+00> : vector<256x8xf32>
    %49 = tpu.matmul %46, %48, %cst_64 {dimension_numbers = #tpu.dot_dimension_numbers<[1], [0], [0], [1], [0, 0, 1, 1], [], []>} : vector<256x4xf32>, vector<4x8xf32>, vector<256x8xf32> -> vector<256x8xf32>
    %50 = arith.addf %44, %49 : vector<256x8xf32>
    %c2_65 = arith.constant 2 : index
    %c7_66 = arith.constant 7 : index
    %c0_67 = arith.constant 0 : index
    %51 = vector.load %arg7[%c2_65, %c7_66, %c0_67] : memref<18x32x4xf32, #tpu.memory_space<vmem>>, vector<16x16x4xf32>
    %52 = vector.shape_cast %51 : vector<16x16x4xf32> to vector<256x4xf32>
    %c2_68 = arith.constant 2 : index
    %c0_69 = arith.constant 0 : index
    %c0_70 = arith.constant 0 : index
    %c0_71 = arith.constant 0 : index
    %53 = vector.load %arg2[%c2_68, %c0_69, %c0_70, %c0_71] : memref<3x3x4x8xf32, #tpu.memory_space<vmem>>, vector<1x1x4x8xf32>
    %54 = vector.shape_cast %53 : vector<1x1x4x8xf32> to vector<4x8xf32>
    %cst_72 = arith.constant dense<0.000000e+00> : vector<256x8xf32>
    %55 = tpu.matmul %52, %54, %cst_72 {dimension_numbers = #tpu.dot_dimension_numbers<[1], [0], [0], [1], [0, 0, 1, 1], [], []>} : vector<256x4xf32>, vector<4x8xf32>, vector<256x8xf32> -> vector<256x8xf32>
    %56 = arith.addf %50, %55 : vector<256x8xf32>
    %c2_73 = arith.constant 2 : index
    %c8_74 = arith.constant 8 : index
    %c0_75 = arith.constant 0 : index
    %57 = vector.load %arg7[%c2_73, %c8_74, %c0_75] : memref<18x32x4xf32, #tpu.memory_space<vmem>>, vector<16x16x4xf32>
    %58 = vector.shape_cast %57 : vector<16x16x4xf32> to vector<256x4xf32>
    %c2_76 = arith.constant 2 : index
    %c1_77 = arith.constant 1 : index
    %c0_78 = arith.constant 0 : index
    %c0_79 = arith.constant 0 : index
    %59 = vector.load %arg2[%c2_76, %c1_77, %c0_78, %c0_79] : memref<3x3x4x8xf32, #tpu.memory_space<vmem>>, vector<1x1x4x8xf32>
    %60 = vector.shape_cast %59 : vector<1x1x4x8xf32> to vector<4x8xf32>
    %cst_80 = arith.constant dense<0.000000e+00> : vector<256x8xf32>
    %61 = tpu.matmul %58, %60, %cst_80 {dimension_numbers = #tpu.dot_dimension_numbers<[1], [0], [0], [1], [0, 0, 1, 1], [], []>} : vector<256x4xf32>, vector<4x8xf32>, vector<256x8xf32> -> vector<256x8xf32>
    %62 = arith.addf %56, %61 : vector<256x8xf32>
    %c2_81 = arith.constant 2 : index
    %c9_82 = arith.constant 9 : index
    %c0_83 = arith.constant 0 : index
    %63 = vector.load %arg7[%c2_81, %c9_82, %c0_83] : memref<18x32x4xf32, #tpu.memory_space<vmem>>, vector<16x16x4xf32>
    %64 = vector.shape_cast %63 : vector<16x16x4xf32> to vector<256x4xf32>
    %c2_84 = arith.constant 2 : index
    %c2_85 = arith.constant 2 : index
    %c0_86 = arith.constant 0 : index
    %c0_87 = arith.constant 0 : index
    %65 = vector.load %arg2[%c2_84, %c2_85, %c0_86, %c0_87] : memref<3x3x4x8xf32, #tpu.memory_space<vmem>>, vector<1x1x4x8xf32>
    %66 = vector.shape_cast %65 : vector<1x1x4x8xf32> to vector<4x8xf32>
    %cst_88 = arith.constant dense<0.000000e+00> : vector<256x8xf32>
    %67 = tpu.matmul %64, %66, %cst_88 {dimension_numbers = #tpu.dot_dimension_numbers<[1], [0], [0], [1], [0, 0, 1, 1], [], []>} : vector<256x4xf32>, vector<4x8xf32>, vector<256x8xf32> -> vector<256x8xf32>
    %68 = arith.addf %62, %67 : vector<256x8xf32>
    %69 = vector.broadcast %15 : vector<1x8xf32> to vector<256x8xf32>
    %70 = arith.addf %68, %69 : vector<256x8xf32>
    %cst_89 = arith.constant 0.000000e+00 : f32
    %71 = vector.broadcast %cst_89 : f32 to vector<256x8xf32>
    %72 = arith.cmpf ogt, %70, %71 : vector<256x8xf32>
    %cst_90 = arith.constant 0.00999999977 : f32
    %73 = vector.broadcast %cst_90 : f32 to vector<256x8xf32>
    %74 = arith.mulf %73, %70 : vector<256x8xf32>
    %75 = arith.select %72, %70, %74 : vector<256x8xi1>, vector<256x8xf32>
    %76 = vector.shape_cast %75 : vector<256x8xf32> to vector<16x16x8xf32>
    %c1_91 = arith.constant 1 : index
    %c8_92 = arith.constant 8 : index
    %c0_93 = arith.constant 0 : index
    %77 = vector.load %arg8[%c1_91, %c8_92, %c0_93] : memref<18x32x8xf32, #tpu.memory_space<vmem>>, vector<16x16x8xf32>
    tpu.vector_store %arg8[%c1_91, %c8_92, %c0_93], %76 {strides = array<i32>} : memref<18x32x8xf32, #tpu.memory_space<vmem>>, vector<16x16x8xf32>,
    %78 = vector.extract_strided_slice %76 {offsets = [0, 0, 0], sizes = [1, 16, 8], strides = [1, 1, 1]} : vector<16x16x8xf32> to vector<1x16x8xf32>
    %c0_94 = arith.constant 0 : index
    %c8_95 = arith.constant 8 : index
    %c0_96 = arith.constant 0 : index
    %79 = vector.load %arg8[%c0_94, %c8_95, %c0_96] : memref<18x32x8xf32, #tpu.memory_space<vmem>>, vector<1x16x8xf32>
    tpu.vector_store %arg8[%c0_94, %c8_95, %c0_96], %78 {strides = array<i32>} : memref<18x32x8xf32, #tpu.memory_space<vmem>>, vector<1x16x8xf32>,
    %80 = vector.extract_strided_slice %76 {offsets = [15, 0, 0], sizes = [1, 16, 8], strides = [1, 1, 1]} : vector<16x16x8xf32> to vector<1x16x8xf32>
    %c17_97 = arith.constant 17 : index
    %c8_98 = arith.constant 8 : index
    %c0_99 = arith.constant 0 : index
    %81 = vector.load %arg8[%c17_97, %c8_98, %c0_99] : memref<18x32x8xf32, #tpu.memory_space<vmem>>, vector<1x16x8xf32>
    tpu.vector_store %arg8[%c17_97, %c8_98, %c0_99], %80 {strides = array<i32>} : memref<18x32x8xf32, #tpu.memory_space<vmem>>, vector<1x16x8xf32>,
    %c0_100 = arith.constant 0 : index
    %c8_101 = arith.constant 8 : index
    %c0_102 = arith.constant 0 : index
    %82 = vector.load %arg8[%c0_100, %c8_101, %c0_102] : memref<18x32x8xf32, #tpu.memory_space<vmem>>, vector<18x1x8xf32>
    %83 = vector.shape_cast %82 : vector<18x1x8xf32> to vector<18x1x8xf32>
    %84 = vector.broadcast %83 : vector<18x1x8xf32> to vector<18x8x8xf32>
    %c0_103 = arith.constant 0 : index
    %c0_104 = arith.constant 0 : index
    %c0_105 = arith.constant 0 : index
    %85 = vector.load %arg8[%c0_103, %c0_104, %c0_105] : memref<18x32x8xf32, #tpu.memory_space<vmem>>, vector<18x8x8xf32>
    tpu.vector_store %arg8[%c0_103, %c0_104, %c0_105], %84 {strides = array<i32>} : memref<18x32x8xf32, #tpu.memory_space<vmem>>, vector<18x8x8xf32>,
    %c0_106 = arith.constant 0 : index
    %c23_107 = arith.constant 23 : index
    %c0_108 = arith.constant 0 : index
    %86 = vector.load %arg8[%c0_106, %c23_107, %c0_108] : memref<18x32x8xf32, #tpu.memory_space<vmem>>, vector<18x1x8xf32>
    %87 = vector.shape_cast %86 : vector<18x1x8xf32> to vector<18x1x8xf32>
    %88 = vector.broadcast %87 : vector<18x1x8xf32> to vector<18x8x8xf32>
    %c0_109 = arith.constant 0 : index
    %c24_110 = arith.constant 24 : index
    %c0_111 = arith.constant 0 : index
    %89 = vector.load %arg8[%c0_109, %c24_110, %c0_111] : memref<18x32x8xf32, #tpu.memory_space<vmem>>, vector<18x8x8xf32>
    tpu.vector_store %arg8[%c0_109, %c24_110, %c0_111], %88 {strides = array<i32>} : memref<18x32x8xf32, #tpu.memory_space<vmem>>, vector<18x8x8xf32>,
    %c0_112 = arith.constant 0 : index
    %c0_113 = arith.constant 0 : index
    %90 = vector.load %arg5[%c0_112, %c0_113] : memref<1x8xf32, #tpu.memory_space<vmem>>, vector<1x8xf32>
    %c0_114 = arith.constant 0 : index
    %c7_115 = arith.constant 7 : index
    %c0_116 = arith.constant 0 : index
    %91 = vector.load %arg8[%c0_114, %c7_115, %c0_116] : memref<18x32x8xf32, #tpu.memory_space<vmem>>, vector<16x16x8xf32>
    %92 = vector.shape_cast %91 : vector<16x16x8xf32> to vector<256x8xf32>
    %c0_117 = arith.constant 0 : index
    %c0_118 = arith.constant 0 : index
    %c0_119 = arith.constant 0 : index
    %c0_120 = arith.constant 0 : index
    %93 = vector.load %arg4[%c0_117, %c0_118, %c0_119, %c0_120] : memref<3x3x8x8xf32, #tpu.memory_space<vmem>>, vector<1x1x8x8xf32>
    %94 = vector.shape_cast %93 : vector<1x1x8x8xf32> to vector<8x8xf32>
    %cst_121 = arith.constant dense<0.000000e+00> : vector<256x8xf32>
    %95 = tpu.matmul %92, %94, %cst_121 {dimension_numbers = #tpu.dot_dimension_numbers<[1], [0], [0], [1], [0, 0, 1, 1], [], []>} : vector<256x8xf32>, vector<8x8xf32>, vector<256x8xf32> -> vector<256x8xf32>
    %c0_122 = arith.constant 0 : index
    %c8_123 = arith.constant 8 : index
    %c0_124 = arith.constant 0 : index
    %96 = vector.load %arg8[%c0_122, %c8_123, %c0_124] : memref<18x32x8xf32, #tpu.memory_space<vmem>>, vector<16x16x8xf32>
    %97 = vector.shape_cast %96 : vector<16x16x8xf32> to vector<256x8xf32>
    %c0_125 = arith.constant 0 : index
    %c1_126 = arith.constant 1 : index
    %c0_127 = arith.constant 0 : index
    %c0_128 = arith.constant 0 : index
    %98 = vector.load %arg4[%c0_125, %c1_126, %c0_127, %c0_128] : memref<3x3x8x8xf32, #tpu.memory_space<vmem>>, vector<1x1x8x8xf32>
    %99 = vector.shape_cast %98 : vector<1x1x8x8xf32> to vector<8x8xf32>
    %cst_129 = arith.constant dense<0.000000e+00> : vector<256x8xf32>
    %100 = tpu.matmul %97, %99, %cst_129 {dimension_numbers = #tpu.dot_dimension_numbers<[1], [0], [0], [1], [0, 0, 1, 1], [], []>} : vector<256x8xf32>, vector<8x8xf32>, vector<256x8xf32> -> vector<256x8xf32>
    %101 = arith.addf %95, %100 : vector<256x8xf32>
    %c0_130 = arith.constant 0 : index
    %c9_131 = arith.constant 9 : index
    %c0_132 = arith.constant 0 : index
    %102 = vector.load %arg8[%c0_130, %c9_131, %c0_132] : memref<18x32x8xf32, #tpu.memory_space<vmem>>, vector<16x16x8xf32>
    %103 = vector.shape_cast %102 : vector<16x16x8xf32> to vector<256x8xf32>
    %c0_133 = arith.constant 0 : index
    %c2_134 = arith.constant 2 : index
    %c0_135 = arith.constant 0 : index
    %c0_136 = arith.constant 0 : index
    %104 = vector.load %arg4[%c0_133, %c2_134, %c0_135, %c0_136] : memref<3x3x8x8xf32, #tpu.memory_space<vmem>>, vector<1x1x8x8xf32>
    %105 = vector.shape_cast %104 : vector<1x1x8x8xf32> to vector<8x8xf32>
    %cst_137 = arith.constant dense<0.000000e+00> : vector<256x8xf32>
    %106 = tpu.matmul %103, %105, %cst_137 {dimension_numbers = #tpu.dot_dimension_numbers<[1], [0], [0], [1], [0, 0, 1, 1], [], []>} : vector<256x8xf32>, vector<8x8xf32>, vector<256x8xf32> -> vector<256x8xf32>
    %107 = arith.addf %101, %106 : vector<256x8xf32>
    %c1_138 = arith.constant 1 : index
    %c7_139 = arith.constant 7 : index
    %c0_140 = arith.constant 0 : index
    %108 = vector.load %arg8[%c1_138, %c7_139, %c0_140] : memref<18x32x8xf32, #tpu.memory_space<vmem>>, vector<16x16x8xf32>
    %109 = vector.shape_cast %108 : vector<16x16x8xf32> to vector<256x8xf32>
    %c1_141 = arith.constant 1 : index
    %c0_142 = arith.constant 0 : index
    %c0_143 = arith.constant 0 : index
    %c0_144 = arith.constant 0 : index
    %110 = vector.load %arg4[%c1_141, %c0_142, %c0_143, %c0_144] : memref<3x3x8x8xf32, #tpu.memory_space<vmem>>, vector<1x1x8x8xf32>
    %111 = vector.shape_cast %110 : vector<1x1x8x8xf32> to vector<8x8xf32>
    %cst_145 = arith.constant dense<0.000000e+00> : vector<256x8xf32>
    %112 = tpu.matmul %109, %111, %cst_145 {dimension_numbers = #tpu.dot_dimension_numbers<[1], [0], [0], [1], [0, 0, 1, 1], [], []>} : vector<256x8xf32>, vector<8x8xf32>, vector<256x8xf32> -> vector<256x8xf32>
    %113 = arith.addf %107, %112 : vector<256x8xf32>
    %c1_146 = arith.constant 1 : index
    %c8_147 = arith.constant 8 : index
    %c0_148 = arith.constant 0 : index
    %114 = vector.load %arg8[%c1_146, %c8_147, %c0_148] : memref<18x32x8xf32, #tpu.memory_space<vmem>>, vector<16x16x8xf32>
    %115 = vector.shape_cast %114 : vector<16x16x8xf32> to vector<256x8xf32>
    %c1_149 = arith.constant 1 : index
    %c1_150 = arith.constant 1 : index
    %c0_151 = arith.constant 0 : index
    %c0_152 = arith.constant 0 : index
    %116 = vector.load %arg4[%c1_149, %c1_150, %c0_151, %c0_152] : memref<3x3x8x8xf32, #tpu.memory_space<vmem>>, vector<1x1x8x8xf32>
    %117 = vector.shape_cast %116 : vector<1x1x8x8xf32> to vector<8x8xf32>
    %cst_153 = arith.constant dense<0.000000e+00> : vector<256x8xf32>
    %118 = tpu.matmul %115, %117, %cst_153 {dimension_numbers = #tpu.dot_dimension_numbers<[1], [0], [0], [1], [0, 0, 1, 1], [], []>} : vector<256x8xf32>, vector<8x8xf32>, vector<256x8xf32> -> vector<256x8xf32>
    %119 = arith.addf %113, %118 : vector<256x8xf32>
    %c1_154 = arith.constant 1 : index
    %c9_155 = arith.constant 9 : index
    %c0_156 = arith.constant 0 : index
    %120 = vector.load %arg8[%c1_154, %c9_155, %c0_156] : memref<18x32x8xf32, #tpu.memory_space<vmem>>, vector<16x16x8xf32>
    %121 = vector.shape_cast %120 : vector<16x16x8xf32> to vector<256x8xf32>
    %c1_157 = arith.constant 1 : index
    %c2_158 = arith.constant 2 : index
    %c0_159 = arith.constant 0 : index
    %c0_160 = arith.constant 0 : index
    %122 = vector.load %arg4[%c1_157, %c2_158, %c0_159, %c0_160] : memref<3x3x8x8xf32, #tpu.memory_space<vmem>>, vector<1x1x8x8xf32>
    %123 = vector.shape_cast %122 : vector<1x1x8x8xf32> to vector<8x8xf32>
    %cst_161 = arith.constant dense<0.000000e+00> : vector<256x8xf32>
    %124 = tpu.matmul %121, %123, %cst_161 {dimension_numbers = #tpu.dot_dimension_numbers<[1], [0], [0], [1], [0, 0, 1, 1], [], []>} : vector<256x8xf32>, vector<8x8xf32>, vector<256x8xf32> -> vector<256x8xf32>
    %125 = arith.addf %119, %124 : vector<256x8xf32>
    %c2_162 = arith.constant 2 : index
    %c7_163 = arith.constant 7 : index
    %c0_164 = arith.constant 0 : index
    %126 = vector.load %arg8[%c2_162, %c7_163, %c0_164] : memref<18x32x8xf32, #tpu.memory_space<vmem>>, vector<16x16x8xf32>
    %127 = vector.shape_cast %126 : vector<16x16x8xf32> to vector<256x8xf32>
    %c2_165 = arith.constant 2 : index
    %c0_166 = arith.constant 0 : index
    %c0_167 = arith.constant 0 : index
    %c0_168 = arith.constant 0 : index
    %128 = vector.load %arg4[%c2_165, %c0_166, %c0_167, %c0_168] : memref<3x3x8x8xf32, #tpu.memory_space<vmem>>, vector<1x1x8x8xf32>
    %129 = vector.shape_cast %128 : vector<1x1x8x8xf32> to vector<8x8xf32>
    %cst_169 = arith.constant dense<0.000000e+00> : vector<256x8xf32>
    %130 = tpu.matmul %127, %129, %cst_169 {dimension_numbers = #tpu.dot_dimension_numbers<[1], [0], [0], [1], [0, 0, 1, 1], [], []>} : vector<256x8xf32>, vector<8x8xf32>, vector<256x8xf32> -> vector<256x8xf32>
    %131 = arith.addf %125, %130 : vector<256x8xf32>
    %c2_170 = arith.constant 2 : index
    %c8_171 = arith.constant 8 : index
    %c0_172 = arith.constant 0 : index
    %132 = vector.load %arg8[%c2_170, %c8_171, %c0_172] : memref<18x32x8xf32, #tpu.memory_space<vmem>>, vector<16x16x8xf32>
    %133 = vector.shape_cast %132 : vector<16x16x8xf32> to vector<256x8xf32>
    %c2_173 = arith.constant 2 : index
    %c1_174 = arith.constant 1 : index
    %c0_175 = arith.constant 0 : index
    %c0_176 = arith.constant 0 : index
    %134 = vector.load %arg4[%c2_173, %c1_174, %c0_175, %c0_176] : memref<3x3x8x8xf32, #tpu.memory_space<vmem>>, vector<1x1x8x8xf32>
    %135 = vector.shape_cast %134 : vector<1x1x8x8xf32> to vector<8x8xf32>
    %cst_177 = arith.constant dense<0.000000e+00> : vector<256x8xf32>
    %136 = tpu.matmul %133, %135, %cst_177 {dimension_numbers = #tpu.dot_dimension_numbers<[1], [0], [0], [1], [0, 0, 1, 1], [], []>} : vector<256x8xf32>, vector<8x8xf32>, vector<256x8xf32> -> vector<256x8xf32>
    %137 = arith.addf %131, %136 : vector<256x8xf32>
    %c2_178 = arith.constant 2 : index
    %c9_179 = arith.constant 9 : index
    %c0_180 = arith.constant 0 : index
    %138 = vector.load %arg8[%c2_178, %c9_179, %c0_180] : memref<18x32x8xf32, #tpu.memory_space<vmem>>, vector<16x16x8xf32>
    %139 = vector.shape_cast %138 : vector<16x16x8xf32> to vector<256x8xf32>
    %c2_181 = arith.constant 2 : index
    %c2_182 = arith.constant 2 : index
    %c0_183 = arith.constant 0 : index
    %c0_184 = arith.constant 0 : index
    %140 = vector.load %arg4[%c2_181, %c2_182, %c0_183, %c0_184] : memref<3x3x8x8xf32, #tpu.memory_space<vmem>>, vector<1x1x8x8xf32>
    %141 = vector.shape_cast %140 : vector<1x1x8x8xf32> to vector<8x8xf32>
    %cst_185 = arith.constant dense<0.000000e+00> : vector<256x8xf32>
    %142 = tpu.matmul %139, %141, %cst_185 {dimension_numbers = #tpu.dot_dimension_numbers<[1], [0], [0], [1], [0, 0, 1, 1], [], []>} : vector<256x8xf32>, vector<8x8xf32>, vector<256x8xf32> -> vector<256x8xf32>
    %143 = arith.addf %137, %142 : vector<256x8xf32>
    %144 = vector.broadcast %90 : vector<1x8xf32> to vector<256x8xf32>
    %145 = arith.addf %143, %144 : vector<256x8xf32>
    %cst_186 = arith.constant 0.000000e+00 : f32
    %146 = vector.broadcast %cst_186 : f32 to vector<256x8xf32>
    %147 = arith.cmpf ogt, %145, %146 : vector<256x8xf32>
    %cst_187 = arith.constant 0.00999999977 : f32
    %148 = vector.broadcast %cst_187 : f32 to vector<256x8xf32>
    %149 = arith.mulf %148, %145 : vector<256x8xf32>
    %150 = arith.select %147, %145, %149 : vector<256x8xi1>, vector<256x8xf32>
    %151 = vector.shape_cast %150 : vector<256x8xf32> to vector<8x32x8xf32>
    %152 = vector.extract_strided_slice %151 {offsets = [0, 0, 0], sizes = [8, 16, 8], strides = [1, 1, 1]} : vector<8x32x8xf32> to vector<8x16x8xf32>
    %153 = vector.extract_strided_slice %151 {offsets = [0, 16, 0], sizes = [8, 16, 8], strides = [1, 1, 1]} : vector<8x32x8xf32> to vector<8x16x8xf32>
    %154 = arith.maximumf %152, %153 : vector<8x16x8xf32>
    %c0_188 = arith.constant 0 : index
    %c0_189 = arith.constant 0 : index
    %c0_190 = arith.constant 0 : index
    %155 = vector.load %arg9[%c0_188, %c0_189, %c0_190] : memref<8x16x8xf32, #tpu.memory_space<vmem>>, vector<8x16x8xf32>
    tpu.vector_store %arg9[%c0_188, %c0_189, %c0_190], %154 {strides = array<i32>} : memref<8x16x8xf32, #tpu.memory_space<vmem>>, vector<8x16x8xf32>,
    %c0_191 = arith.constant 0 : index
    %c0_192 = arith.constant 0 : index
    %c0_193 = arith.constant 0 : index
    %156 = tpu.strided_load %arg9[%c0_191, %c0_192, %c0_193] {strides = array<i32: 1, 2, 1>} : memref<8x16x8xf32, #tpu.memory_space<vmem>>, vector<8x8x8xf32>
    %c0_194 = arith.constant 0 : index
    %c1_195 = arith.constant 1 : index
    %c0_196 = arith.constant 0 : index
    %157 = tpu.strided_load %arg9[%c0_194, %c1_195, %c0_196] {strides = array<i32: 1, 2, 1>} : memref<8x16x8xf32, #tpu.memory_space<vmem>>, vector<8x8x8xf32>
    %158 = arith.maximumf %156, %157 : vector<8x8x8xf32>
    %c0_197 = arith.constant 0 : index
    %c0_198 = arith.constant 0 : index
    %c0_199 = arith.constant 0 : index
    %c0_200 = arith.constant 0 : index
    %159 = vector.load %arg6[%c0_197, %c0_198, %c0_199, %c0_200] : memref<1x8x8x8xf32, #tpu.memory_space<vmem>>, vector<1x8x8x8xf32>
    %160 = vector.shape_cast %159 : vector<1x8x8x8xf32> to vector<8x8x8xf32>
    %161 = vector.shape_cast %158 : vector<8x8x8xf32> to vector<1x8x8x8xf32>
    tpu.vector_store %arg6[%c0_197, %c0_198, %c0_199, %c0_200], %161 {strides = array<i32>} : memref<1x8x8x8xf32, #tpu.memory_space<vmem>>, vector<1x8x8x8xf32>,
    return
  }
  func.func @transform_0(%arg0: i32) -> (i32, i32, i32, i32) {
    %c0_i32 = arith.constant 0 : i32
    %c0_i32_0 = arith.constant 0 : i32
    %c0_i32_1 = arith.constant 0 : i32
    %c0_i32_2 = arith.constant 0 : i32
    return %arg0, %c0_i32, %c0_i32_0, %c0_i32_1 : i32, i32, i32, i32
  }
  func.func @transform_1(%arg0: i32) -> (i32, i32, i32, i32) {
    %c0_i32 = arith.constant 0 : i32
    %c0_i32_0 = arith.constant 0 : i32
    %c0_i32_1 = arith.constant 0 : i32
    %c0_i32_2 = arith.constant 0 : i32
    %c0_i32_3 = arith.constant 0 : i32
    return %c0_i32, %c0_i32_0, %c0_i32_1, %c0_i32_2 : i32, i32, i32, i32
  }
  func.func @transform_2(%arg0: i32) -> (i32, i32) {
    %c0_i32 = arith.constant 0 : i32
    %c0_i32_0 = arith.constant 0 : i32
    %c0_i32_1 = arith.constant 0 : i32
    return %c0_i32, %c0_i32_0 : i32, i32
  }
  func.func @transform_3(%arg0: i32) -> (i32, i32, i32, i32) {
    %c0_i32 = arith.constant 0 : i32
    %c0_i32_0 = arith.constant 0 : i32
    %c0_i32_1 = arith.constant 0 : i32
    %c0_i32_2 = arith.constant 0 : i32
    %c0_i32_3 = arith.constant 0 : i32
    return %c0_i32, %c0_i32_0, %c0_i32_1, %c0_i32_2 : i32, i32, i32, i32
  }
  func.func @transform_4(%arg0: i32) -> (i32, i32) {
    %c0_i32 = arith.constant 0 : i32
    %c0_i32_0 = arith.constant 0 : i32
    %c0_i32_1 = arith.constant 0 : i32
    return %c0_i32, %c0_i32_0 : i32, i32
  }
  func.func @transform_5(%arg0: i32) -> (i32, i32, i32, i32) {
    %c0_i32 = arith.constant 0 : i32
    %c0_i32_0 = arith.constant 0 : i32
    %c0_i32_1 = arith.constant 0 : i32
    %c0_i32_2 = arith.constant 0 : i32
    return %arg0, %c0_i32, %c0_i32_0, %c0_i32_1 : i32, i32, i32, i32
  }
}

</mosaic_0001>

<llo_original>
// kernel: double_conv_block.1
$region0: #{double_conv_block.1}
  #allocation0 [shape = 'u32[]', space=smem, size = 0x4, offset = 0x4, fixed_abs, tag = 'smem constant byte address 0x4 - core index']
  #allocation1 [shape = 'u32[72,128]{1,0:T(1,128)}', space=vmem, size = 0x9000, scoped, tag = 'internal scratch']
  #allocation2 [shape = 'f32[18,32,4]{2,1,0:T(8,128)}', space=vmem, size = 0x48000, scoped, tag = 'scratch operand']
  #allocation3 [shape = 'f32[18,32,8]{2,1,0:T(8,128)}', space=vmem, size = 0x48000, scoped, tag = 'scratch operand']
  #allocation4 [shape = 'f32[8,16,8]{2,1,0:T(8,128)}', space=vmem, size = 0x10000, scoped, tag = 'scratch operand']
  %s0 = inlined_call_operand.vmem [shape: f32[2,16,16,4], index: 0, kind: input, shape index: {}]
  %s1 = inlined_call_operand.vmem [shape: f32[3,3,4,8], index: 1, kind: input, shape index: {}]
  %s2 = inlined_call_operand.vmem [shape: f32[1,8], index: 2, kind: input, shape index: {}]
  %s3 = inlined_call_operand.vmem [shape: f32[3,3,8,8], index: 3, kind: input, shape index: {}]
  %s4 = inlined_call_operand.vmem [shape: f32[1,8], index: 4, kind: input, shape index: {}]
  %s5 = inlined_call_operand.vmem [shape: f32[2,8,8,8], index: 5, kind: output, shape index: {}]
  %s6 = sld [smem:[#allocation0]]
  $region53: #{double_conv_block.1} parent=0
    _
  %s8 = ssub.s32 1, %s6
  %s9 = scalar_select 0, %s8, %s6
  loop: start=0, step=1, limit=4
  $region2: #{double_conv_block.1} parent=0 // loop_pre_header
    _
  $region3: #{double_conv_block.1} parent=0 // loop_header
    %s11 = sphi 0, %s15
    %p12 = scmp.ge.s32.totalorder %s11, 4
    %s21 = sphi 0, %s23
    %s24 = sphi 0, %s21
    %s25 = sphi 0, %s24
    %s41 = sphi 0, %s25
    %s45 = sphi 0, %s45
    %s47 = sphi 0, %s45
    %s48 = sphi 0, %s47
    %s62 = sphi 0, %s48
    %s66 = sphi 0, %s66
    %s68 = sphi 0, %s66
    %s69 = sphi 0, %s68
    %s83 = sphi 0, %s69
    %s87 = sphi 0, %s87
    %s89 = sphi 0, %s87
    %s90 = sphi 0, %s89
    %s104 = sphi 0, %s90
    %s108 = sphi 0, %s108
    %s110 = sphi 0, %s108
    %s111 = sphi 0, %s110
    %s125 = sphi 0, %s111
    %s131 = sphi 0, %s133
    %s134 = sphi 0, %s131
    %s135 = sphi 0, %s134
    %s151 = sphi 0, %s135
  $region4: #{double_conv_block.1} parent=0 // loop_header_branch
    %14 = sbr.rel (%p12) target = $region8
  $region5: #{double_conv_block.1} parent=0 // loop_body
    %s16 = ssub.s32 %s11, 1
    %s17 = ssub.s32 %s11, 2
    %s18 = sadd.s32 %s11, 1
    %s19 = ssub.s32 %s11, %s18
    %p20 = scmp.eq.s32.totalorder %s19, 0
    %s22 = sadd.s32 %s21, 1
    %s23 = scalar_select %p20, %s21, %s22
    %p26 = pneg %p20
    %p27 = scmp.eq.s32.totalorder %s11, 1
    %p28 = por %p26, %p27
    %p29 = scmp.ne.s32.totalorder %s21, %s24
    %p30 = scmp.eq.s32.totalorder %s11, 0
    %p31 = por %p29, %p30
    %p32 = scmp.ne.s32.totalorder %s21, %s24
    %p33 = scmp.eq.s32.totalorder %s16, 1
    %p34 = por %p32, %p33
    %p35 = scmp.ne.s32.totalorder %s24, %s25
    %p36 = scmp.eq.s32.totalorder %s16, 0
    %p37 = por %p35, %p36
    %p38 = scmp.ne.s32.totalorder %s24, %s25
    %p39 = scmp.eq.s32.totalorder %s17, 1
    %p40 = por %p38, %p39
    %p42 = scmp.ne.s32.totalorder %s25, %s41
    %p43 = scmp.eq.s32.totalorder %s17, 0
    %p44 = por %p42, %p43
    %s46 = sadd.s32 %s45, 1
    %p49 = scmp.eq.s32.totalorder %s11, 1
    %p50 = scmp.ne.s32.totalorder %s45, %s47
    %p51 = scmp.eq.s32.totalorder %s11, 0
    %p52 = por %p50, %p51
    %p53 = scmp.ne.s32.totalorder %s45, %s47
    %p54 = scmp.eq.s32.totalorder %s16, 1
    %p55 = por %p53, %p54
    %p56 = scmp.ne.s32.totalorder %s47, %s48
    %p57 = scmp.eq.s32.totalorder %s16, 0
    %p58 = por %p56, %p57
    %p59 = scmp.ne.s32.totalorder %s47, %s48
    %p60 = scmp.eq.s32.totalorder %s17, 1
    %p61 = por %p59, %p60
    %p63 = scmp.ne.s32.totalorder %s48, %s62
    %p64 = scmp.eq.s32.totalorder %s17, 0
    %p65 = por %p63, %p64
    %s67 = sadd.s32 %s66, 1
    %p70 = scmp.eq.s32.totalorder %s11, 1
    %p71 = scmp.ne.s32.totalorder %s66, %s68
    %p72 = scmp.eq.s32.totalorder %s11, 0
    %p73 = por %p71, %p72
    %p74 = scmp.ne.s32.totalorder %s66, %s68
    %p75 = scmp.eq.s32.totalorder %s16, 1
    %p76 = por %p74, %p75
    %p77 = scmp.ne.s32.totalorder %s68, %s69
    %p78 = scmp.eq.s32.totalorder %s16, 0
    %p79 = por %p77, %p78
    %p80 = scmp.ne.s32.totalorder %s68, %s69
    %p81 = scmp.eq.s32.totalorder %s17, 1
    %p82 = por %p80, %p81
    %p84 = scmp.ne.s32.totalorder %s69, %s83
    %p85 = scmp.eq.s32.totalorder %s17, 0
    %p86 = por %p84, %p85
    %s88 = sadd.s32 %s87, 1
    %p91 = scmp.eq.s32.totalorder %s11, 1
    %p92 = scmp.ne.s32.totalorder %s87, %s89
    %p93 = scmp.eq.s32.totalorder %s11, 0
    %p94 = por %p92, %p93
    %p95 = scmp.ne.s32.totalorder %s87, %s89
    %p96 = scmp.eq.s32.totalorder %s16, 1
    %p97 = por %p95, %p96
    %p98 = scmp.ne.s32.totalorder %s89, %s90
    %p99 = scmp.eq.s32.totalorder %s16, 0
    %p100 = por %p98, %p99
    %p101 = scmp.ne.s32.totalorder %s89, %s90
    %p102 = scmp.eq.s32.totalorder %s17, 1
    %p103 = por %p101, %p102
    %p105 = scmp.ne.s32.totalorder %s90, %s104
    %p106 = scmp.eq.s32.totalorder %s17, 0
    %p107 = por %p105, %p106
    %s109 = sadd.s32 %s108, 1
    %p112 = scmp.eq.s32.totalorder %s11, 1
    %p113 = scmp.ne.s32.totalorder %s108, %s110
    %p114 = scmp.eq.s32.totalorder %s11, 0
    %p115 = por %p113, %p114
    %p116 = scmp.ne.s32.totalorder %s108, %s110
    %p117 = scmp.eq.s32.totalorder %s16, 1
    %p118 = por %p116, %p117
    %p119 = scmp.ne.s32.totalorder %s110, %s111
    %p120 = scmp.eq.s32.totalorder %s16, 0
    %p121 = por %p119, %p120
    %p122 = scmp.ne.s32.totalorder %s110, %s111
    %p123 = scmp.eq.s32.totalorder %s17, 1
    %p124 = por %p122, %p123
    %p126 = scmp.ne.s32.totalorder %s111, %s125
    %p127 = scmp.eq.s32.totalorder %s17, 0
    %p128 = por %p126, %p127
    %s129 = ssub.s32 %s11, %s18
    %p130 = scmp.eq.s32.totalorder %s129, 0
    %s132 = sadd.s32 %s131, 1
    %s133 = scalar_select %p130, %s131, %s132
    %p136 = pneg %p130
    %p137 = scmp.eq.s32.totalorder %s11, 1
    %p138 = por %p136, %p137
    %p139 = scmp.ne.s32.totalorder %s131, %s134
    %p140 = scmp.eq.s32.totalorder %s11, 0
    %p141 = por %p139, %p140
    %p142 = scmp.ne.s32.totalorder %s131, %s134
    %p143 = scmp.eq.s32.totalorder %s16, 1
    %p144 = por %p142, %p143
    %p145 = scmp.ne.s32.totalorder %s134, %s135
    %p146 = scmp.eq.s32.totalorder %s16, 0
    %p147 = por %p145, %p146
    %p148 = scmp.ne.s32.totalorder %s134, %s135
    %p149 = scmp.eq.s32.totalorder %s17, 1
    %p150 = por %p148, %p149
    %p152 = scmp.ne.s32.totalorder %s135, %s151
    %p153 = scmp.eq.s32.totalorder %s17, 0
    %p154 = por %p152, %p153
    %p155 = scmp.le.s32.totalorder 1, %s11
    %p156 = scmp.lt.s32.totalorder %s11, 3
    %p157 = pnand %p155, %p156
    %p158 = pneg %p157
    // Predicated region
    $region9: #{double_conv_block.1} parent=5 // pred_check
      _
    $region10: #{double_conv_block.1} parent=5 // pred_check_branch
      %160 = sbr.rel (%p157) target = $region12
    $region11: #{double_conv_block.1} parent=5 // pred_region
      %s161 = ssub.s32 %s11, 1
      // Predicated region
      $region13: #{double_conv_block.1} parent=11 // pred_check
        %p162 = pneg %p58
      $region14: #{double_conv_block.1} parent=11 // pred_check_branch
        %164 = sbr.rel (%p162) target = $region16
      $region15: #{double_conv_block.1} parent=11 // pred_region
        _
      $region16: #{double_conv_block.1} parent=11 // pred_fallthru
        _
      // Predicated region
      $region17: #{double_conv_block.1} parent=11 // pred_check
        %p165 = pneg %p79
      $region18: #{double_conv_block.1} parent=11 // pred_check_branch
        %167 = sbr.rel (%p165) target = $region20
      $region19: #{double_conv_block.1} parent=11 // pred_region
        _
      $region20: #{double_conv_block.1} parent=11 // pred_fallthru
        _
      // Predicated region
      $region21: #{double_conv_block.1} parent=11 // pred_check
        %p168 = pneg %p100
      $region22: #{double_conv_block.1} parent=11 // pred_check_branch
        %170 = sbr.rel (%p168) target = $region24
      $region23: #{double_conv_block.1} parent=11 // pred_region
        _
      $region24: #{double_conv_block.1} parent=11 // pred_fallthru
        _
      // Predicated region
      $region25: #{double_conv_block.1} parent=11 // pred_check
        %p171 = pneg %p121
      $region26: #{double_conv_block.1} parent=11 // pred_check_branch
        %173 = sbr.rel (%p171) target = $region28
      $region27: #{double_conv_block.1} parent=11 // pred_region
        _
      $region28: #{double_conv_block.1} parent=11 // pred_fallthru
        _
    $region12: #{double_conv_block.1} parent=5 // pred_fallthru
      _
    %p174 = scmp.lt.s32.totalorder %s11, 2
    // Predicated region
    $region29: #{double_conv_block.1} parent=5 // pred_check
      %p175 = pneg %p174
    $region30: #{double_conv_block.1} parent=5 // pred_check_branch
      %177 = sbr.rel (%p175) target = $region32
    $region31: #{double_conv_block.1} parent=5 // pred_region
      // Predicated region
      $region33: #{double_conv_block.1} parent=31 // pred_check
        %p178 = pneg %p31
      $region34: #{double_conv_block.1} parent=31 // pred_check_branch
        %180 = sbr.rel (%p178) target = $region36
      $region35: #{double_conv_block.1} parent=31 // pred_region
        %p181 = scmp.lt.s32.totalorder %s11, 1
        %s182 = scalar_select %p181, %s11, 1
        %s183 = smul.addr %s182, 32
        %s184 = smul.addr %s183, 8
        %s185 = scalar_lea.vmem %s0, %s184
      $region36: #{double_conv_block.1} parent=31 // pred_fallthru
        _
    $region32: #{double_conv_block.1} parent=5 // pred_fallthru
      _
    %p186 = scmp.le.s32.totalorder 1, %s11
    %p187 = scmp.lt.s32.totalorder %s11, 3
    %p188 = pnand %p186, %p187
    %p189 = pneg %p188
    // Predicated region
    $region37: #{double_conv_block.1} parent=5 // pred_check
      _
    $region38: #{double_conv_block.1} parent=5 // pred_check_branch
      %191 = sbr.rel (%p188) target = $region40
    $region39: #{double_conv_block.1} parent=5 // pred_region
      %s192 = ssub.s32 %s11, 1
      %p193 = scmp.lt.s32.totalorder %s16, 1
      %s194 = scalar_select %p193, %s16, 1
      %s195 = smul.addr %s194, 32
      %s196 = smul.addr %s195, 8
      %s197 = scalar_lea.vmem %s0, %s196
      %p198 = pneg %p37
      %p199 = pneg %p34
      %p200 = pneg %p58
      %p201 = pneg %p55
      %p202 = pneg %p79
      %p203 = pneg %p76
      %p204 = pneg %p100
      %p205 = pneg %p97
      %p206 = pneg %p121
      %p207 = pneg %p118
      %p208 = pneg %p147
      %p209 = pneg %p144
      %p210 = scmp.lt.s32.totalorder %s16, 1
      %s211 = scalar_select %p210, %s16, 1
      %s212 = smul.addr %s211, 8
      %s213 = smul.addr %s212, 8
      %s214 = scalar_lea.vmem %s5, %s213
      %p215 = scmp.lt.s32.totalorder %s16, 1
      %s216 = scalar_select %p215, %s16, 1
      %s217 = smul.addr %s216, 32
      %s218 = smul.addr %s217, 8
      %s219 = scalar_lea.vmem %s0, %s218
      %p220 = scmp.lt.s32.totalorder %s16, 1
      %s221 = scalar_select %p220, %s16, 1
      %s222 = smul.addr %s221, 8
      %s223 = smul.addr %s222, 8
      %s224 = scalar_lea.vmem %s5, %s223
      %v225 = vld [vmem:[%s219] sm:$0xff]
      %v226 = vld [vmem:[%s219 + $0x8] sm:$0xff]
      %v227 = vld [vmem:[%s219 + $0x10] sm:$0xff]
      %v228 = vld [vmem:[%s219 + $0x18] sm:$0xff]
      %v229 = vld [vmem:[%s219 + $0x20] sm:$0xff]
      %v230 = vld [vmem:[%s219 + $0x28] sm:$0xff]
      %v231 = vld [vmem:[%s219 + $0x30] sm:$0xff]
      %v232 = vld [vmem:[%s219 + $0x38] sm:$0xff]
      %v233 = vld [vmem:[%s219 + $0x40] sm:$0xff]
      %v234 = vld [vmem:[%s219 + $0x48] sm:$0xff]
      %v235 = vld [vmem:[%s219 + $0x50] sm:$0xff]
      %v236 = vld [vmem:[%s219 + $0x58] sm:$0xff]
      %v237 = vld [vmem:[%s219 + $0x60] sm:$0xff]
      %v238 = vld [vmem:[%s219 + $0x68] sm:$0xff]
      %v239 = vld [vmem:[%s219 + $0x70] sm:$0xff]
      %v240 = vld [vmem:[%s219 + $0x78] sm:$0xff]
      %v241 = vld [vmem:[%s219 + $0x80] sm:$0xff]
      %v242 = vld [vmem:[%s219 + $0x88] sm:$0xff]
      %v243 = vld [vmem:[%s219 + $0x90] sm:$0xff]
      %v244 = vld [vmem:[%s219 + $0x98] sm:$0xff]
      %v245 = vld [vmem:[%s219 + $0xa0] sm:$0xff]
      %v246 = vld [vmem:[%s219 + $0xa8] sm:$0xff]
      %v247 = vld [vmem:[%s219 + $0xb0] sm:$0xff]
      %v248 = vld [vmem:[%s219 + $0xb8] sm:$0xff]
      %v249 = vld [vmem:[%s219 + $0xc0] sm:$0xff]
      %v250 = vld [vmem:[%s219 + $0xc8] sm:$0xff]
      %v251 = vld [vmem:[%s219 + $0xd0] sm:$0xff]
      %v252 = vld [vmem:[%s219 + $0xd8] sm:$0xff]
      %v253 = vld [vmem:[%s219 + $0xe0] sm:$0xff]
      %v254 = vld [vmem:[%s219 + $0xe8] sm:$0xff]
      %v255 = vld [vmem:[%s219 + $0xf0] sm:$0xff]
      %v256 = vld [vmem:[%s219 + $0xf8] sm:$0xff]
      %s257 = scalar_lea.vmem [#allocation2], 32
      %vm258 = vcmask 31744
      %259 = vst.msk [vmem:[%s257 + $0x8] sm:$0xff] %vm258, %v225
      %260 = vst.msk [vmem:[%s257 + $0x10] sm:$0xff] %vm258, %v226
      %261 = vst.msk [vmem:[%s257 + $0x28] sm:$0xff] %vm258, %v227
      %262 = vst.msk [vmem:[%s257 + $0x30] sm:$0xff] %vm258, %v228
      %263 = vst.msk [vmem:[%s257 + $0x48] sm:$0xff] %vm258, %v229
      %264 = vst.msk [vmem:[%s257 + $0x50] sm:$0xff] %vm258, %v230
      %265 = vst.msk [vmem:[%s257 + $0x68] sm:$0xff] %vm258, %v231
      %266 = vst.msk [vmem:[%s257 + $0x70] sm:$0xff] %vm258, %v232
      %267 = vst.msk [vmem:[%s257 + $0x88] sm:$0xff] %vm258, %v233
      %268 = vst.msk [vmem:[%s257 + $0x90] sm:$0xff] %vm258, %v234
      %269 = vst.msk [vmem:[%s257 + $0xa8] sm:$0xff] %vm258, %v235
      %270 = vst.msk [vmem:[%s257 + $0xb0] sm:$0xff] %vm258, %v236
      %271 = vst.msk [vmem:[%s257 + $0xc8] sm:$0xff] %vm258, %v237
      %272 = vst.msk [vmem:[%s257 + $0xd0] sm:$0xff] %vm258, %v238
      %273 = vst.msk [vmem:[%s257 + $0xe8] sm:$0xff] %vm258, %v239
      %274 = vst.msk [vmem:[%s257 + $0xf0] sm:$0xff] %vm258, %v240
      %275 = vst.msk [vmem:[%s257 + $0x108] sm:$0xff] %vm258, %v241
      %276 = vst.msk [vmem:[%s257 + $0x110] sm:$0xff] %vm258, %v242
      %277 = vst.msk [vmem:[%s257 + $0x128] sm:$0xff] %vm258, %v243
      %278 = vst.msk [vmem:[%s257 + $0x130] sm:$0xff] %vm258, %v244
      %279 = vst.msk [vmem:[%s257 + $0x148] sm:$0xff] %vm258, %v245
      %280 = vst.msk [vmem:[%s257 + $0x150] sm:$0xff] %vm258, %v246
      %281 = vst.msk [vmem:[%s257 + $0x168] sm:$0xff] %vm258, %v247
      %282 = vst.msk [vmem:[%s257 + $0x170] sm:$0xff] %vm258, %v248
      %283 = vst.msk [vmem:[%s257 + $0x188] sm:$0xff] %vm258, %v249
      %284 = vst.msk [vmem:[%s257 + $0x190] sm:$0xff] %vm258, %v250
      %285 = vst.msk [vmem:[%s257 + $0x1a8] sm:$0xff] %vm258, %v251
      %286 = vst.msk [vmem:[%s257 + $0x1b0] sm:$0xff] %vm258, %v252
      %287 = vst.msk [vmem:[%s257 + $0x1c8] sm:$0xff] %vm258, %v253
      %288 = vst.msk [vmem:[%s257 + $0x1d0] sm:$0xff] %vm258, %v254
      %289 = vst.msk [vmem:[%s257 + $0x1e8] sm:$0xff] %vm258, %v255
      %290 = vst.msk [vmem:[%s257 + $0x1f0] sm:$0xff] %vm258, %v256
      %291 = vst.msk [vmem:[#allocation2 + $0x8] sm:$0xff] %vm258, %v225
      %292 = vst.msk [vmem:[#allocation2 + $0x10] sm:$0xff] %vm258, %v226
      %s293 = scalar_lea.vmem [#allocation2], 544
      %294 = vst.msk [vmem:[%s293 + $0x8] sm:$0xff] %vm258, %v255
      %295 = vst.msk [vmem:[%s293 + $0x10] sm:$0xff] %vm258, %v256
      %v296 = vld [vmem:[#allocation2 + $0x8] sm:$0x1]
      %v297 = vld [vmem:[#allocation2 + $0x28] sm:$0x1]
      %v298 = vld [vmem:[#allocation2 + $0x48] sm:$0x1]
      %v299 = vld [vmem:[#allocation2 + $0x68] sm:$0x1]
      %v300 = vld [vmem:[#allocation2 + $0x88] sm:$0x1]
      %v301 = vld [vmem:[#allocation2 + $0xa8] sm:$0x1]
      %v302 = vld [vmem:[#allocation2 + $0xc8] sm:$0x1]
      %v303 = vld [vmem:[#allocation2 + $0xe8] sm:$0x1]
      %v304 = vld [vmem:[#allocation2 + $0x108] sm:$0x1]
      %v305 = vld [vmem:[#allocation2 + $0x128] sm:$0x1]
      %v306 = vld [vmem:[#allocation2 + $0x148] sm:$0x1]
      %v307 = vld [vmem:[#allocation2 + $0x168] sm:$0x1]
      %v308 = vld [vmem:[#allocation2 + $0x188] sm:$0x1]
      %v309 = vld [vmem:[#allocation2 + $0x1a8] sm:$0x1]
      %v310 = vld [vmem:[#allocation2 + $0x1c8] sm:$0x1]
      %v311 = vld [vmem:[#allocation2 + $0x1e8] sm:$0x1]
      %v312 = vld [vmem:[#allocation2 + $0x208] sm:$0x1]
      %v313 = vld [vmem:[#allocation2 + $0x228] sm:$0x1]
      %v314 = vperm.slane %v296, 0
      %v315 = vperm.slane %v297, 0
      %v316 = vperm.slane %v298, 0
      %v317 = vperm.slane %v299, 0
      %v318 = vperm.slane %v300, 0
      %v319 = vperm.slane %v301, 0
      %v320 = vperm.slane %v302, 0
      %v321 = vperm.slane %v303, 0
      %v322 = vperm.slane %v304, 0
      %v323 = vperm.slane %v305, 0
      %v324 = vperm.slane %v306, 0
      %v325 = vperm.slane %v307, 0
      %v326 = vperm.slane %v308, 0
      %v327 = vperm.slane %v309, 0
      %v328 = vperm.slane %v310, 0
      %v329 = vperm.slane %v311, 0
      %v330 = vperm.slane %v312, 0
      %v331 = vperm.slane %v313, 0
      %332 = vst.msk [vmem:[#allocation2] sm:$0xff] %vm258, %v314
      %333 = vst.msk [vmem:[#allocation2 + $0x20] sm:$0xff] %vm258, %v315
      %334 = vst.msk [vmem:[#allocation2 + $0x40] sm:$0xff] %vm258, %v316
      %335 = vst.msk [vmem:[#allocation2 + $0x60] sm:$0xff] %vm258, %v317
      %336 = vst.msk [vmem:[#allocation2 + $0x80] sm:$0xff] %vm258, %v318
      %337 = vst.msk [vmem:[#allocation2 + $0xa0] sm:$0xff] %vm258, %v319
      %338 = vst.msk [vmem:[#allocation2 + $0xc0] sm:$0xff] %vm258, %v320
      %339 = vst.msk [vmem:[#allocation2 + $0xe0] sm:$0xff] %vm258, %v321
      %340 = vst.msk [vmem:[#allocation2 + $0x100] sm:$0xff] %vm258, %v322
      %341 = vst.msk [vmem:[#allocation2 + $0x120] sm:$0xff] %vm258, %v323
      %342 = vst.msk [vmem:[#allocation2 + $0x140] sm:$0xff] %vm258, %v324
      %343 = vst.msk [vmem:[#allocation2 + $0x160] sm:$0xff] %vm258, %v325
      %344 = vst.msk [vmem:[#allocation2 + $0x180] sm:$0xff] %vm258, %v326
      %345 = vst.msk [vmem:[#allocation2 + $0x1a0] sm:$0xff] %vm258, %v327
      %346 = vst.msk [vmem:[#allocation2 + $0x1c0] sm:$0xff] %vm258, %v328
      %347 = vst.msk [vmem:[#allocation2 + $0x1e0] sm:$0xff] %vm258, %v329
      %348 = vst.msk [vmem:[#allocation2 + $0x200] sm:$0xff] %vm258, %v330
      %349 = vst.msk [vmem:[#allocation2 + $0x220] sm:$0xff] %vm258, %v331
      %v350 = vld [vmem:[#allocation2 + $0x17] sm:$0x1]
      %v351 = vld [vmem:[#allocation2 + $0x37] sm:$0x1]
      %v352 = vld [vmem:[#allocation2 + $0x57] sm:$0x1]
      %v353 = vld [vmem:[#allocation2 + $0x77] sm:$0x1]
      %v354 = vld [vmem:[#allocation2 + $0x97] sm:$0x1]
      %v355 = vld [vmem:[#allocation2 + $0xb7] sm:$0x1]
      %v356 = vld [vmem:[#allocation2 + $0xd7] sm:$0x1]
      %v357 = vld [vmem:[#allocation2 + $0xf7] sm:$0x1]
      %v358 = vld [vmem:[#allocation2 + $0x117] sm:$0x1]
      %v359 = vld [vmem:[#allocation2 + $0x137] sm:$0x1]
      %v360 = vld [vmem:[#allocation2 + $0x157] sm:$0x1]
      %v361 = vld [vmem:[#allocation2 + $0x177] sm:$0x1]
      %v362 = vld [vmem:[#allocation2 + $0x197] sm:$0x1]
      %v363 = vld [vmem:[#allocation2 + $0x1b7] sm:$0x1]
      %v364 = vld [vmem:[#allocation2 + $0x1d7] sm:$0x1]
      %v365 = vld [vmem:[#allocation2 + $0x1f7] sm:$0x1]
      %v366 = vld [vmem:[#allocation2 + $0x217] sm:$0x1]
      %v367 = vld [vmem:[#allocation2 + $0x237] sm:$0x1]
      %v368 = vperm.slane %v350, 0
      %v369 = vperm.slane %v351, 0
      %v370 = vperm.slane %v352, 0
      %v371 = vperm.slane %v353, 0
      %v372 = vperm.slane %v354, 0
      %v373 = vperm.slane %v355, 0
      %v374 = vperm.slane %v356, 0
      %v375 = vperm.slane %v357, 0
      %v376 = vperm.slane %v358, 0
      %v377 = vperm.slane %v359, 0
      %v378 = vperm.slane %v360, 0
      %v379 = vperm.slane %v361, 0
      %v380 = vperm.slane %v362, 0
      %v381 = vperm.slane %v363, 0
      %v382 = vperm.slane %v364, 0
      %v383 = vperm.slane %v365, 0
      %v384 = vperm.slane %v366, 0
      %v385 = vperm.slane %v367, 0
      %386 = vst.msk [vmem:[#allocation2 + $0x18] sm:$0xff] %vm258, %v368
      %387 = vst.msk [vmem:[#allocation2 + $0x38] sm:$0xff] %vm258, %v369
      %388 = vst.msk [vmem:[#allocation2 + $0x58] sm:$0xff] %vm258, %v370
      %389 = vst.msk [vmem:[#allocation2 + $0x78] sm:$0xff] %vm258, %v371
      %390 = vst.msk [vmem:[#allocation2 + $0x98] sm:$0xff] %vm258, %v372
      %391 = vst.msk [vmem:[#allocation2 + $0xb8] sm:$0xff] %vm258, %v373
      %392 = vst.msk [vmem:[#allocation2 + $0xd8] sm:$0xff] %vm258, %v374
      %393 = vst.msk [vmem:[#allocation2 + $0xf8] sm:$0xff] %vm258, %v375
      %394 = vst.msk [vmem:[#allocation2 + $0x118] sm:$0xff] %vm258, %v376
      %395 = vst.msk [vmem:[#allocation2 + $0x138] sm:$0xff] %vm258, %v377
      %396 = vst.msk [vmem:[#allocation2 + $0x158] sm:$0xff] %vm258, %v378
      %397 = vst.msk [vmem:[#allocation2 + $0x178] sm:$0xff] %vm258, %v379
      %398 = vst.msk [vmem:[#allocation2 + $0x198] sm:$0xff] %vm258, %v380
      %399 = vst.msk [vmem:[#allocation2 + $0x1b8] sm:$0xff] %vm258, %v381
      %400 = vst.msk [vmem:[#allocation2 + $0x1d8] sm:$0xff] %vm258, %v382
      %401 = vst.msk [vmem:[#allocation2 + $0x1f8] sm:$0xff] %vm258, %v383
      %402 = vst.msk [vmem:[#allocation2 + $0x218] sm:$0xff] %vm258, %v384
      %403 = vst.msk [vmem:[#allocation2 + $0x238] sm:$0xff] %vm258, %v385
      %v404 = vld [vmem:[%s2] sm:$0x1]
      %v405 = vld [vmem:[#allocation2 + $0x7] sm:$0xff]
      %v406 = vld [vmem:[#allocation2 + $0xf] sm:$0xff]
      %v407 = vld [vmem:[#allocation2 + $0x27] sm:$0xff]
      %v408 = vld [vmem:[#allocation2 + $0x2f] sm:$0xff]
      %v409 = vld [vmem:[#allocation2 + $0x47] sm:$0xff]
      %v410 = vld [vmem:[#allocation2 + $0x4f] sm:$0xff]
      %v411 = vld [vmem:[#allocation2 + $0x67] sm:$0xff]
      %v412 = vld [vmem:[#allocation2 + $0x6f] sm:$0xff]
      %v413 = vld [vmem:[#allocation2 + $0x87] sm:$0xff]
      %v414 = vld [vmem:[#allocation2 + $0x8f] sm:$0xff]
      %v415 = vld [vmem:[#allocation2 + $0xa7] sm:$0xff]
      %v416 = vld [vmem:[#allocation2 + $0xaf] sm:$0xff]
      %v417 = vld [vmem:[#allocation2 + $0xc7] sm:$0xff]
      %v418 = vld [vmem:[#allocation2 + $0xcf] sm:$0xff]
      %v419 = vld [vmem:[#allocation2 + $0xe7] sm:$0xff]
      %v420 = vld [vmem:[#allocation2 + $0xef] sm:$0xff]
      %v421 = vld [vmem:[#allocation2 + $0x107] sm:$0xff]
      %v422 = vld [vmem:[#allocation2 + $0x10f] sm:$0xff]
      %v423 = vld [vmem:[#allocation2 + $0x127] sm:$0xff]
      %v424 = vld [vmem:[#allocation2 + $0x12f] sm:$0xff]
      %v425 = vld [vmem:[#allocation2 + $0x147] sm:$0xff]
      %v426 = vld [vmem:[#allocation2 + $0x14f] sm:$0xff]
      %v427 = vld [vmem:[#allocation2 + $0x167] sm:$0xff]
      %v428 = vld [vmem:[#allocation2 + $0x16f] sm:$0xff]
      %v429 = vld [vmem:[#allocation2 + $0x187] sm:$0xff]
      %v430 = vld [vmem:[#allocation2 + $0x18f] sm:$0xff]
      %v431 = vld [vmem:[#allocation2 + $0x1a7] sm:$0xff]
      %v432 = vld [vmem:[#allocation2 + $0x1af] sm:$0xff]
      %v433 = vld [vmem:[#allocation2 + $0x1c7] sm:$0xff]
      %v434 = vld [vmem:[#allocation2 + $0x1cf] sm:$0xff]
      %v435 = vld [vmem:[#allocation2 + $0x1e7] sm:$0xff]
      %v436 = vld [vmem:[#allocation2 + $0x1ef] sm:$0xff]
      %v437 = vld [vmem:[%s1] sm:$0xf]
      %v438 = vld [vmem:[#allocation2 + $0x8] sm:$0xff]
      %v439 = vld [vmem:[#allocation2 + $0x10] sm:$0xff]
      %v440 = vld [vmem:[#allocation2 + $0x28] sm:$0xff]
      %v441 = vld [vmem:[#allocation2 + $0x30] sm:$0xff]
      %v442 = vld [vmem:[#allocation2 + $0x48] sm:$0xff]
      %v443 = vld [vmem:[#allocation2 + $0x50] sm:$0xff]
      %v444 = vld [vmem:[#allocation2 + $0x68] sm:$0xff]
      %v445 = vld [vmem:[#allocation2 + $0x70] sm:$0xff]
      %v446 = vld [vmem:[#allocation2 + $0x88] sm:$0xff]
      %v447 = vld [vmem:[#allocation2 + $0x90] sm:$0xff]
      %v448 = vld [vmem:[#allocation2 + $0xa8] sm:$0xff]
      %v449 = vld [vmem:[#allocation2 + $0xb0] sm:$0xff]
      %v450 = vld [vmem:[#allocation2 + $0xc8] sm:$0xff]
      %v451 = vld [vmem:[#allocation2 + $0xd0] sm:$0xff]
      %v452 = vld [vmem:[#allocation2 + $0xe8] sm:$0xff]
      %v453 = vld [vmem:[#allocation2 + $0xf0] sm:$0xff]
      %v454 = vld [vmem:[#allocation2 + $0x108] sm:$0xff]
      %v455 = vld [vmem:[#allocation2 + $0x110] sm:$0xff]
      %v456 = vld [vmem:[#allocation2 + $0x128] sm:$0xff]
      %v457 = vld [vmem:[#allocation2 + $0x130] sm:$0xff]
      %v458 = vld [vmem:[#allocation2 + $0x148] sm:$0xff]
      %v459 = vld [vmem:[#allocation2 + $0x150] sm:$0xff]
      %v460 = vld [vmem:[#allocation2 + $0x168] sm:$0xff]
      %v461 = vld [vmem:[#allocation2 + $0x170] sm:$0xff]
      %v462 = vld [vmem:[#allocation2 + $0x188] sm:$0xff]
      %v463 = vld [vmem:[#allocation2 + $0x190] sm:$0xff]
      %v464 = vld [vmem:[#allocation2 + $0x1a8] sm:$0xff]
      %v465 = vld [vmem:[#allocation2 + $0x1b0] sm:$0xff]
      %v466 = vld [vmem:[#allocation2 + $0x1c8] sm:$0xff]
      %v467 = vld [vmem:[#allocation2 + $0x1d0] sm:$0xff]
      %v468 = vld [vmem:[#allocation2 + $0x1e8] sm:$0xff]
      %v469 = vld [vmem:[#allocation2 + $0x1f0] sm:$0xff]
      %s470 = scalar_lea.vmem %s1, 4
      %v471 = vld [vmem:[%s470] sm:$0xf]
      %v473 = vsel %vm258, %v438, 0
      %v476 = vsel %vm258, %v439, 0
      %v479 = vsel %vm258, %v440, 0
      %v482 = vsel %vm258, %v441, 0
      %v485 = vsel %vm258, %v442, 0
      %v488 = vsel %vm258, %v443, 0
      %v491 = vsel %vm258, %v444, 0
      %v494 = vsel %vm258, %v445, 0
      %v497 = vsel %vm258, %v446, 0
      %v500 = vsel %vm258, %v447, 0
      %v503 = vsel %vm258, %v448, 0
      %v506 = vsel %vm258, %v449, 0
      %v509 = vsel %vm258, %v450, 0
      %v512 = vsel %vm258, %v451, 0
      %v515 = vsel %vm258, %v452, 0
      %v518 = vsel %vm258, %v453, 0
      %v521 = vsel %vm258, %v454, 0
      %v524 = vsel %vm258, %v455, 0
      %v527 = vsel %vm258, %v456, 0
      %v530 = vsel %vm258, %v457, 0
      %v533 = vsel %vm258, %v458, 0
      %v536 = vsel %vm258, %v459, 0
      %v539 = vsel %vm258, %v460, 0
      %v542 = vsel %vm258, %v461, 0
      %v545 = vsel %vm258, %v462, 0
      %v548 = vsel %vm258, %v463, 0
      %v551 = vsel %vm258, %v464, 0
      %v554 = vsel %vm258, %v465, 0
      %v557 = vsel %vm258, %v466, 0
      %v560 = vsel %vm258, %v467, 0
      %v563 = vsel %vm258, %v468, 0
      %v566 = vsel %vm258, %v469, 0
      %vm568 = vcmask 1043456
      %v570 = vsel %vm568, %v471, 0
      %572 = vmatpush.msra.mxu0 0.0
      %573 = vmatpush.msra.mxu0 0.0
      %574 = vmatpush.msra.mxu0 0.0
      %575 = vmatpush.msra.mxu0 0.0
      %576 = vmatpush.msra.mxu0 0.0
      %577 = vmatpush.msra.mxu0 0.0
      %578 = vmatpush.msra.mxu0 0.0
      %579 = vmatpush.msra.mxu0 0.0
      %580 = vmatpush.msra.mxu0 0.0
      %581 = vmatpush.msra.mxu0 0.0
      %582 = vmatpush.msra.mxu0 0.0
      %583 = vmatpush.msra.mxu0 0.0
      %584 = vmatpush.msra.mxu0 0.0
      %585 = vmatpush.msra.mxu0 0.0
      %586 = vmatpush.msra.mxu0 0.0
      %587 = vmatpush.msra.mxu0 %v570
      %588 = vmatmul.f32.gmra.mxu0 %v473
      %v589 = vpop.f32.mrf.mxu0
      %v590 = vadd.f32 0.0, %v589
      %591 = vmatmul.f32.gmra.mxu0 %v476
      %v592 = vpop.f32.mrf.mxu0
      %v593 = vadd.f32 0.0, %v592
      %594 = vmatmul.f32.gmra.mxu0 %v479
      %v595 = vpop.f32.mrf.mxu0
      %v596 = vadd.f32 0.0, %v595
      %597 = vmatmul.f32.gmra.mxu0 %v482
      %v598 = vpop.f32.mrf.mxu0
      %v599 = vadd.f32 0.0, %v598
      %600 = vmatmul.f32.gmra.mxu0 %v485
      %v601 = vpop.f32.mrf.mxu0
      %v602 = vadd.f32 0.0, %v601
      %603 = vmatmul.f32.gmra.mxu0 %v488
      %v604 = vpop.f32.mrf.mxu0
      %v605 = vadd.f32 0.0, %v604
      %606 = vmatmul.f32.gmra.mxu0 %v491
      %v607 = vpop.f32.mrf.mxu0
      %v608 = vadd.f32 0.0, %v607
      %609 = vmatmul.f32.gmra.mxu0 %v494
      %v610 = vpop.f32.mrf.mxu0
      %v611 = vadd.f32 0.0, %v610
      %612 = vmatmul.f32.gmra.mxu0 %v497
      %v613 = vpop.f32.mrf.mxu0
      %v614 = vadd.f32 0.0, %v613
      %615 = vmatmul.f32.gmra.mxu0 %v500
      %v616 = vpop.f32.mrf.mxu0
      %v617 = vadd.f32 0.0, %v616
      %618 = vmatmul.f32.gmra.mxu0 %v503
      %v619 = vpop.f32.mrf.mxu0
      %v620 = vadd.f32 0.0, %v619
      %621 = vmatmul.f32.gmra.mxu0 %v506
      %v622 = vpop.f32.mrf.mxu0
      %v623 = vadd.f32 0.0, %v622
      %624 = vmatmul.f32.gmra.mxu0 %v509
      %v625 = vpop.f32.mrf.mxu0
      %v626 = vadd.f32 0.0, %v625
      %627 = vmatmul.f32.gmra.mxu0 %v512
      %v628 = vpop.f32.mrf.mxu0
      %v629 = vadd.f32 0.0, %v628
      %630 = vmatmul.f32.gmra.mxu0 %v515
      %v631 = vpop.f32.mrf.mxu0
      %v632 = vadd.f32 0.0, %v631
      %633 = vmatmul.f32.gmra.mxu0 %v518
      %v634 = vpop.f32.mrf.mxu0
      %v635 = vadd.f32 0.0, %v634
      %636 = vmatmul.f32.gmra.mxu0 %v521
      %v637 = vpop.f32.mrf.mxu0
      %v638 = vadd.f32 0.0, %v637
      %639 = vmatmul.f32.gmra.mxu0 %v524
      %v640 = vpop.f32.mrf.mxu0
      %v641 = vadd.f32 0.0, %v640
      %642 = vmatmul.f32.gmra.mxu0 %v527
      %v643 = vpop.f32.mrf.mxu0
      %v644 = vadd.f32 0.0, %v643
      %645 = vmatmul.f32.gmra.mxu0 %v530
      %v646 = vpop.f32.mrf.mxu0
      %v647 = vadd.f32 0.0, %v646
      %648 = vmatmul.f32.gmra.mxu0 %v533
      %v649 = vpop.f32.mrf.mxu0
      %v650 = vadd.f32 0.0, %v649
      %651 = vmatmul.f32.gmra.mxu0 %v536
      %v652 = vpop.f32.mrf.mxu0
      %v653 = vadd.f32 0.0, %v652
      %654 = vmatmul.f32.gmra.mxu0 %v539
      %v655 = vpop.f32.mrf.mxu0
      %v656 = vadd.f32 0.0, %v655
      %657 = vmatmul.f32.gmra.mxu0 %v542
      %v658 = vpop.f32.mrf.mxu0
      %v659 = vadd.f32 0.0, %v658
      %660 = vmatmul.f32.gmra.mxu0 %v545
      %v661 = vpop.f32.mrf.mxu0
      %v662 = vadd.f32 0.0, %v661
      %663 = vmatmul.f32.gmra.mxu0 %v548
      %v664 = vpop.f32.mrf.mxu0
      %v665 = vadd.f32 0.0, %v664
      %666 = vmatmul.f32.gmra.mxu0 %v551
      %v667 = vpop.f32.mrf.mxu0
      %v668 = vadd.f32 0.0, %v667
      %669 = vmatmul.f32.gmra.mxu0 %v554
      %v670 = vpop.f32.mrf.mxu0
      %v671 = vadd.f32 0.0, %v670
      %672 = vmatmul.f32.gmra.mxu0 %v557
      %v673 = vpop.f32.mrf.mxu0
      %v674 = vadd.f32 0.0, %v673
      %675 = vmatmul.f32.gmra.mxu0 %v560
      %v676 = vpop.f32.mrf.mxu0
      %v677 = vadd.f32 0.0, %v676
      %678 = vmatmul.f32.gmra.mxu0 %v563
      %v679 = vpop.f32.mrf.mxu0
      %v680 = vadd.f32 0.0, %v679
      %681 = vmatmul.f32.gmra.mxu0 %v566
      %v682 = vpop.f32.mrf.mxu0
      %v683 = vadd.f32 0.0, %v682
      %684 = vdwg.mxu0
      %v686 = vsel %vm258, %v405, 0
      %v689 = vsel %vm258, %v406, 0
      %v692 = vsel %vm258, %v407, 0
      %v695 = vsel %vm258, %v408, 0
      %v698 = vsel %vm258, %v409, 0
      %v701 = vsel %vm258, %v410, 0
      %v704 = vsel %vm258, %v411, 0
      %v707 = vsel %vm258, %v412, 0
      %v710 = vsel %vm258, %v413, 0
      %v713 = vsel %vm258, %v414, 0
      %v716 = vsel %vm258, %v415, 0
      %v719 = vsel %vm258, %v416, 0
      %v722 = vsel %vm258, %v417, 0
      %v725 = vsel %vm258, %v418, 0
      %v728 = vsel %vm258, %v419, 0
      %v731 = vsel %vm258, %v420, 0
      %v734 = vsel %vm258, %v421, 0
      %v737 = vsel %vm258, %v422, 0
      %v740 = vsel %vm258, %v423, 0
      %v743 = vsel %vm258, %v424, 0
      %v746 = vsel %vm258, %v425, 0
      %v749 = vsel %vm258, %v426, 0
      %v752 = vsel %vm258, %v427, 0
      %v755 = vsel %vm258, %v428, 0
      %v758 = vsel %vm258, %v429, 0
      %v761 = vsel %vm258, %v430, 0
      %v764 = vsel %vm258, %v431, 0
      %v767 = vsel %vm258, %v432, 0
      %v770 = vsel %vm258, %v433, 0
      %v773 = vsel %vm258, %v434, 0
      %v776 = vsel %vm258, %v435, 0
      %v779 = vsel %vm258, %v436, 0
      %v782 = vsel %vm568, %v437, 0
      %784 = vmatpush.msra.mxu0 0.0
      %785 = vmatpush.msra.mxu0 0.0
      %786 = vmatpush.msra.mxu0 0.0
      %787 = vmatpush.msra.mxu0 0.0
      %788 = vmatpush.msra.mxu0 0.0
      %789 = vmatpush.msra.mxu0 0.0
      %790 = vmatpush.msra.mxu0 0.0
      %791 = vmatpush.msra.mxu0 0.0
      %792 = vmatpush.msra.mxu0 0.0
      %793 = vmatpush.msra.mxu0 0.0
      %794 = vmatpush.msra.mxu0 0.0
      %795 = vmatpush.msra.mxu0 0.0
      %796 = vmatpush.msra.mxu0 0.0
      %797 = vmatpush.msra.mxu0 0.0
      %798 = vmatpush.msra.mxu0 0.0
      %799 = vmatpush.msra.mxu0 %v782
      %800 = vmatmul.f32.gmra.mxu0 %v686
      %v801 = vpop.f32.mrf.mxu0
      %v802 = vadd.f32 %v590, %v801
      %803 = vmatmul.f32.gmra.mxu0 %v689
      %v804 = vpop.f32.mrf.mxu0
      %v805 = vadd.f32 %v593, %v804
      %806 = vmatmul.f32.gmra.mxu0 %v692
      %v807 = vpop.f32.mrf.mxu0
      %v808 = vadd.f32 %v596, %v807
      %809 = vmatmul.f32.gmra.mxu0 %v695
      %v810 = vpop.f32.mrf.mxu0
      %v811 = vadd.f32 %v599, %v810
      %812 = vmatmul.f32.gmra.mxu0 %v698
      %v813 = vpop.f32.mrf.mxu0
      %v814 = vadd.f32 %v602, %v813
      %815 = vmatmul.f32.gmra.mxu0 %v701
      %v816 = vpop.f32.mrf.mxu0
      %v817 = vadd.f32 %v605, %v816
      %818 = vmatmul.f32.gmra.mxu0 %v704
      %v819 = vpop.f32.mrf.mxu0
      %v820 = vadd.f32 %v608, %v819
      %821 = vmatmul.f32.gmra.mxu0 %v707
      %v822 = vpop.f32.mrf.mxu0
      %v823 = vadd.f32 %v611, %v822
      %824 = vmatmul.f32.gmra.mxu0 %v710
      %v825 = vpop.f32.mrf.mxu0
      %v826 = vadd.f32 %v614, %v825
      %827 = vmatmul.f32.gmra.mxu0 %v713
      %v828 = vpop.f32.mrf.mxu0
      %v829 = vadd.f32 %v617, %v828
      %830 = vmatmul.f32.gmra.mxu0 %v716
      %v831 = vpop.f32.mrf.mxu0
      %v832 = vadd.f32 %v620, %v831
      %833 = vmatmul.f32.gmra.mxu0 %v719
      %v834 = vpop.f32.mrf.mxu0
      %v835 = vadd.f32 %v623, %v834
      %836 = vmatmul.f32.gmra.mxu0 %v722
      %v837 = vpop.f32.mrf.mxu0
      %v838 = vadd.f32 %v626, %v837
      %839 = vmatmul.f32.gmra.mxu0 %v725
      %v840 = vpop.f32.mrf.mxu0
      %v841 = vadd.f32 %v629, %v840
      %842 = vmatmul.f32.gmra.mxu0 %v728
      %v843 = vpop.f32.mrf.mxu0
      %v844 = vadd.f32 %v632, %v843
      %845 = vmatmul.f32.gmra.mxu0 %v731
      %v846 = vpop.f32.mrf.mxu0
      %v847 = vadd.f32 %v635, %v846
      %848 = vmatmul.f32.gmra.mxu0 %v734
      %v849 = vpop.f32.mrf.mxu0
      %v850 = vadd.f32 %v638, %v849
      %851 = vmatmul.f32.gmra.mxu0 %v737
      %v852 = vpop.f32.mrf.mxu0
      %v853 = vadd.f32 %v641, %v852
      %854 = vmatmul.f32.gmra.mxu0 %v740
      %v855 = vpop.f32.mrf.mxu0
      %v856 = vadd.f32 %v644, %v855
      %857 = vmatmul.f32.gmra.mxu0 %v743
      %v858 = vpop.f32.mrf.mxu0
      %v859 = vadd.f32 %v647, %v858
      %860 = vmatmul.f32.gmra.mxu0 %v746
      %v861 = vpop.f32.mrf.mxu0
      %v862 = vadd.f32 %v650, %v861
      %863 = vmatmul.f32.gmra.mxu0 %v749
      %v864 = vpop.f32.mrf.mxu0
      %v865 = vadd.f32 %v653, %v864
      %866 = vmatmul.f32.gmra.mxu0 %v752
      %v867 = vpop.f32.mrf.mxu0
      %v868 = vadd.f32 %v656, %v867
      %869 = vmatmul.f32.gmra.mxu0 %v755
      %v870 = vpop.f32.mrf.mxu0
      %v871 = vadd.f32 %v659, %v870
      %872 = vmatmul.f32.gmra.mxu0 %v758
      %v873 = vpop.f32.mrf.mxu0
      %v874 = vadd.f32 %v662, %v873
      %875 = vmatmul.f32.gmra.mxu0 %v761
      %v876 = vpop.f32.mrf.mxu0
      %v877 = vadd.f32 %v665, %v876
      %878 = vmatmul.f32.gmra.mxu0 %v764
      %v879 = vpop.f32.mrf.mxu0
      %v880 = vadd.f32 %v668, %v879
      %881 = vmatmul.f32.gmra.mxu0 %v767
      %v882 = vpop.f32.mrf.mxu0
      %v883 = vadd.f32 %v671, %v882
      %884 = vmatmul.f32.gmra.mxu0 %v770
      %v885 = vpop.f32.mrf.mxu0
      %v886 = vadd.f32 %v674, %v885
      %887 = vmatmul.f32.gmra.mxu0 %v773
      %v888 = vpop.f32.mrf.mxu0
      %v889 = vadd.f32 %v677, %v888
      %890 = vmatmul.f32.gmra.mxu0 %v776
      %v891 = vpop.f32.mrf.mxu0
      %v892 = vadd.f32 %v680, %v891
      %893 = vmatmul.f32.gmra.mxu0 %v779
      %v894 = vpop.f32.mrf.mxu0
      %v895 = vadd.f32 %v683, %v894
      %896 = vdwg.mxu0
      %v897 = vld [vmem:[#allocation2 + $0x9] sm:$0xff]
      %v898 = vld [vmem:[#allocation2 + $0x11] sm:$0xff]
      %v899 = vld [vmem:[#allocation2 + $0x29] sm:$0xff]
      %v900 = vld [vmem:[#allocation2 + $0x31] sm:$0xff]
      %v901 = vld [vmem:[#allocation2 + $0x49] sm:$0xff]
      %v902 = vld [vmem:[#allocation2 + $0x51] sm:$0xff]
      %v903 = vld [vmem:[#allocation2 + $0x69] sm:$0xff]
      %v904 = vld [vmem:[#allocation2 + $0x71] sm:$0xff]
      %v905 = vld [vmem:[#allocation2 + $0x89] sm:$0xff]
      %v906 = vld [vmem:[#allocation2 + $0x91] sm:$0xff]
      %v907 = vld [vmem:[#allocation2 + $0xa9] sm:$0xff]
      %v908 = vld [vmem:[#allocation2 + $0xb1] sm:$0xff]
      %v909 = vld [vmem:[#allocation2 + $0xc9] sm:$0xff]
      %v910 = vld [vmem:[#allocation2 + $0xd1] sm:$0xff]
      %v911 = vld [vmem:[#allocation2 + $0xe9] sm:$0xff]
      %v912 = vld [vmem:[#allocation2 + $0xf1] sm:$0xff]
      %v913 = vld [vmem:[#allocation2 + $0x109] sm:$0xff]
      %v914 = vld [vmem:[#allocation2 + $0x111] sm:$0xff]
      %v915 = vld [vmem:[#allocation2 + $0x129] sm:$0xff]
      %v916 = vld [vmem:[#allocation2 + $0x131] sm:$0xff]
      %v917 = vld [vmem:[#allocation2 + $0x149] sm:$0xff]
      %v918 = vld [vmem:[#allocation2 + $0x151] sm:$0xff]
      %v919 = vld [vmem:[#allocation2 + $0x169] sm:$0xff]
      %v920 = vld [vmem:[#allocation2 + $0x171] sm:$0xff]
      %v921 = vld [vmem:[#allocation2 + $0x189] sm:$0xff]
      %v922 = vld [vmem:[#allocation2 + $0x191] sm:$0xff]
      %v923 = vld [vmem:[#allocation2 + $0x1a9] sm:$0xff]
      %v924 = vld [vmem:[#allocation2 + $0x1b1] sm:$0xff]
      %v925 = vld [vmem:[#allocation2 + $0x1c9] sm:$0xff]
      %v926 = vld [vmem:[#allocation2 + $0x1d1] sm:$0xff]
      %v927 = vld [vmem:[#allocation2 + $0x1e9] sm:$0xff]
      %v928 = vld [vmem:[#allocation2 + $0x1f1] sm:$0xff]
      %s929 = scalar_lea.vmem %s1, 8
      %v930 = vld [vmem:[%s929] sm:$0xf]
      %v932 = vsel %vm258, %v897, 0
      %v935 = vsel %vm258, %v898, 0
      %v938 = vsel %vm258, %v899, 0
      %v941 = vsel %vm258, %v900, 0
      %v944 = vsel %vm258, %v901, 0
      %v947 = vsel %vm258, %v902, 0
      %v950 = vsel %vm258, %v903, 0
      %v953 = vsel %vm258, %v904, 0
      %v956 = vsel %vm258, %v905, 0
      %v959 = vsel %vm258, %v906, 0
      %v962 = vsel %vm258, %v907, 0
      %v965 = vsel %vm258, %v908, 0
      %v968 = vsel %vm258, %v909, 0
      %v971 = vsel %vm258, %v910, 0
      %v974 = vsel %vm258, %v911, 0
      %v977 = vsel %vm258, %v912, 0
      %v980 = vsel %vm258, %v913, 0
      %v983 = vsel %vm258, %v914, 0
      %v986 = vsel %vm258, %v915, 0
      %v989 = vsel %vm258, %v916, 0
      %v992 = vsel %vm258, %v917, 0
      %v995 = vsel %vm258, %v918, 0
      %v998 = vsel %vm258, %v919, 0
      %v1001 = vsel %vm258, %v920, 0
      %v1004 = vsel %vm258, %v921, 0
      %v1007 = vsel %vm258, %v922, 0
      %v1010 = vsel %vm258, %v923, 0
      %v1013 = vsel %vm258, %v924, 0
      %v1016 = vsel %vm258, %v925, 0
      %v1019 = vsel %vm258, %v926, 0
      %v1022 = vsel %vm258, %v927, 0
      %v1025 = vsel %vm258, %v928, 0
      %v1028 = vsel %vm568, %v930, 0
      %1030 = vmatpush.msra.mxu0 0.0
      %1031 = vmatpush.msra.mxu0 0.0
      %1032 = vmatpush.msra.mxu0 0.0
      %1033 = vmatpush.msra.mxu0 0.0
      %1034 = vmatpush.msra.mxu0 0.0
      %1035 = vmatpush.msra.mxu0 0.0
      %1036 = vmatpush.msra.mxu0 0.0
      %1037 = vmatpush.msra.mxu0 0.0
      %1038 = vmatpush.msra.mxu0 0.0
      %1039 = vmatpush.msra.mxu0 0.0
      %1040 = vmatpush.msra.mxu0 0.0
      %1041 = vmatpush.msra.mxu0 0.0
      %1042 = vmatpush.msra.mxu0 0.0
      %1043 = vmatpush.msra.mxu0 0.0
      %1044 = vmatpush.msra.mxu0 0.0
      %1045 = vmatpush.msra.mxu0 %v1028
      %1046 = vmatmul.f32.gmra.mxu0 %v932
      %v1047 = vpop.f32.mrf.mxu0
      %v1048 = vadd.f32 0.0, %v1047
      %1049 = vmatmul.f32.gmra.mxu0 %v935
      %v1050 = vpop.f32.mrf.mxu0
      %v1051 = vadd.f32 0.0, %v1050
      %1052 = vmatmul.f32.gmra.mxu0 %v938
      %v1053 = vpop.f32.mrf.mxu0
      %v1054 = vadd.f32 0.0, %v1053
      %1055 = vmatmul.f32.gmra.mxu0 %v941
      %v1056 = vpop.f32.mrf.mxu0
      %v1057 = vadd.f32 0.0, %v1056
      %1058 = vmatmul.f32.gmra.mxu0 %v944
      %v1059 = vpop.f32.mrf.mxu0
      %v1060 = vadd.f32 0.0, %v1059
      %1061 = vmatmul.f32.gmra.mxu0 %v947
      %v1062 = vpop.f32.mrf.mxu0
      %v1063 = vadd.f32 0.0, %v1062
      %1064 = vmatmul.f32.gmra.mxu0 %v950
      %v1065 = vpop.f32.mrf.mxu0
      %v1066 = vadd.f32 0.0, %v1065
      %1067 = vmatmul.f32.gmra.mxu0 %v953
      %v1068 = vpop.f32.mrf.mxu0
      %v1069 = vadd.f32 0.0, %v1068
      %1070 = vmatmul.f32.gmra.mxu0 %v956
      %v1071 = vpop.f32.mrf.mxu0
      %v1072 = vadd.f32 0.0, %v1071
      %1073 = vmatmul.f32.gmra.mxu0 %v959
      %v1074 = vpop.f32.mrf.mxu0
      %v1075 = vadd.f32 0.0, %v1074
      %1076 = vmatmul.f32.gmra.mxu0 %v962
      %v1077 = vpop.f32.mrf.mxu0
      %v1078 = vadd.f32 0.0, %v1077
      %1079 = vmatmul.f32.gmra.mxu0 %v965
      %v1080 = vpop.f32.mrf.mxu0
      %v1081 = vadd.f32 0.0, %v1080
      %1082 = vmatmul.f32.gmra.mxu0 %v968
      %v1083 = vpop.f32.mrf.mxu0
      %v1084 = vadd.f32 0.0, %v1083
      %1085 = vmatmul.f32.gmra.mxu0 %v971
      %v1086 = vpop.f32.mrf.mxu0
      %v1087 = vadd.f32 0.0, %v1086
      %1088 = vmatmul.f32.gmra.mxu0 %v974
      %v1089 = vpop.f32.mrf.mxu0
      %v1090 = vadd.f32 0.0, %v1089
      %1091 = vmatmul.f32.gmra.mxu0 %v977
      %v1092 = vpop.f32.mrf.mxu0
      %v1093 = vadd.f32 0.0, %v1092
      %1094 = vmatmul.f32.gmra.mxu0 %v980
      %v1095 = vpop.f32.mrf.mxu0
      %v1096 = vadd.f32 0.0, %v1095
      %1097 = vmatmul.f32.gmra.mxu0 %v983
      %v1098 = vpop.f32.mrf.mxu0
      %v1099 = vadd.f32 0.0, %v1098
      %1100 = vmatmul.f32.gmra.mxu0 %v986
      %v1101 = vpop.f32.mrf.mxu0
      %v1102 = vadd.f32 0.0, %v1101
      %1103 = vmatmul.f32.gmra.mxu0 %v989
      %v1104 = vpop.f32.mrf.mxu0
      %v1105 = vadd.f32 0.0, %v1104
      %1106 = vmatmul.f32.gmra.mxu0 %v992
      %v1107 = vpop.f32.mrf.mxu0
      %v1108 = vadd.f32 0.0, %v1107
      %1109 = vmatmul.f32.gmra.mxu0 %v995
      %v1110 = vpop.f32.mrf.mxu0
      %v1111 = vadd.f32 0.0, %v1110
      %1112 = vmatmul.f32.gmra.mxu0 %v998
      %v1113 = vpop.f32.mrf.mxu0
      %v1114 = vadd.f32 0.0, %v1113
      %1115 = vmatmul.f32.gmra.mxu0 %v1001
      %v1116 = vpop.f32.mrf.mxu0
      %v1117 = vadd.f32 0.0, %v1116
      %1118 = vmatmul.f32.gmra.mxu0 %v1004
      %v1119 = vpop.f32.mrf.mxu0
      %v1120 = vadd.f32 0.0, %v1119
      %1121 = vmatmul.f32.gmra.mxu0 %v1007
      %v1122 = vpop.f32.mrf.mxu0
      %v1123 = vadd.f32 0.0, %v1122
      %1124 = vmatmul.f32.gmra.mxu0 %v1010
      %v1125 = vpop.f32.mrf.mxu0
      %v1126 = vadd.f32 0.0, %v1125
      %1127 = vmatmul.f32.gmra.mxu0 %v1013
      %v1128 = vpop.f32.mrf.mxu0
      %v1129 = vadd.f32 0.0, %v1128
      %1130 = vmatmul.f32.gmra.mxu0 %v1016
      %v1131 = vpop.f32.mrf.mxu0
      %v1132 = vadd.f32 0.0, %v1131
      %1133 = vmatmul.f32.gmra.mxu0 %v1019
      %v1134 = vpop.f32.mrf.mxu0
      %v1135 = vadd.f32 0.0, %v1134
      %1136 = vmatmul.f32.gmra.mxu0 %v1022
      %v1137 = vpop.f32.mrf.mxu0
      %v1138 = vadd.f32 0.0, %v1137
      %1139 = vmatmul.f32.gmra.mxu0 %v1025
      %v1140 = vpop.f32.mrf.mxu0
      %v1141 = vadd.f32 0.0, %v1140
      %1142 = vdwg.mxu0
      %v1143 = vadd.f32 %v802, %v1048
      %v1144 = vadd.f32 %v805, %v1051
      %v1145 = vadd.f32 %v808, %v1054
      %v1146 = vadd.f32 %v811, %v1057
      %v1147 = vadd.f32 %v814, %v1060
      %v1148 = vadd.f32 %v817, %v1063
      %v1149 = vadd.f32 %v820, %v1066
      %v1150 = vadd.f32 %v823, %v1069
      %v1151 = vadd.f32 %v826, %v1072
      %v1152 = vadd.f32 %v829, %v1075
      %v1153 = vadd.f32 %v832, %v1078
      %v1154 = vadd.f32 %v835, %v1081
      %v1155 = vadd.f32 %v838, %v1084
      %v1156 = vadd.f32 %v841, %v1087
      %v1157 = vadd.f32 %v844, %v1090
      %v1158 = vadd.f32 %v847, %v1093
      %v1159 = vadd.f32 %v850, %v1096
      %v1160 = vadd.f32 %v853, %v1099
      %v1161 = vadd.f32 %v856, %v1102
      %v1162 = vadd.f32 %v859, %v1105
      %v1163 = vadd.f32 %v862, %v1108
      %v1164 = vadd.f32 %v865, %v1111
      %v1165 = vadd.f32 %v868, %v1114
      %v1166 = vadd.f32 %v871, %v1117
      %v1167 = vadd.f32 %v874, %v1120
      %v1168 = vadd.f32 %v877, %v1123
      %v1169 = vadd.f32 %v880, %v1126
      %v1170 = vadd.f32 %v883, %v1129
      %v1171 = vadd.f32 %v886, %v1132
      %v1172 = vadd.f32 %v889, %v1135
      %v1173 = vadd.f32 %v892, %v1138
      %v1174 = vadd.f32 %v895, %v1141
      %v1175 = vld [vmem:[%s257 + $0x7] sm:$0xff]
      %v1176 = vld [vmem:[%s257 + $0xf] sm:$0xff]
      %v1177 = vld [vmem:[%s257 + $0x27] sm:$0xff]
      %v1178 = vld [vmem:[%s257 + $0x2f] sm:$0xff]
      %v1179 = vld [vmem:[%s257 + $0x47] sm:$0xff]
      %v1180 = vld [vmem:[%s257 + $0x4f] sm:$0xff]
      %v1181 = vld [vmem:[%s257 + $0x67] sm:$0xff]
      %v1182 = vld [vmem:[%s257 + $0x6f] sm:$0xff]
      %v1183 = vld [vmem:[%s257 + $0x87] sm:$0xff]
      %v1184 = vld [vmem:[%s257 + $0x8f] sm:$0xff]
      %v1185 = vld [vmem:[%s257 + $0xa7] sm:$0xff]
      %v1186 = vld [vmem:[%s257 + $0xaf] sm:$0xff]
      %v1187 = vld [vmem:[%s257 + $0xc7] sm:$0xff]
      %v1188 = vld [vmem:[%s257 + $0xcf] sm:$0xff]
      %v1189 = vld [vmem:[%s257 + $0xe7] sm:$0xff]
      %v1190 = vld [vmem:[%s257 + $0xef] sm:$0xff]
      %v1191 = vld [vmem:[%s257 + $0x107] sm:$0xff]
      %v1192 = vld [vmem:[%s257 + $0x10f] sm:$0xff]
      %v1193 = vld [vmem:[%s257 + $0x127] sm:$0xff]
      %v1194 = vld [vmem:[%s257 + $0x12f] sm:$0xff]
      %v1195 = vld [vmem:[%s257 + $0x147] sm:$0xff]
      %v1196 = vld [vmem:[%s257 + $0x14f] sm:$0xff]
      %v1197 = vld [vmem:[%s257 + $0x167] sm:$0xff]
      %v1198 = vld [vmem:[%s257 + $0x16f] sm:$0xff]
      %v1199 = vld [vmem:[%s257 + $0x187] sm:$0xff]
      %v1200 = vld [vmem:[%s257 + $0x18f] sm:$0xff]
      %v1201 = vld [vmem:[%s257 + $0x1a7] sm:$0xff]
      %v1202 = vld [vmem:[%s257 + $0x1af] sm:$0xff]
      %v1203 = vld [vmem:[%s257 + $0x1c7] sm:$0xff]
      %v1204 = vld [vmem:[%s257 + $0x1cf] sm:$0xff]
      %v1205 = vld [vmem:[%s257 + $0x1e7] sm:$0xff]
      %v1206 = vld [vmem:[%s257 + $0x1ef] sm:$0xff]
      %s1207 = scalar_lea.vmem %s1, 12
      %v1208 = vld [vmem:[%s1207] sm:$0xf]
      %v1210 = vsel %vm258, %v1175, 0
      %v1213 = vsel %vm258, %v1176, 0
      %v1216 = vsel %vm258, %v1177, 0
      %v1219 = vsel %vm258, %v1178, 0
      %v1222 = vsel %vm258, %v1179, 0
      %v1225 = vsel %vm258, %v1180, 0
      %v1228 = vsel %vm258, %v1181, 0
      %v1231 = vsel %vm258, %v1182, 0
      %v1234 = vsel %vm258, %v1183, 0
      %v1237 = vsel %vm258, %v1184, 0
      %v1240 = vsel %vm258, %v1185, 0
      %v1243 = vsel %vm258, %v1186, 0
      %v1246 = vsel %vm258, %v1187, 0
      %v1249 = vsel %vm258, %v1188, 0
      %v1252 = vsel %vm258, %v1189, 0
      %v1255 = vsel %vm258, %v1190, 0
      %v1258 = vsel %vm258, %v1191, 0
      %v1261 = vsel %vm258, %v1192, 0
      %v1264 = vsel %vm258, %v1193, 0
      %v1267 = vsel %vm258, %v1194, 0
      %v1270 = vsel %vm258, %v1195, 0
      %v1273 = vsel %vm258, %v1196, 0
      %v1276 = vsel %vm258, %v1197, 0
      %v1279 = vsel %vm258, %v1198, 0
      %v1282 = vsel %vm258, %v1199, 0
      %v1285 = vsel %vm258, %v1200, 0
      %v1288 = vsel %vm258, %v1201, 0
      %v1291 = vsel %vm258, %v1202, 0
      %v1294 = vsel %vm258, %v1203, 0
      %v1297 = vsel %vm258, %v1204, 0
      %v1300 = vsel %vm258, %v1205, 0
      %v1303 = vsel %vm258, %v1206, 0
      %v1306 = vsel %vm568, %v1208, 0
      %1308 = vmatpush.msra.mxu0 0.0
      %1309 = vmatpush.msra.mxu0 0.0
      %1310 = vmatpush.msra.mxu0 0.0
      %1311 = vmatpush.msra.mxu0 0.0
      %1312 = vmatpush.msra.mxu0 0.0
      %1313 = vmatpush.msra.mxu0 0.0
      %1314 = vmatpush.msra.mxu0 0.0
      %1315 = vmatpush.msra.mxu0 0.0
      %1316 = vmatpush.msra.mxu0 0.0
      %1317 = vmatpush.msra.mxu0 0.0
      %1318 = vmatpush.msra.mxu0 0.0
      %1319 = vmatpush.msra.mxu0 0.0
      %1320 = vmatpush.msra.mxu0 0.0
      %1321 = vmatpush.msra.mxu0 0.0
      %1322 = vmatpush.msra.mxu0 0.0
      %1323 = vmatpush.msra.mxu0 %v1306
      %1324 = vmatmul.f32.gmra.mxu0 %v1210
      %v1325 = vpop.f32.mrf.mxu0
      %v1326 = vadd.f32 0.0, %v1325
      %1327 = vmatmul.f32.gmra.mxu0 %v1213
      %v1328 = vpop.f32.mrf.mxu0
      %v1329 = vadd.f32 0.0, %v1328
      %1330 = vmatmul.f32.gmra.mxu0 %v1216
      %v1331 = vpop.f32.mrf.mxu0
      %v1332 = vadd.f32 0.0, %v1331
      %1333 = vmatmul.f32.gmra.mxu0 %v1219
      %v1334 = vpop.f32.mrf.mxu0
      %v1335 = vadd.f32 0.0, %v1334
      %1336 = vmatmul.f32.gmra.mxu0 %v1222
      %v1337 = vpop.f32.mrf.mxu0
      %v1338 = vadd.f32 0.0, %v1337
      %1339 = vmatmul.f32.gmra.mxu0 %v1225
      %v1340 = vpop.f32.mrf.mxu0
      %v1341 = vadd.f32 0.0, %v1340
      %1342 = vmatmul.f32.gmra.mxu0 %v1228
      %v1343 = vpop.f32.mrf.mxu0
      %v1344 = vadd.f32 0.0, %v1343
      %1345 = vmatmul.f32.gmra.mxu0 %v1231
      %v1346 = vpop.f32.mrf.mxu0
      %v1347 = vadd.f32 0.0, %v1346
      %1348 = vmatmul.f32.gmra.mxu0 %v1234
      %v1349 = vpop.f32.mrf.mxu0
      %v1350 = vadd.f32 0.0, %v1349
      %1351 = vmatmul.f32.gmra.mxu0 %v1237
      %v1352 = vpop.f32.mrf.mxu0
      %v1353 = vadd.f32 0.0, %v1352
      %1354 = vmatmul.f32.gmra.mxu0 %v1240
      %v1355 = vpop.f32.mrf.mxu0
      %v1356 = vadd.f32 0.0, %v1355
      %1357 = vmatmul.f32.gmra.mxu0 %v1243
      %v1358 = vpop.f32.mrf.mxu0
      %v1359 = vadd.f32 0.0, %v1358
      %1360 = vmatmul.f32.gmra.mxu0 %v1246
      %v1361 = vpop.f32.mrf.mxu0
      %v1362 = vadd.f32 0.0, %v1361
      %1363 = vmatmul.f32.gmra.mxu0 %v1249
      %v1364 = vpop.f32.mrf.mxu0
      %v1365 = vadd.f32 0.0, %v1364
      %1366 = vmatmul.f32.gmra.mxu0 %v1252
      %v1367 = vpop.f32.mrf.mxu0
      %v1368 = vadd.f32 0.0, %v1367
      %1369 = vmatmul.f32.gmra.mxu0 %v1255
      %v1370 = vpop.f32.mrf.mxu0
      %v1371 = vadd.f32 0.0, %v1370
      %1372 = vmatmul.f32.gmra.mxu0 %v1258
      %v1373 = vpop.f32.mrf.mxu0
      %v1374 = vadd.f32 0.0, %v1373
      %1375 = vmatmul.f32.gmra.mxu0 %v1261
      %v1376 = vpop.f32.mrf.mxu0
      %v1377 = vadd.f32 0.0, %v1376
      %1378 = vmatmul.f32.gmra.mxu0 %v1264
      %v1379 = vpop.f32.mrf.mxu0
      %v1380 = vadd.f32 0.0, %v1379
      %1381 = vmatmul.f32.gmra.mxu0 %v1267
      %v1382 = vpop.f32.mrf.mxu0
      %v1383 = vadd.f32 0.0, %v1382
      %1384 = vmatmul.f32.gmra.mxu0 %v1270
      %v1385 = vpop.f32.mrf.mxu0
      %v1386 = vadd.f32 0.0, %v1385
      %1387 = vmatmul.f32.gmra.mxu0 %v1273
      %v1388 = vpop.f32.mrf.mxu0
      %v1389 = vadd.f32 0.0, %v1388
      %1390 = vmatmul.f32.gmra.mxu0 %v1276
      %v1391 = vpop.f32.mrf.mxu0
      %v1392 = vadd.f32 0.0, %v1391
      %1393 = vmatmul.f32.gmra.mxu0 %v1279
      %v1394 = vpop.f32.mrf.mxu0
      %v1395 = vadd.f32 0.0, %v1394
      %1396 = vmatmul.f32.gmra.mxu0 %v1282
      %v1397 = vpop.f32.mrf.mxu0
      %v1398 = vadd.f32 0.0, %v1397
      %1399 = vmatmul.f32.gmra.mxu0 %v1285
      %v1400 = vpop.f32.mrf.mxu0
      %v1401 = vadd.f32 0.0, %v1400
      %1402 = vmatmul.f32.gmra.mxu0 %v1288
      %v1403 = vpop.f32.mrf.mxu0
      %v1404 = vadd.f32 0.0, %v1403
      %1405 = vmatmul.f32.gmra.mxu0 %v1291
      %v1406 = vpop.f32.mrf.mxu0
      %v1407 = vadd.f32 0.0, %v1406
      %1408 = vmatmul.f32.gmra.mxu0 %v1294
      %v1409 = vpop.f32.mrf.mxu0
      %v1410 = vadd.f32 0.0, %v1409
      %1411 = vmatmul.f32.gmra.mxu0 %v1297
      %v1412 = vpop.f32.mrf.mxu0
      %v1413 = vadd.f32 0.0, %v1412
      %1414 = vmatmul.f32.gmra.mxu0 %v1300
      %v1415 = vpop.f32.mrf.mxu0
      %v1416 = vadd.f32 0.0, %v1415
      %1417 = vmatmul.f32.gmra.mxu0 %v1303
      %v1418 = vpop.f32.mrf.mxu0
      %v1419 = vadd.f32 0.0, %v1418
      %1420 = vdwg.mxu0
      %v1421 = vadd.f32 %v1143, %v1326
      %v1422 = vadd.f32 %v1144, %v1329
      %v1423 = vadd.f32 %v1145, %v1332
      %v1424 = vadd.f32 %v1146, %v1335
      %v1425 = vadd.f32 %v1147, %v1338
      %v1426 = vadd.f32 %v1148, %v1341
      %v1427 = vadd.f32 %v1149, %v1344
      %v1428 = vadd.f32 %v1150, %v1347
      %v1429 = vadd.f32 %v1151, %v1350
      %v1430 = vadd.f32 %v1152, %v1353
      %v1431 = vadd.f32 %v1153, %v1356
      %v1432 = vadd.f32 %v1154, %v1359
      %v1433 = vadd.f32 %v1155, %v1362
      %v1434 = vadd.f32 %v1156, %v1365
      %v1435 = vadd.f32 %v1157, %v1368
      %v1436 = vadd.f32 %v1158, %v1371
      %v1437 = vadd.f32 %v1159, %v1374
      %v1438 = vadd.f32 %v1160, %v1377
      %v1439 = vadd.f32 %v1161, %v1380
      %v1440 = vadd.f32 %v1162, %v1383
      %v1441 = vadd.f32 %v1163, %v1386
      %v1442 = vadd.f32 %v1164, %v1389
      %v1443 = vadd.f32 %v1165, %v1392
      %v1444 = vadd.f32 %v1166, %v1395
      %v1445 = vadd.f32 %v1167, %v1398
      %v1446 = vadd.f32 %v1168, %v1401
      %v1447 = vadd.f32 %v1169, %v1404
      %v1448 = vadd.f32 %v1170, %v1407
      %v1449 = vadd.f32 %v1171, %v1410
      %v1450 = vadd.f32 %v1172, %v1413
      %v1451 = vadd.f32 %v1173, %v1416
      %v1452 = vadd.f32 %v1174, %v1419
      %v1453 = vld [vmem:[%s257 + $0x8] sm:$0xff]
      %v1454 = vld [vmem:[%s257 + $0x10] sm:$0xff]
      %v1455 = vld [vmem:[%s257 + $0x28] sm:$0xff]
      %v1456 = vld [vmem:[%s257 + $0x30] sm:$0xff]
      %v1457 = vld [vmem:[%s257 + $0x48] sm:$0xff]
      %v1458 = vld [vmem:[%s257 + $0x50] sm:$0xff]
      %v1459 = vld [vmem:[%s257 + $0x68] sm:$0xff]
      %v1460 = vld [vmem:[%s257 + $0x70] sm:$0xff]
      %v1461 = vld [vmem:[%s257 + $0x88] sm:$0xff]
      %v1462 = vld [vmem:[%s257 + $0x90] sm:$0xff]
      %v1463 = vld [vmem:[%s257 + $0xa8] sm:$0xff]
      %v1464 = vld [vmem:[%s257 + $0xb0] sm:$0xff]
      %v1465 = vld [vmem:[%s257 + $0xc8] sm:$0xff]
      %v1466 = vld [vmem:[%s257 + $0xd0] sm:$0xff]
      %v1467 = vld [vmem:[%s257 + $0xe8] sm:$0xff]
      %v1468 = vld [vmem:[%s257 + $0xf0] sm:$0xff]
      %v1469 = vld [vmem:[%s257 + $0x108] sm:$0xff]
      %v1470 = vld [vmem:[%s257 + $0x110] sm:$0xff]
      %v1471 = vld [vmem:[%s257 + $0x128] sm:$0xff]
      %v1472 = vld [vmem:[%s257 + $0x130] sm:$0xff]
      %v1473 = vld [vmem:[%s257 + $0x148] sm:$0xff]
      %v1474 = vld [vmem:[%s257 + $0x150] sm:$0xff]
      %v1475 = vld [vmem:[%s257 + $0x168] sm:$0xff]
      %v1476 = vld [vmem:[%s257 + $0x170] sm:$0xff]
      %v1477 = vld [vmem:[%s257 + $0x188] sm:$0xff]
      %v1478 = vld [vmem:[%s257 + $0x190] sm:$0xff]
      %v1479 = vld [vmem:[%s257 + $0x1a8] sm:$0xff]
      %v1480 = vld [vmem:[%s257 + $0x1b0] sm:$0xff]
      %v1481 = vld [vmem:[%s257 + $0x1c8] sm:$0xff]
      %v1482 = vld [vmem:[%s257 + $0x1d0] sm:$0xff]
      %v1483 = vld [vmem:[%s257 + $0x1e8] sm:$0xff]
      %v1484 = vld [vmem:[%s257 + $0x1f0] sm:$0xff]
      %s1485 = scalar_lea.vmem %s1, 16
      %v1486 = vld [vmem:[%s1485] sm:$0xf]
      %v1488 = vsel %vm258, %v1453, 0
      %v1491 = vsel %vm258, %v1454, 0
      %v1494 = vsel %vm258, %v1455, 0
      %v1497 = vsel %vm258, %v1456, 0
      %v1500 = vsel %vm258, %v1457, 0
      %v1503 = vsel %vm258, %v1458, 0
      %v1506 = vsel %vm258, %v1459, 0
      %v1509 = vsel %vm258, %v1460, 0
      %v1512 = vsel %vm258, %v1461, 0
      %v1515 = vsel %vm258, %v1462, 0
      %v1518 = vsel %vm258, %v1463, 0
      %v1521 = vsel %vm258, %v1464, 0
      %v1524 = vsel %vm258, %v1465, 0
      %v1527 = vsel %vm258, %v1466, 0
      %v1530 = vsel %vm258, %v1467, 0
      %v1533 = vsel %vm258, %v1468, 0
      %v1536 = vsel %vm258, %v1469, 0
      %v1539 = vsel %vm258, %v1470, 0
      %v1542 = vsel %vm258, %v1471, 0
      %v1545 = vsel %vm258, %v1472, 0
      %v1548 = vsel %vm258, %v1473, 0
      %v1551 = vsel %vm258, %v1474, 0
      %v1554 = vsel %vm258, %v1475, 0
      %v1557 = vsel %vm258, %v1476, 0
      %v1560 = vsel %vm258, %v1477, 0
      %v1563 = vsel %vm258, %v1478, 0
      %v1566 = vsel %vm258, %v1479, 0
      %v1569 = vsel %vm258, %v1480, 0
      %v1572 = vsel %vm258, %v1481, 0
      %v1575 = vsel %vm258, %v1482, 0
      %v1578 = vsel %vm258, %v1483, 0
      %v1581 = vsel %vm258, %v1484, 0
      %v1584 = vsel %vm568, %v1486, 0
      %1586 = vmatpush.msra.mxu0 0.0
      %1587 = vmatpush.msra.mxu0 0.0
      %1588 = vmatpush.msra.mxu0 0.0
      %1589 = vmatpush.msra.mxu0 0.0
      %1590 = vmatpush.msra.mxu0 0.0
      %1591 = vmatpush.msra.mxu0 0.0
      %1592 = vmatpush.msra.mxu0 0.0
      %1593 = vmatpush.msra.mxu0 0.0
      %1594 = vmatpush.msra.mxu0 0.0
      %1595 = vmatpush.msra.mxu0 0.0
      %1596 = vmatpush.msra.mxu0 0.0
      %1597 = vmatpush.msra.mxu0 0.0
      %1598 = vmatpush.msra.mxu0 0.0
      %1599 = vmatpush.msra.mxu0 0.0
      %1600 = vmatpush.msra.mxu0 0.0
      %1601 = vmatpush.msra.mxu0 %v1584
      %1602 = vmatmul.f32.gmra.mxu0 %v1488
      %v1603 = vpop.f32.mrf.mxu0
      %v1604 = vadd.f32 0.0, %v1603
      %1605 = vmatmul.f32.gmra.mxu0 %v1491
      %v1606 = vpop.f32.mrf.mxu0
      %v1607 = vadd.f32 0.0, %v1606
      %1608 = vmatmul.f32.gmra.mxu0 %v1494
      %v1609 = vpop.f32.mrf.mxu0
      %v1610 = vadd.f32 0.0, %v1609
      %1611 = vmatmul.f32.gmra.mxu0 %v1497
      %v1612 = vpop.f32.mrf.mxu0
      %v1613 = vadd.f32 0.0, %v1612
      %1614 = vmatmul.f32.gmra.mxu0 %v1500
      %v1615 = vpop.f32.mrf.mxu0
      %v1616 = vadd.f32 0.0, %v1615
      %1617 = vmatmul.f32.gmra.mxu0 %v1503
      %v1618 = vpop.f32.mrf.mxu0
      %v1619 = vadd.f32 0.0, %v1618
      %1620 = vmatmul.f32.gmra.mxu0 %v1506
      %v1621 = vpop.f32.mrf.mxu0
      %v1622 = vadd.f32 0.0, %v1621
      %1623 = vmatmul.f32.gmra.mxu0 %v1509
      %v1624 = vpop.f32.mrf.mxu0
      %v1625 = vadd.f32 0.0, %v1624
      %1626 = vmatmul.f32.gmra.mxu0 %v1512
      %v1627 = vpop.f32.mrf.mxu0
      %v1628 = vadd.f32 0.0, %v1627
      %1629 = vmatmul.f32.gmra.mxu0 %v1515
      %v1630 = vpop.f32.mrf.mxu0
      %v1631 = vadd.f32 0.0, %v1630
      %1632 = vmatmul.f32.gmra.mxu0 %v1518
      %v1633 = vpop.f32.mrf.mxu0
      %v1634 = vadd.f32 0.0, %v1633
      %1635 = vmatmul.f32.gmra.mxu0 %v1521
      %v1636 = vpop.f32.mrf.mxu0
      %v1637 = vadd.f32 0.0, %v1636
      %1638 = vmatmul.f32.gmra.mxu0 %v1524
      %v1639 = vpop.f32.mrf.mxu0
      %v1640 = vadd.f32 0.0, %v1639
      %1641 = vmatmul.f32.gmra.mxu0 %v1527
      %v1642 = vpop.f32.mrf.mxu0
      %v1643 = vadd.f32 0.0, %v1642
      %1644 = vmatmul.f32.gmra.mxu0 %v1530
      %v1645 = vpop.f32.mrf.mxu0
      %v1646 = vadd.f32 0.0, %v1645
      %1647 = vmatmul.f32.gmra.mxu0 %v1533
      %v1648 = vpop.f32.mrf.mxu0
      %v1649 = vadd.f32 0.0, %v1648
      %1650 = vmatmul.f32.gmra.mxu0 %v1536
      %v1651 = vpop.f32.mrf.mxu0
      %v1652 = vadd.f32 0.0, %v1651
      %1653 = vmatmul.f32.gmra.mxu0 %v1539
      %v1654 = vpop.f32.mrf.mxu0
      %v1655 = vadd.f32 0.0, %v1654
      %1656 = vmatmul.f32.gmra.mxu0 %v1542
      %v1657 = vpop.f32.mrf.mxu0
      %v1658 = vadd.f32 0.0, %v1657
      %1659 = vmatmul.f32.gmra.mxu0 %v1545
      %v1660 = vpop.f32.mrf.mxu0
      %v1661 = vadd.f32 0.0, %v1660
      %1662 = vmatmul.f32.gmra.mxu0 %v1548
      %v1663 = vpop.f32.mrf.mxu0
      %v1664 = vadd.f32 0.0, %v1663
      %1665 = vmatmul.f32.gmra.mxu0 %v1551
      %v1666 = vpop.f32.mrf.mxu0
      %v1667 = vadd.f32 0.0, %v1666
      %1668 = vmatmul.f32.gmra.mxu0 %v1554
      %v1669 = vpop.f32.mrf.mxu0
      %v1670 = vadd.f32 0.0, %v1669
      %1671 = vmatmul.f32.gmra.mxu0 %v1557
      %v1672 = vpop.f32.mrf.mxu0
      %v1673 = vadd.f32 0.0, %v1672
      %1674 = vmatmul.f32.gmra.mxu0 %v1560
      %v1675 = vpop.f32.mrf.mxu0
      %v1676 = vadd.f32 0.0, %v1675
      %1677 = vmatmul.f32.gmra.mxu0 %v1563
      %v1678 = vpop.f32.mrf.mxu0
      %v1679 = vadd.f32 0.0, %v1678
      %1680 = vmatmul.f32.gmra.mxu0 %v1566
      %v1681 = vpop.f32.mrf.mxu0
      %v1682 = vadd.f32 0.0, %v1681
      %1683 = vmatmul.f32.gmra.mxu0 %v1569
      %v1684 = vpop.f32.mrf.mxu0
      %v1685 = vadd.f32 0.0, %v1684
      %1686 = vmatmul.f32.gmra.mxu0 %v1572
      %v1687 = vpop.f32.mrf.mxu0
      %v1688 = vadd.f32 0.0, %v1687
      %1689 = vmatmul.f32.gmra.mxu0 %v1575
      %v1690 = vpop.f32.mrf.mxu0
      %v1691 = vadd.f32 0.0, %v1690
      %1692 = vmatmul.f32.gmra.mxu0 %v1578
      %v1693 = vpop.f32.mrf.mxu0
      %v1694 = vadd.f32 0.0, %v1693
      %1695 = vmatmul.f32.gmra.mxu0 %v1581
      %v1696 = vpop.f32.mrf.mxu0
      %v1697 = vadd.f32 0.0, %v1696
      %1698 = vdwg.mxu0
      %v1699 = vadd.f32 %v1421, %v1604
      %v1700 = vadd.f32 %v1422, %v1607
      %v1701 = vadd.f32 %v1423, %v1610
      %v1702 = vadd.f32 %v1424, %v1613
      %v1703 = vadd.f32 %v1425, %v1616
      %v1704 = vadd.f32 %v1426, %v1619
      %v1705 = vadd.f32 %v1427, %v1622
      %v1706 = vadd.f32 %v1428, %v1625
      %v1707 = vadd.f32 %v1429, %v1628
      %v1708 = vadd.f32 %v1430, %v1631
      %v1709 = vadd.f32 %v1431, %v1634
      %v1710 = vadd.f32 %v1432, %v1637
      %v1711 = vadd.f32 %v1433, %v1640
      %v1712 = vadd.f32 %v1434, %v1643
      %v1713 = vadd.f32 %v1435, %v1646
      %v1714 = vadd.f32 %v1436, %v1649
      %v1715 = vadd.f32 %v1437, %v1652
      %v1716 = vadd.f32 %v1438, %v1655
      %v1717 = vadd.f32 %v1439, %v1658
      %v1718 = vadd.f32 %v1440, %v1661
      %v1719 = vadd.f32 %v1441, %v1664
      %v1720 = vadd.f32 %v1442, %v1667
      %v1721 = vadd.f32 %v1443, %v1670
      %v1722 = vadd.f32 %v1444, %v1673
      %v1723 = vadd.f32 %v1445, %v1676
      %v1724 = vadd.f32 %v1446, %v1679
      %v1725 = vadd.f32 %v1447, %v1682
      %v1726 = vadd.f32 %v1448, %v1685
      %v1727 = vadd.f32 %v1449, %v1688
      %v1728 = vadd.f32 %v1450, %v1691
      %v1729 = vadd.f32 %v1451, %v1694
      %v1730 = vadd.f32 %v1452, %v1697
      %v1731 = vld [vmem:[%s257 + $0x9] sm:$0xff]
      %v1732 = vld [vmem:[%s257 + $0x11] sm:$0xff]
      %v1733 = vld [vmem:[%s257 + $0x29] sm:$0xff]
      %v1734 = vld [vmem:[%s257 + $0x31] sm:$0xff]
      %v1735 = vld [vmem:[%s257 + $0x49] sm:$0xff]
      %v1736 = vld [vmem:[%s257 + $0x51] sm:$0xff]
      %v1737 = vld [vmem:[%s257 + $0x69] sm:$0xff]
      %v1738 = vld [vmem:[%s257 + $0x71] sm:$0xff]
      %v1739 = vld [vmem:[%s257 + $0x89] sm:$0xff]
      %v1740 = vld [vmem:[%s257 + $0x91] sm:$0xff]
      %v1741 = vld [vmem:[%s257 + $0xa9] sm:$0xff]
      %v1742 = vld [vmem:[%s257 + $0xb1] sm:$0xff]
      %v1743 = vld [vmem:[%s257 + $0xc9] sm:$0xff]
      %v1744 = vld [vmem:[%s257 + $0xd1] sm:$0xff]
      %v1745 = vld [vmem:[%s257 + $0xe9] sm:$0xff]
      %v1746 = vld [vmem:[%s257 + $0xf1] sm:$0xff]
      %v1747 = vld [vmem:[%s257 + $0x109] sm:$0xff]
      %v1748 = vld [vmem:[%s257 + $0x111] sm:$0xff]
      %v1749 = vld [vmem:[%s257 + $0x129] sm:$0xff]
      %v1750 = vld [vmem:[%s257 + $0x131] sm:$0xff]
      %v1751 = vld [vmem:[%s257 + $0x149] sm:$0xff]
      %v1752 = vld [vmem:[%s257 + $0x151] sm:$0xff]
      %v1753 = vld [vmem:[%s257 + $0x169] sm:$0xff]
      %v1754 = vld [vmem:[%s257 + $0x171] sm:$0xff]
      %v1755 = vld [vmem:[%s257 + $0x189] sm:$0xff]
      %v1756 = vld [vmem:[%s257 + $0x191] sm:$0xff]
      %v1757 = vld [vmem:[%s257 + $0x1a9] sm:$0xff]
      %v1758 = vld [vmem:[%s257 + $0x1b1] sm:$0xff]
      %v1759 = vld [vmem:[%s257 + $0x1c9] sm:$0xff]
      %v1760 = vld [vmem:[%s257 + $0x1d1] sm:$0xff]
      %v1761 = vld [vmem:[%s257 + $0x1e9] sm:$0xff]
      %v1762 = vld [vmem:[%s257 + $0x1f1] sm:$0xff]
      %s1763 = scalar_lea.vmem %s1, 20
      %v1764 = vld [vmem:[%s1763] sm:$0xf]
      %v1766 = vsel %vm258, %v1731, 0
      %v1769 = vsel %vm258, %v1732, 0
      %v1772 = vsel %vm258, %v1733, 0
      %v1775 = vsel %vm258, %v1734, 0
      %v1778 = vsel %vm258, %v1735, 0
      %v1781 = vsel %vm258, %v1736, 0
      %v1784 = vsel %vm258, %v1737, 0
      %v1787 = vsel %vm258, %v1738, 0
      %v1790 = vsel %vm258, %v1739, 0
      %v1793 = vsel %vm258, %v1740, 0
      %v1796 = vsel %vm258, %v1741, 0
      %v1799 = vsel %vm258, %v1742, 0
      %v1802 = vsel %vm258, %v1743, 0
      %v1805 = vsel %vm258, %v1744, 0
      %v1808 = vsel %vm258, %v1745, 0
      %v1811 = vsel %vm258, %v1746, 0
      %v1814 = vsel %vm258, %v1747, 0
      %v1817 = vsel %vm258, %v1748, 0
      %v1820 = vsel %vm258, %v1749, 0
      %v1823 = vsel %vm258, %v1750, 0
      %v1826 = vsel %vm258, %v1751, 0
      %v1829 = vsel %vm258, %v1752, 0
      %v1832 = vsel %vm258, %v1753, 0
      %v1835 = vsel %vm258, %v1754, 0
      %v1838 = vsel %vm258, %v1755, 0
      %v1841 = vsel %vm258, %v1756, 0
      %v1844 = vsel %vm258, %v1757, 0
      %v1847 = vsel %vm258, %v1758, 0
      %v1850 = vsel %vm258, %v1759, 0
      %v1853 = vsel %vm258, %v1760, 0
      %v1856 = vsel %vm258, %v1761, 0
      %v1859 = vsel %vm258, %v1762, 0
      %v1862 = vsel %vm568, %v1764, 0
      %1864 = vmatpush.msra.mxu0 0.0
      %1865 = vmatpush.msra.mxu0 0.0
      %1866 = vmatpush.msra.mxu0 0.0
      %1867 = vmatpush.msra.mxu0 0.0
      %1868 = vmatpush.msra.mxu0 0.0
      %1869 = vmatpush.msra.mxu0 0.0
      %1870 = vmatpush.msra.mxu0 0.0
      %1871 = vmatpush.msra.mxu0 0.0
      %1872 = vmatpush.msra.mxu0 0.0
      %1873 = vmatpush.msra.mxu0 0.0
      %1874 = vmatpush.msra.mxu0 0.0
      %1875 = vmatpush.msra.mxu0 0.0
      %1876 = vmatpush.msra.mxu0 0.0
      %1877 = vmatpush.msra.mxu0 0.0
      %1878 = vmatpush.msra.mxu0 0.0
      %1879 = vmatpush.msra.mxu0 %v1862
      %1880 = vmatmul.f32.gmra.mxu0 %v1766
      %v1881 = vpop.f32.mrf.mxu0
      %v1882 = vadd.f32 0.0, %v1881
      %1883 = vmatmul.f32.gmra.mxu0 %v1769
      %v1884 = vpop.f32.mrf.mxu0
      %v1885 = vadd.f32 0.0, %v1884
      %1886 = vmatmul.f32.gmra.mxu0 %v1772
      %v1887 = vpop.f32.mrf.mxu0
      %v1888 = vadd.f32 0.0, %v1887
      %1889 = vmatmul.f32.gmra.mxu0 %v1775
      %v1890 = vpop.f32.mrf.mxu0
      %v1891 = vadd.f32 0.0, %v1890
      %1892 = vmatmul.f32.gmra.mxu0 %v1778
      %v1893 = vpop.f32.mrf.mxu0
      %v1894 = vadd.f32 0.0, %v1893
      %1895 = vmatmul.f32.gmra.mxu0 %v1781
      %v1896 = vpop.f32.mrf.mxu0
      %v1897 = vadd.f32 0.0, %v1896
      %1898 = vmatmul.f32.gmra.mxu0 %v1784
      %v1899 = vpop.f32.mrf.mxu0
      %v1900 = vadd.f32 0.0, %v1899
      %1901 = vmatmul.f32.gmra.mxu0 %v1787
      %v1902 = vpop.f32.mrf.mxu0
      %v1903 = vadd.f32 0.0, %v1902
      %1904 = vmatmul.f32.gmra.mxu0 %v1790
      %v1905 = vpop.f32.mrf.mxu0
      %v1906 = vadd.f32 0.0, %v1905
      %1907 = vmatmul.f32.gmra.mxu0 %v1793
      %v1908 = vpop.f32.mrf.mxu0
      %v1909 = vadd.f32 0.0, %v1908
      %1910 = vmatmul.f32.gmra.mxu0 %v1796
      %v1911 = vpop.f32.mrf.mxu0
      %v1912 = vadd.f32 0.0, %v1911
      %1913 = vmatmul.f32.gmra.mxu0 %v1799
      %v1914 = vpop.f32.mrf.mxu0
      %v1915 = vadd.f32 0.0, %v1914
      %1916 = vmatmul.f32.gmra.mxu0 %v1802
      %v1917 = vpop.f32.mrf.mxu0
      %v1918 = vadd.f32 0.0, %v1917
      %1919 = vmatmul.f32.gmra.mxu0 %v1805
      %v1920 = vpop.f32.mrf.mxu0
      %v1921 = vadd.f32 0.0, %v1920
      %1922 = vmatmul.f32.gmra.mxu0 %v1808
      %v1923 = vpop.f32.mrf.mxu0
      %v1924 = vadd.f32 0.0, %v1923
      %1925 = vmatmul.f32.gmra.mxu0 %v1811
      %v1926 = vpop.f32.mrf.mxu0
      %v1927 = vadd.f32 0.0, %v1926
      %1928 = vmatmul.f32.gmra.mxu0 %v1814
      %v1929 = vpop.f32.mrf.mxu0
      %v1930 = vadd.f32 0.0, %v1929
      %1931 = vmatmul.f32.gmra.mxu0 %v1817
      %v1932 = vpop.f32.mrf.mxu0
      %v1933 = vadd.f32 0.0, %v1932
      %1934 = vmatmul.f32.gmra.mxu0 %v1820
      %v1935 = vpop.f32.mrf.mxu0
      %v1936 = vadd.f32 0.0, %v1935
      %1937 = vmatmul.f32.gmra.mxu0 %v1823
      %v1938 = vpop.f32.mrf.mxu0
      %v1939 = vadd.f32 0.0, %v1938
      %1940 = vmatmul.f32.gmra.mxu0 %v1826
      %v1941 = vpop.f32.mrf.mxu0
      %v1942 = vadd.f32 0.0, %v1941
      %1943 = vmatmul.f32.gmra.mxu0 %v1829
      %v1944 = vpop.f32.mrf.mxu0
      %v1945 = vadd.f32 0.0, %v1944
      %1946 = vmatmul.f32.gmra.mxu0 %v1832
      %v1947 = vpop.f32.mrf.mxu0
      %v1948 = vadd.f32 0.0, %v1947
      %1949 = vmatmul.f32.gmra.mxu0 %v1835
      %v1950 = vpop.f32.mrf.mxu0
      %v1951 = vadd.f32 0.0, %v1950
      %1952 = vmatmul.f32.gmra.mxu0 %v1838
      %v1953 = vpop.f32.mrf.mxu0
      %v1954 = vadd.f32 0.0, %v1953
      %1955 = vmatmul.f32.gmra.mxu0 %v1841
      %v1956 = vpop.f32.mrf.mxu0
      %v1957 = vadd.f32 0.0, %v1956
      %1958 = vmatmul.f32.gmra.mxu0 %v1844
      %v1959 = vpop.f32.mrf.mxu0
      %v1960 = vadd.f32 0.0, %v1959
      %1961 = vmatmul.f32.gmra.mxu0 %v1847
      %v1962 = vpop.f32.mrf.mxu0
      %v1963 = vadd.f32 0.0, %v1962
      %1964 = vmatmul.f32.gmra.mxu0 %v1850
      %v1965 = vpop.f32.mrf.mxu0
      %v1966 = vadd.f32 0.0, %v1965
      %1967 = vmatmul.f32.gmra.mxu0 %v1853
      %v1968 = vpop.f32.mrf.mxu0
      %v1969 = vadd.f32 0.0, %v1968
      %1970 = vmatmul.f32.gmra.mxu0 %v1856
      %v1971 = vpop.f32.mrf.mxu0
      %v1972 = vadd.f32 0.0, %v1971
      %1973 = vmatmul.f32.gmra.mxu0 %v1859
      %v1974 = vpop.f32.mrf.mxu0
      %v1975 = vadd.f32 0.0, %v1974
      %1976 = vdwg.mxu0
      %v1977 = vadd.f32 %v1699, %v1882
      %v1978 = vadd.f32 %v1700, %v1885
      %v1979 = vadd.f32 %v1701, %v1888
      %v1980 = vadd.f32 %v1702, %v1891
      %v1981 = vadd.f32 %v1703, %v1894
      %v1982 = vadd.f32 %v1704, %v1897
      %v1983 = vadd.f32 %v1705, %v1900
      %v1984 = vadd.f32 %v1706, %v1903
      %v1985 = vadd.f32 %v1707, %v1906
      %v1986 = vadd.f32 %v1708, %v1909
      %v1987 = vadd.f32 %v1709, %v1912
      %v1988 = vadd.f32 %v1710, %v1915
      %v1989 = vadd.f32 %v1711, %v1918
      %v1990 = vadd.f32 %v1712, %v1921
      %v1991 = vadd.f32 %v1713, %v1924
      %v1992 = vadd.f32 %v1714, %v1927
      %v1993 = vadd.f32 %v1715, %v1930
      %v1994 = vadd.f32 %v1716, %v1933
      %v1995 = vadd.f32 %v1717, %v1936
      %v1996 = vadd.f32 %v1718, %v1939
      %v1997 = vadd.f32 %v1719, %v1942
      %v1998 = vadd.f32 %v1720, %v1945
      %v1999 = vadd.f32 %v1721, %v1948
      %v2000 = vadd.f32 %v1722, %v1951
      %v2001 = vadd.f32 %v1723, %v1954
      %v2002 = vadd.f32 %v1724, %v1957
      %v2003 = vadd.f32 %v1725, %v1960
      %v2004 = vadd.f32 %v1726, %v1963
      %v2005 = vadd.f32 %v1727, %v1966
      %v2006 = vadd.f32 %v1728, %v1969
      %v2007 = vadd.f32 %v1729, %v1972
      %v2008 = vadd.f32 %v1730, %v1975
      %s2009 = scalar_lea.vmem [#allocation2], 64
      %v2010 = vld [vmem:[%s2009 + $0x7] sm:$0xff]
      %v2011 = vld [vmem:[%s2009 + $0xf] sm:$0xff]
      %v2012 = vld [vmem:[%s2009 + $0x27] sm:$0xff]
      %v2013 = vld [vmem:[%s2009 + $0x2f] sm:$0xff]
      %v2014 = vld [vmem:[%s2009 + $0x47] sm:$0xff]
      %v2015 = vld [vmem:[%s2009 + $0x4f] sm:$0xff]
      %v2016 = vld [vmem:[%s2009 + $0x67] sm:$0xff]
      %v2017 = vld [vmem:[%s2009 + $0x6f] sm:$0xff]
      %v2018 = vld [vmem:[%s2009 + $0x87] sm:$0xff]
      %v2019 = vld [vmem:[%s2009 + $0x8f] sm:$0xff]
      %v2020 = vld [vmem:[%s2009 + $0xa7] sm:$0xff]
      %v2021 = vld [vmem:[%s2009 + $0xaf] sm:$0xff]
      %v2022 = vld [vmem:[%s2009 + $0xc7] sm:$0xff]
      %v2023 = vld [vmem:[%s2009 + $0xcf] sm:$0xff]
      %v2024 = vld [vmem:[%s2009 + $0xe7] sm:$0xff]
      %v2025 = vld [vmem:[%s2009 + $0xef] sm:$0xff]
      %v2026 = vld [vmem:[%s2009 + $0x107] sm:$0xff]
      %v2027 = vld [vmem:[%s2009 + $0x10f] sm:$0xff]
      %v2028 = vld [vmem:[%s2009 + $0x127] sm:$0xff]
      %v2029 = vld [vmem:[%s2009 + $0x12f] sm:$0xff]
      %v2030 = vld [vmem:[%s2009 + $0x147] sm:$0xff]
      %v2031 = vld [vmem:[%s2009 + $0x14f] sm:$0xff]
      %v2032 = vld [vmem:[%s2009 + $0x167] sm:$0xff]
      %v2033 = vld [vmem:[%s2009 + $0x16f] sm:$0xff]
      %v2034 = vld [vmem:[%s2009 + $0x187] sm:$0xff]
      %v2035 = vld [vmem:[%s2009 + $0x18f] sm:$0xff]
      %v2036 = vld [vmem:[%s2009 + $0x1a7] sm:$0xff]
      %v2037 = vld [vmem:[%s2009 + $0x1af] sm:$0xff]
      %v2038 = vld [vmem:[%s2009 + $0x1c7] sm:$0xff]
      %v2039 = vld [vmem:[%s2009 + $0x1cf] sm:$0xff]
      %v2040 = vld [vmem:[%s2009 + $0x1e7] sm:$0xff]
      %v2041 = vld [vmem:[%s2009 + $0x1ef] sm:$0xff]
      %s2042 = scalar_lea.vmem %s1, 24
      %v2043 = vld [vmem:[%s2042] sm:$0xf]
      %v2045 = vsel %vm258, %v2010, 0
      %v2048 = vsel %vm258, %v2011, 0
      %v2051 = vsel %vm258, %v2012, 0
      %v2054 = vsel %vm258, %v2013, 0
      %v2057 = vsel %vm258, %v2014, 0
      %v2060 = vsel %vm258, %v2015, 0
      %v2063 = vsel %vm258, %v2016, 0
      %v2066 = vsel %vm258, %v2017, 0
      %v2069 = vsel %vm258, %v2018, 0
      %v2072 = vsel %vm258, %v2019, 0
      %v2075 = vsel %vm258, %v2020, 0
      %v2078 = vsel %vm258, %v2021, 0
      %v2081 = vsel %vm258, %v2022, 0
      %v2084 = vsel %vm258, %v2023, 0
      %v2087 = vsel %vm258, %v2024, 0
      %v2090 = vsel %vm258, %v2025, 0
      %v2093 = vsel %vm258, %v2026, 0
      %v2096 = vsel %vm258, %v2027, 0
      %v2099 = vsel %vm258, %v2028, 0
      %v2102 = vsel %vm258, %v2029, 0
      %v2105 = vsel %vm258, %v2030, 0
      %v2108 = vsel %vm258, %v2031, 0
      %v2111 = vsel %vm258, %v2032, 0
      %v2114 = vsel %vm258, %v2033, 0
      %v2117 = vsel %vm258, %v2034, 0
      %v2120 = vsel %vm258, %v2035, 0
      %v2123 = vsel %vm258, %v2036, 0
      %v2126 = vsel %vm258, %v2037, 0
      %v2129 = vsel %vm258, %v2038, 0
      %v2132 = vsel %vm258, %v2039, 0
      %v2135 = vsel %vm258, %v2040, 0
      %v2138 = vsel %vm258, %v2041, 0
      %v2141 = vsel %vm568, %v2043, 0
      %2143 = vmatpush.msra.mxu0 0.0
      %2144 = vmatpush.msra.mxu0 0.0
      %2145 = vmatpush.msra.mxu0 0.0
      %2146 = vmatpush.msra.mxu0 0.0
      %2147 = vmatpush.msra.mxu0 0.0
      %2148 = vmatpush.msra.mxu0 0.0
      %2149 = vmatpush.msra.mxu0 0.0
      %2150 = vmatpush.msra.mxu0 0.0
      %2151 = vmatpush.msra.mxu0 0.0
      %2152 = vmatpush.msra.mxu0 0.0
      %2153 = vmatpush.msra.mxu0 0.0
      %2154 = vmatpush.msra.mxu0 0.0
      %2155 = vmatpush.msra.mxu0 0.0
      %2156 = vmatpush.msra.mxu0 0.0
      %2157 = vmatpush.msra.mxu0 0.0
      %2158 = vmatpush.msra.mxu0 %v2141
      %2159 = vmatmul.f32.gmra.mxu0 %v2045
      %v2160 = vpop.f32.mrf.mxu0
      %v2161 = vadd.f32 0.0, %v2160
      %2162 = vmatmul.f32.gmra.mxu0 %v2048
      %v2163 = vpop.f32.mrf.mxu0
      %v2164 = vadd.f32 0.0, %v2163
      %2165 = vmatmul.f32.gmra.mxu0 %v2051
      %v2166 = vpop.f32.mrf.mxu0
      %v2167 = vadd.f32 0.0, %v2166
      %2168 = vmatmul.f32.gmra.mxu0 %v2054
      %v2169 = vpop.f32.mrf.mxu0
      %v2170 = vadd.f32 0.0, %v2169
      %2171 = vmatmul.f32.gmra.mxu0 %v2057
      %v2172 = vpop.f32.mrf.mxu0
      %v2173 = vadd.f32 0.0, %v2172
      %2174 = vmatmul.f32.gmra.mxu0 %v2060
      %v2175 = vpop.f32.mrf.mxu0
      %v2176 = vadd.f32 0.0, %v2175
      %2177 = vmatmul.f32.gmra.mxu0 %v2063
      %v2178 = vpop.f32.mrf.mxu0
      %v2179 = vadd.f32 0.0, %v2178
      %2180 = vmatmul.f32.gmra.mxu0 %v2066
      %v2181 = vpop.f32.mrf.mxu0
      %v2182 = vadd.f32 0.0, %v2181
      %2183 = vmatmul.f32.gmra.mxu0 %v2069
      %v2184 = vpop.f32.mrf.mxu0
      %v2185 = vadd.f32 0.0, %v2184
      %2186 = vmatmul.f32.gmra.mxu0 %v2072
      %v2187 = vpop.f32.mrf.mxu0
      %v2188 = vadd.f32 0.0, %v2187
      %2189 = vmatmul.f32.gmra.mxu0 %v2075
      %v2190 = vpop.f32.mrf.mxu0
      %v2191 = vadd.f32 0.0, %v2190
      %2192 = vmatmul.f32.gmra.mxu0 %v2078
      %v2193 = vpop.f32.mrf.mxu0
      %v2194 = vadd.f32 0.0, %v2193
      %2195 = vmatmul.f32.gmra.mxu0 %v2081
      %v2196 = vpop.f32.mrf.mxu0
      %v2197 = vadd.f32 0.0, %v2196
      %2198 = vmatmul.f32.gmra.mxu0 %v2084
      %v2199 = vpop.f32.mrf.mxu0
      %v2200 = vadd.f32 0.0, %v2199
      %2201 = vmatmul.f32.gmra.mxu0 %v2087
      %v2202 = vpop.f32.mrf.mxu0
      %v2203 = vadd.f32 0.0, %v2202
      %2204 = vmatmul.f32.gmra.mxu0 %v2090
      %v2205 = vpop.f32.mrf.mxu0
      %v2206 = vadd.f32 0.0, %v2205
      %2207 = vmatmul.f32.gmra.mxu0 %v2093
      %v2208 = vpop.f32.mrf.mxu0
      %v2209 = vadd.f32 0.0, %v2208
      %2210 = vmatmul.f32.gmra.mxu0 %v2096
      %v2211 = vpop.f32.mrf.mxu0
      %v2212 = vadd.f32 0.0, %v2211
      %2213 = vmatmul.f32.gmra.mxu0 %v2099
      %v2214 = vpop.f32.mrf.mxu0
      %v2215 = vadd.f32 0.0, %v2214
      %2216 = vmatmul.f32.gmra.mxu0 %v2102
      %v2217 = vpop.f32.mrf.mxu0
      %v2218 = vadd.f32 0.0, %v2217
      %2219 = vmatmul.f32.gmra.mxu0 %v2105
      %v2220 = vpop.f32.mrf.mxu0
      %v2221 = vadd.f32 0.0, %v2220
      %2222 = vmatmul.f32.gmra.mxu0 %v2108
      %v2223 = vpop.f32.mrf.mxu0
      %v2224 = vadd.f32 0.0, %v2223
      %2225 = vmatmul.f32.gmra.mxu0 %v2111
      %v2226 = vpop.f32.mrf.mxu0
      %v2227 = vadd.f32 0.0, %v2226
      %2228 = vmatmul.f32.gmra.mxu0 %v2114
      %v2229 = vpop.f32.mrf.mxu0
      %v2230 = vadd.f32 0.0, %v2229
      %2231 = vmatmul.f32.gmra.mxu0 %v2117
      %v2232 = vpop.f32.mrf.mxu0
      %v2233 = vadd.f32 0.0, %v2232
      %2234 = vmatmul.f32.gmra.mxu0 %v2120
      %v2235 = vpop.f32.mrf.mxu0
      %v2236 = vadd.f32 0.0, %v2235
      %2237 = vmatmul.f32.gmra.mxu0 %v2123
      %v2238 = vpop.f32.mrf.mxu0
      %v2239 = vadd.f32 0.0, %v2238
      %2240 = vmatmul.f32.gmra.mxu0 %v2126
      %v2241 = vpop.f32.mrf.mxu0
      %v2242 = vadd.f32 0.0, %v2241
      %2243 = vmatmul.f32.gmra.mxu0 %v2129
      %v2244 = vpop.f32.mrf.mxu0
      %v2245 = vadd.f32 0.0, %v2244
      %2246 = vmatmul.f32.gmra.mxu0 %v2132
      %v2247 = vpop.f32.mrf.mxu0
      %v2248 = vadd.f32 0.0, %v2247
      %2249 = vmatmul.f32.gmra.mxu0 %v2135
      %v2250 = vpop.f32.mrf.mxu0
      %v2251 = vadd.f32 0.0, %v2250
      %2252 = vmatmul.f32.gmra.mxu0 %v2138
      %v2253 = vpop.f32.mrf.mxu0
      %v2254 = vadd.f32 0.0, %v2253
      %2255 = vdwg.mxu0
      %v2256 = vadd.f32 %v1977, %v2161
      %v2257 = vadd.f32 %v1978, %v2164
      %v2258 = vadd.f32 %v1979, %v2167
      %v2259 = vadd.f32 %v1980, %v2170
      %v2260 = vadd.f32 %v1981, %v2173
      %v2261 = vadd.f32 %v1982, %v2176
      %v2262 = vadd.f32 %v1983, %v2179
      %v2263 = vadd.f32 %v1984, %v2182
      %v2264 = vadd.f32 %v1985, %v2185
      %v2265 = vadd.f32 %v1986, %v2188
      %v2266 = vadd.f32 %v1987, %v2191
      %v2267 = vadd.f32 %v1988, %v2194
      %v2268 = vadd.f32 %v1989, %v2197
      %v2269 = vadd.f32 %v1990, %v2200
      %v2270 = vadd.f32 %v1991, %v2203
      %v2271 = vadd.f32 %v1992, %v2206
      %v2272 = vadd.f32 %v1993, %v2209
      %v2273 = vadd.f32 %v1994, %v2212
      %v2274 = vadd.f32 %v1995, %v2215
      %v2275 = vadd.f32 %v1996, %v2218
      %v2276 = vadd.f32 %v1997, %v2221
      %v2277 = vadd.f32 %v1998, %v2224
      %v2278 = vadd.f32 %v1999, %v2227
      %v2279 = vadd.f32 %v2000, %v2230
      %v2280 = vadd.f32 %v2001, %v2233
      %v2281 = vadd.f32 %v2002, %v2236
      %v2282 = vadd.f32 %v2003, %v2239
      %v2283 = vadd.f32 %v2004, %v2242
      %v2284 = vadd.f32 %v2005, %v2245
      %v2285 = vadd.f32 %v2006, %v2248
      %v2286 = vadd.f32 %v2007, %v2251
      %v2287 = vadd.f32 %v2008, %v2254
      %v2288 = vld [vmem:[%s2009 + $0x8] sm:$0xff]
      %v2289 = vld [vmem:[%s2009 + $0x10] sm:$0xff]
      %v2290 = vld [vmem:[%s2009 + $0x28] sm:$0xff]
      %v2291 = vld [vmem:[%s2009 + $0x30] sm:$0xff]
      %v2292 = vld [vmem:[%s2009 + $0x48] sm:$0xff]
      %v2293 = vld [vmem:[%s2009 + $0x50] sm:$0xff]
      %v2294 = vld [vmem:[%s2009 + $0x68] sm:$0xff]
      %v2295 = vld [vmem:[%s2009 + $0x70] sm:$0xff]
      %v2296 = vld [vmem:[%s2009 + $0x88] sm:$0xff]
      %v2297 = vld [vmem:[%s2009 + $0x90] sm:$0xff]
      %v2298 = vld [vmem:[%s2009 + $0xa8] sm:$0xff]
      %v2299 = vld [vmem:[%s2009 + $0xb0] sm:$0xff]
      %v2300 = vld [vmem:[%s2009 + $0xc8] sm:$0xff]
      %v2301 = vld [vmem:[%s2009 + $0xd0] sm:$0xff]
      %v2302 = vld [vmem:[%s2009 + $0xe8] sm:$0xff]
      %v2303 = vld [vmem:[%s2009 + $0xf0] sm:$0xff]
      %v2304 = vld [vmem:[%s2009 + $0x108] sm:$0xff]
      %v2305 = vld [vmem:[%s2009 + $0x110] sm:$0xff]
      %v2306 = vld [vmem:[%s2009 + $0x128] sm:$0xff]
      %v2307 = vld [vmem:[%s2009 + $0x130] sm:$0xff]
      %v2308 = vld [vmem:[%s2009 + $0x148] sm:$0xff]
      %v2309 = vld [vmem:[%s2009 + $0x150] sm:$0xff]
      %v2310 = vld [vmem:[%s2009 + $0x168] sm:$0xff]
      %v2311 = vld [vmem:[%s2009 + $0x170] sm:$0xff]
      %v2312 = vld [vmem:[%s2009 + $0x188] sm:$0xff]
      %v2313 = vld [vmem:[%s2009 + $0x190] sm:$0xff]
      %v2314 = vld [vmem:[%s2009 + $0x1a8] sm:$0xff]
      %v2315 = vld [vmem:[%s2009 + $0x1b0] sm:$0xff]
      %v2316 = vld [vmem:[%s2009 + $0x1c8] sm:$0xff]
      %v2317 = vld [vmem:[%s2009 + $0x1d0] sm:$0xff]
      %v2318 = vld [vmem:[%s2009 + $0x1e8] sm:$0xff]
      %v2319 = vld [vmem:[%s2009 + $0x1f0] sm:$0xff]
      %s2320 = scalar_lea.vmem %s1, 28
      %v2321 = vld [vmem:[%s2320] sm:$0xf]
      %v2323 = vsel %vm258, %v2288, 0
      %v2326 = vsel %vm258, %v2289, 0
      %v2329 = vsel %vm258, %v2290, 0
      %v2332 = vsel %vm258, %v2291, 0
      %v2335 = vsel %vm258, %v2292, 0
      %v2338 = vsel %vm258, %v2293, 0
      %v2341 = vsel %vm258, %v2294, 0
      %v2344 = vsel %vm258, %v2295, 0
      %v2347 = vsel %vm258, %v2296, 0
      %v2350 = vsel %vm258, %v2297, 0
      %v2353 = vsel %vm258, %v2298, 0
      %v2356 = vsel %vm258, %v2299, 0
      %v2359 = vsel %vm258, %v2300, 0
      %v2362 = vsel %vm258, %v2301, 0
      %v2365 = vsel %vm258, %v2302, 0
      %v2368 = vsel %vm258, %v2303, 0
      %v2371 = vsel %vm258, %v2304, 0
      %v2374 = vsel %vm258, %v2305, 0
      %v2377 = vsel %vm258, %v2306, 0
      %v2380 = vsel %vm258, %v2307, 0
      %v2383 = vsel %vm258, %v2308, 0
      %v2386 = vsel %vm258, %v2309, 0
      %v2389 = vsel %vm258, %v2310, 0
      %v2392 = vsel %vm258, %v2311, 0
      %v2395 = vsel %vm258, %v2312, 0
      %v2398 = vsel %vm258, %v2313, 0
      %v2401 = vsel %vm258, %v2314, 0
      %v2404 = vsel %vm258, %v2315, 0
      %v2407 = vsel %vm258, %v2316, 0
      %v2410 = vsel %vm258, %v2317, 0
      %v2413 = vsel %vm258, %v2318, 0
      %v2416 = vsel %vm258, %v2319, 0
      %v2419 = vsel %vm568, %v2321, 0
      %2421 = vmatpush.msra.mxu0 0.0
      %2422 = vmatpush.msra.mxu0 0.0
      %2423 = vmatpush.msra.mxu0 0.0
      %2424 = vmatpush.msra.mxu0 0.0
      %2425 = vmatpush.msra.mxu0 0.0
      %2426 = vmatpush.msra.mxu0 0.0
      %2427 = vmatpush.msra.mxu0 0.0
      %2428 = vmatpush.msra.mxu0 0.0
      %2429 = vmatpush.msra.mxu0 0.0
      %2430 = vmatpush.msra.mxu0 0.0
      %2431 = vmatpush.msra.mxu0 0.0
      %2432 = vmatpush.msra.mxu0 0.0
      %2433 = vmatpush.msra.mxu0 0.0
      %2434 = vmatpush.msra.mxu0 0.0
      %2435 = vmatpush.msra.mxu0 0.0
      %2436 = vmatpush.msra.mxu0 %v2419
      %2437 = vmatmul.f32.gmra.mxu0 %v2323
      %v2438 = vpop.f32.mrf.mxu0
      %v2439 = vadd.f32 0.0, %v2438
      %2440 = vmatmul.f32.gmra.mxu0 %v2326
      %v2441 = vpop.f32.mrf.mxu0
      %v2442 = vadd.f32 0.0, %v2441
      %2443 = vmatmul.f32.gmra.mxu0 %v2329
      %v2444 = vpop.f32.mrf.mxu0
      %v2445 = vadd.f32 0.0, %v2444
      %2446 = vmatmul.f32.gmra.mxu0 %v2332
      %v2447 = vpop.f32.mrf.mxu0
      %v2448 = vadd.f32 0.0, %v2447
      %2449 = vmatmul.f32.gmra.mxu0 %v2335
      %v2450 = vpop.f32.mrf.mxu0
      %v2451 = vadd.f32 0.0, %v2450
      %2452 = vmatmul.f32.gmra.mxu0 %v2338
      %v2453 = vpop.f32.mrf.mxu0
      %v2454 = vadd.f32 0.0, %v2453
      %2455 = vmatmul.f32.gmra.mxu0 %v2341
      %v2456 = vpop.f32.mrf.mxu0
      %v2457 = vadd.f32 0.0, %v2456
      %2458 = vmatmul.f32.gmra.mxu0 %v2344
      %v2459 = vpop.f32.mrf.mxu0
      %v2460 = vadd.f32 0.0, %v2459
      %2461 = vmatmul.f32.gmra.mxu0 %v2347
      %v2462 = vpop.f32.mrf.mxu0
      %v2463 = vadd.f32 0.0, %v2462
      %2464 = vmatmul.f32.gmra.mxu0 %v2350
      %v2465 = vpop.f32.mrf.mxu0
      %v2466 = vadd.f32 0.0, %v2465
      %2467 = vmatmul.f32.gmra.mxu0 %v2353
      %v2468 = vpop.f32.mrf.mxu0
      %v2469 = vadd.f32 0.0, %v2468
      %2470 = vmatmul.f32.gmra.mxu0 %v2356
      %v2471 = vpop.f32.mrf.mxu0
      %v2472 = vadd.f32 0.0, %v2471
      %2473 = vmatmul.f32.gmra.mxu0 %v2359
      %v2474 = vpop.f32.mrf.mxu0
      %v2475 = vadd.f32 0.0, %v2474
      %2476 = vmatmul.f32.gmra.mxu0 %v2362
      %v2477 = vpop.f32.mrf.mxu0
      %v2478 = vadd.f32 0.0, %v2477
      %2479 = vmatmul.f32.gmra.mxu0 %v2365
      %v2480 = vpop.f32.mrf.mxu0
      %v2481 = vadd.f32 0.0, %v2480
      %2482 = vmatmul.f32.gmra.mxu0 %v2368
      %v2483 = vpop.f32.mrf.mxu0
      %v2484 = vadd.f32 0.0, %v2483
      %2485 = vmatmul.f32.gmra.mxu0 %v2371
      %v2486 = vpop.f32.mrf.mxu0
      %v2487 = vadd.f32 0.0, %v2486
      %2488 = vmatmul.f32.gmra.mxu0 %v2374
      %v2489 = vpop.f32.mrf.mxu0
      %v2490 = vadd.f32 0.0, %v2489
      %2491 = vmatmul.f32.gmra.mxu0 %v2377
      %v2492 = vpop.f32.mrf.mxu0
      %v2493 = vadd.f32 0.0, %v2492
      %2494 = vmatmul.f32.gmra.mxu0 %v2380
      %v2495 = vpop.f32.mrf.mxu0
      %v2496 = vadd.f32 0.0, %v2495
      %2497 = vmatmul.f32.gmra.mxu0 %v2383
      %v2498 = vpop.f32.mrf.mxu0
      %v2499 = vadd.f32 0.0, %v2498
      %2500 = vmatmul.f32.gmra.mxu0 %v2386
      %v2501 = vpop.f32.mrf.mxu0
      %v2502 = vadd.f32 0.0, %v2501
      %2503 = vmatmul.f32.gmra.mxu0 %v2389
      %v2504 = vpop.f32.mrf.mxu0
      %v2505 = vadd.f32 0.0, %v2504
      %2506 = vmatmul.f32.gmra.mxu0 %v2392
      %v2507 = vpop.f32.mrf.mxu0
      %v2508 = vadd.f32 0.0, %v2507
      %2509 = vmatmul.f32.gmra.mxu0 %v2395
      %v2510 = vpop.f32.mrf.mxu0
      %v2511 = vadd.f32 0.0, %v2510
      %2512 = vmatmul.f32.gmra.mxu0 %v2398
      %v2513 = vpop.f32.mrf.mxu0
      %v2514 = vadd.f32 0.0, %v2513
      %2515 = vmatmul.f32.gmra.mxu0 %v2401
      %v2516 = vpop.f32.mrf.mxu0
      %v2517 = vadd.f32 0.0, %v2516
      %2518 = vmatmul.f32.gmra.mxu0 %v2404
      %v2519 = vpop.f32.mrf.mxu0
      %v2520 = vadd.f32 0.0, %v2519
      %2521 = vmatmul.f32.gmra.mxu0 %v2407
      %v2522 = vpop.f32.mrf.mxu0
      %v2523 = vadd.f32 0.0, %v2522
      %2524 = vmatmul.f32.gmra.mxu0 %v2410
      %v2525 = vpop.f32.mrf.mxu0
      %v2526 = vadd.f32 0.0, %v2525
      %2527 = vmatmul.f32.gmra.mxu0 %v2413
      %v2528 = vpop.f32.mrf.mxu0
      %v2529 = vadd.f32 0.0, %v2528
      %2530 = vmatmul.f32.gmra.mxu0 %v2416
      %v2531 = vpop.f32.mrf.mxu0
      %v2532 = vadd.f32 0.0, %v2531
      %2533 = vdwg.mxu0
      %v2534 = vadd.f32 %v2256, %v2439
      %v2535 = vadd.f32 %v2257, %v2442
      %v2536 = vadd.f32 %v2258, %v2445
      %v2537 = vadd.f32 %v2259, %v2448
      %v2538 = vadd.f32 %v2260, %v2451
      %v2539 = vadd.f32 %v2261, %v2454
      %v2540 = vadd.f32 %v2262, %v2457
      %v2541 = vadd.f32 %v2263, %v2460
      %v2542 = vadd.f32 %v2264, %v2463
      %v2543 = vadd.f32 %v2265, %v2466
      %v2544 = vadd.f32 %v2266, %v2469
      %v2545 = vadd.f32 %v2267, %v2472
      %v2546 = vadd.f32 %v2268, %v2475
      %v2547 = vadd.f32 %v2269, %v2478
      %v2548 = vadd.f32 %v2270, %v2481
      %v2549 = vadd.f32 %v2271, %v2484
      %v2550 = vadd.f32 %v2272, %v2487
      %v2551 = vadd.f32 %v2273, %v2490
      %v2552 = vadd.f32 %v2274, %v2493
      %v2553 = vadd.f32 %v2275, %v2496
      %v2554 = vadd.f32 %v2276, %v2499
      %v2555 = vadd.f32 %v2277, %v2502
      %v2556 = vadd.f32 %v2278, %v2505
      %v2557 = vadd.f32 %v2279, %v2508
      %v2558 = vadd.f32 %v2280, %v2511
      %v2559 = vadd.f32 %v2281, %v2514
      %v2560 = vadd.f32 %v2282, %v2517
      %v2561 = vadd.f32 %v2283, %v2520
      %v2562 = vadd.f32 %v2284, %v2523
      %v2563 = vadd.f32 %v2285, %v2526
      %v2564 = vadd.f32 %v2286, %v2529
      %v2565 = vadd.f32 %v2287, %v2532
      %v2566 = vld [vmem:[%s2009 + $0x9] sm:$0xff]
      %v2567 = vld [vmem:[%s2009 + $0x11] sm:$0xff]
      %v2568 = vld [vmem:[%s2009 + $0x29] sm:$0xff]
      %v2569 = vld [vmem:[%s2009 + $0x31] sm:$0xff]
      %v2570 = vld [vmem:[%s2009 + $0x49] sm:$0xff]
      %v2571 = vld [vmem:[%s2009 + $0x51] sm:$0xff]
      %v2572 = vld [vmem:[%s2009 + $0x69] sm:$0xff]
      %v2573 = vld [vmem:[%s2009 + $0x71] sm:$0xff]
      %v2574 = vld [vmem:[%s2009 + $0x89] sm:$0xff]
      %v2575 = vld [vmem:[%s2009 + $0x91] sm:$0xff]
      %v2576 = vld [vmem:[%s2009 + $0xa9] sm:$0xff]
      %v2577 = vld [vmem:[%s2009 + $0xb1] sm:$0xff]
      %v2578 = vld [vmem:[%s2009 + $0xc9] sm:$0xff]
      %v2579 = vld [vmem:[%s2009 + $0xd1] sm:$0xff]
      %v2580 = vld [vmem:[%s2009 + $0xe9] sm:$0xff]
      %v2581 = vld [vmem:[%s2009 + $0xf1] sm:$0xff]
      %v2582 = vld [vmem:[%s2009 + $0x109] sm:$0xff]
      %v2583 = vld [vmem:[%s2009 + $0x111] sm:$0xff]
      %v2584 = vld [vmem:[%s2009 + $0x129] sm:$0xff]
      %v2585 = vld [vmem:[%s2009 + $0x131] sm:$0xff]
      %v2586 = vld [vmem:[%s2009 + $0x149] sm:$0xff]
      %v2587 = vld [vmem:[%s2009 + $0x151] sm:$0xff]
      %v2588 = vld [vmem:[%s2009 + $0x169] sm:$0xff]
      %v2589 = vld [vmem:[%s2009 + $0x171] sm:$0xff]
      %v2590 = vld [vmem:[%s2009 + $0x189] sm:$0xff]
      %v2591 = vld [vmem:[%s2009 + $0x191] sm:$0xff]
      %v2592 = vld [vmem:[%s2009 + $0x1a9] sm:$0xff]
      %v2593 = vld [vmem:[%s2009 + $0x1b1] sm:$0xff]
      %v2594 = vld [vmem:[%s2009 + $0x1c9] sm:$0xff]
      %v2595 = vld [vmem:[%s2009 + $0x1d1] sm:$0xff]
      %v2596 = vld [vmem:[%s2009 + $0x1e9] sm:$0xff]
      %v2597 = vld [vmem:[%s2009 + $0x1f1] sm:$0xff]
      %s2598 = scalar_lea.vmem %s1, 32
      %v2599 = vld [vmem:[%s2598] sm:$0xf]
      %v2601 = vsel %vm258, %v2566, 0
      %v2604 = vsel %vm258, %v2567, 0
      %v2607 = vsel %vm258, %v2568, 0
      %v2610 = vsel %vm258, %v2569, 0
      %v2613 = vsel %vm258, %v2570, 0
      %v2616 = vsel %vm258, %v2571, 0
      %v2619 = vsel %vm258, %v2572, 0
      %v2622 = vsel %vm258, %v2573, 0
      %v2625 = vsel %vm258, %v2574, 0
      %v2628 = vsel %vm258, %v2575, 0
      %v2631 = vsel %vm258, %v2576, 0
      %v2634 = vsel %vm258, %v2577, 0
      %v2637 = vsel %vm258, %v2578, 0
      %v2640 = vsel %vm258, %v2579, 0
      %v2643 = vsel %vm258, %v2580, 0
      %v2646 = vsel %vm258, %v2581, 0
      %v2649 = vsel %vm258, %v2582, 0
      %v2652 = vsel %vm258, %v2583, 0
      %v2655 = vsel %vm258, %v2584, 0
      %v2658 = vsel %vm258, %v2585, 0
      %v2661 = vsel %vm258, %v2586, 0
      %v2664 = vsel %vm258, %v2587, 0
      %v2667 = vsel %vm258, %v2588, 0
      %v2670 = vsel %vm258, %v2589, 0
      %v2673 = vsel %vm258, %v2590, 0
      %v2676 = vsel %vm258, %v2591, 0
      %v2679 = vsel %vm258, %v2592, 0
      %v2682 = vsel %vm258, %v2593, 0
      %v2685 = vsel %vm258, %v2594, 0
      %v2688 = vsel %vm258, %v2595, 0
      %v2691 = vsel %vm258, %v2596, 0
      %v2694 = vsel %vm258, %v2597, 0
      %v2697 = vsel %vm568, %v2599, 0
      %2699 = vmatpush.msra.mxu0 0.0
      %2700 = vmatpush.msra.mxu0 0.0
      %2701 = vmatpush.msra.mxu0 0.0
      %2702 = vmatpush.msra.mxu0 0.0
      %2703 = vmatpush.msra.mxu0 0.0
      %2704 = vmatpush.msra.mxu0 0.0
      %2705 = vmatpush.msra.mxu0 0.0
      %2706 = vmatpush.msra.mxu0 0.0
      %2707 = vmatpush.msra.mxu0 0.0
      %2708 = vmatpush.msra.mxu0 0.0
      %2709 = vmatpush.msra.mxu0 0.0
      %2710 = vmatpush.msra.mxu0 0.0
      %2711 = vmatpush.msra.mxu0 0.0
      %2712 = vmatpush.msra.mxu0 0.0
      %2713 = vmatpush.msra.mxu0 0.0
      %2714 = vmatpush.msra.mxu0 %v2697
      %2715 = vmatmul.f32.gmra.mxu0 %v2601
      %v2716 = vpop.f32.mrf.mxu0
      %v2717 = vadd.f32 0.0, %v2716
      %2718 = vmatmul.f32.gmra.mxu0 %v2604
      %v2719 = vpop.f32.mrf.mxu0
      %v2720 = vadd.f32 0.0, %v2719
      %2721 = vmatmul.f32.gmra.mxu0 %v2607
      %v2722 = vpop.f32.mrf.mxu0
      %v2723 = vadd.f32 0.0, %v2722
      %2724 = vmatmul.f32.gmra.mxu0 %v2610
      %v2725 = vpop.f32.mrf.mxu0
      %v2726 = vadd.f32 0.0, %v2725
      %2727 = vmatmul.f32.gmra.mxu0 %v2613
      %v2728 = vpop.f32.mrf.mxu0
      %v2729 = vadd.f32 0.0, %v2728
      %2730 = vmatmul.f32.gmra.mxu0 %v2616
      %v2731 = vpop.f32.mrf.mxu0
      %v2732 = vadd.f32 0.0, %v2731
      %2733 = vmatmul.f32.gmra.mxu0 %v2619
      %v2734 = vpop.f32.mrf.mxu0
      %v2735 = vadd.f32 0.0, %v2734
      %2736 = vmatmul.f32.gmra.mxu0 %v2622
      %v2737 = vpop.f32.mrf.mxu0
      %v2738 = vadd.f32 0.0, %v2737
      %2739 = vmatmul.f32.gmra.mxu0 %v2625
      %v2740 = vpop.f32.mrf.mxu0
      %v2741 = vadd.f32 0.0, %v2740
      %2742 = vmatmul.f32.gmra.mxu0 %v2628
      %v2743 = vpop.f32.mrf.mxu0
      %v2744 = vadd.f32 0.0, %v2743
      %2745 = vmatmul.f32.gmra.mxu0 %v2631
      %v2746 = vpop.f32.mrf.mxu0
      %v2747 = vadd.f32 0.0, %v2746
      %2748 = vmatmul.f32.gmra.mxu0 %v2634
      %v2749 = vpop.f32.mrf.mxu0
      %v2750 = vadd.f32 0.0, %v2749
      %2751 = vmatmul.f32.gmra.mxu0 %v2637
      %v2752 = vpop.f32.mrf.mxu0
      %v2753 = vadd.f32 0.0, %v2752
      %2754 = vmatmul.f32.gmra.mxu0 %v2640
      %v2755 = vpop.f32.mrf.mxu0
      %v2756 = vadd.f32 0.0, %v2755
      %2757 = vmatmul.f32.gmra.mxu0 %v2643
      %v2758 = vpop.f32.mrf.mxu0
      %v2759 = vadd.f32 0.0, %v2758
      %2760 = vmatmul.f32.gmra.mxu0 %v2646
      %v2761 = vpop.f32.mrf.mxu0
      %v2762 = vadd.f32 0.0, %v2761
      %2763 = vmatmul.f32.gmra.mxu0 %v2649
      %v2764 = vpop.f32.mrf.mxu0
      %v2765 = vadd.f32 0.0, %v2764
      %2766 = vmatmul.f32.gmra.mxu0 %v2652
      %v2767 = vpop.f32.mrf.mxu0
      %v2768 = vadd.f32 0.0, %v2767
      %2769 = vmatmul.f32.gmra.mxu0 %v2655
      %v2770 = vpop.f32.mrf.mxu0
      %v2771 = vadd.f32 0.0, %v2770
      %2772 = vmatmul.f32.gmra.mxu0 %v2658
      %v2773 = vpop.f32.mrf.mxu0
      %v2774 = vadd.f32 0.0, %v2773
      %2775 = vmatmul.f32.gmra.mxu0 %v2661
      %v2776 = vpop.f32.mrf.mxu0
      %v2777 = vadd.f32 0.0, %v2776
      %2778 = vmatmul.f32.gmra.mxu0 %v2664
      %v2779 = vpop.f32.mrf.mxu0
      %v2780 = vadd.f32 0.0, %v2779
      %2781 = vmatmul.f32.gmra.mxu0 %v2667
      %v2782 = vpop.f32.mrf.mxu0
      %v2783 = vadd.f32 0.0, %v2782
      %2784 = vmatmul.f32.gmra.mxu0 %v2670
      %v2785 = vpop.f32.mrf.mxu0
      %v2786 = vadd.f32 0.0, %v2785
      %2787 = vmatmul.f32.gmra.mxu0 %v2673
      %v2788 = vpop.f32.mrf.mxu0
      %v2789 = vadd.f32 0.0, %v2788
      %2790 = vmatmul.f32.gmra.mxu0 %v2676
      %v2791 = vpop.f32.mrf.mxu0
      %v2792 = vadd.f32 0.0, %v2791
      %2793 = vmatmul.f32.gmra.mxu0 %v2679
      %v2794 = vpop.f32.mrf.mxu0
      %v2795 = vadd.f32 0.0, %v2794
      %2796 = vmatmul.f32.gmra.mxu0 %v2682
      %v2797 = vpop.f32.mrf.mxu0
      %v2798 = vadd.f32 0.0, %v2797
      %2799 = vmatmul.f32.gmra.mxu0 %v2685
      %v2800 = vpop.f32.mrf.mxu0
      %v2801 = vadd.f32 0.0, %v2800
      %2802 = vmatmul.f32.gmra.mxu0 %v2688
      %v2803 = vpop.f32.mrf.mxu0
      %v2804 = vadd.f32 0.0, %v2803
      %2805 = vmatmul.f32.gmra.mxu0 %v2691
      %v2806 = vpop.f32.mrf.mxu0
      %v2807 = vadd.f32 0.0, %v2806
      %2808 = vmatmul.f32.gmra.mxu0 %v2694
      %v2809 = vpop.f32.mrf.mxu0
      %v2810 = vadd.f32 0.0, %v2809
      %2811 = vdwg.mxu0
      %v2812 = vadd.f32 %v2534, %v2717
      %v2813 = vadd.f32 %v2535, %v2720
      %v2814 = vadd.f32 %v2536, %v2723
      %v2815 = vadd.f32 %v2537, %v2726
      %v2816 = vadd.f32 %v2538, %v2729
      %v2817 = vadd.f32 %v2539, %v2732
      %v2818 = vadd.f32 %v2540, %v2735
      %v2819 = vadd.f32 %v2541, %v2738
      %v2820 = vadd.f32 %v2542, %v2741
      %v2821 = vadd.f32 %v2543, %v2744
      %v2822 = vadd.f32 %v2544, %v2747
      %v2823 = vadd.f32 %v2545, %v2750
      %v2824 = vadd.f32 %v2546, %v2753
      %v2825 = vadd.f32 %v2547, %v2756
      %v2826 = vadd.f32 %v2548, %v2759
      %v2827 = vadd.f32 %v2549, %v2762
      %v2828 = vadd.f32 %v2550, %v2765
      %v2829 = vadd.f32 %v2551, %v2768
      %v2830 = vadd.f32 %v2552, %v2771
      %v2831 = vadd.f32 %v2553, %v2774
      %v2832 = vadd.f32 %v2554, %v2777
      %v2833 = vadd.f32 %v2555, %v2780
      %v2834 = vadd.f32 %v2556, %v2783
      %v2835 = vadd.f32 %v2557, %v2786
      %v2836 = vadd.f32 %v2558, %v2789
      %v2837 = vadd.f32 %v2559, %v2792
      %v2838 = vadd.f32 %v2560, %v2795
      %v2839 = vadd.f32 %v2561, %v2798
      %v2840 = vadd.f32 %v2562, %v2801
      %v2841 = vadd.f32 %v2563, %v2804
      %v2842 = vadd.f32 %v2564, %v2807
      %v2843 = vadd.f32 %v2565, %v2810
      %v2845 = vperm.slane %v404, 0
      %v2847 = vadd.f32 %v2812, %v2845
      %v2848 = vadd.f32 %v2813, %v2845
      %v2849 = vadd.f32 %v2814, %v2845
      %v2850 = vadd.f32 %v2815, %v2845
      %v2851 = vadd.f32 %v2816, %v2845
      %v2852 = vadd.f32 %v2817, %v2845
      %v2853 = vadd.f32 %v2818, %v2845
      %v2854 = vadd.f32 %v2819, %v2845
      %v2855 = vadd.f32 %v2820, %v2845
      %v2856 = vadd.f32 %v2821, %v2845
      %v2857 = vadd.f32 %v2822, %v2845
      %v2858 = vadd.f32 %v2823, %v2845
      %v2859 = vadd.f32 %v2824, %v2845
      %v2860 = vadd.f32 %v2825, %v2845
      %v2861 = vadd.f32 %v2826, %v2845
      %v2862 = vadd.f32 %v2827, %v2845
      %v2863 = vadd.f32 %v2828, %v2845
      %v2864 = vadd.f32 %v2829, %v2845
      %v2865 = vadd.f32 %v2830, %v2845
      %v2866 = vadd.f32 %v2831, %v2845
      %v2867 = vadd.f32 %v2832, %v2845
      %v2868 = vadd.f32 %v2833, %v2845
      %v2869 = vadd.f32 %v2834, %v2845
      %v2870 = vadd.f32 %v2835, %v2845
      %v2871 = vadd.f32 %v2836, %v2845
      %v2872 = vadd.f32 %v2837, %v2845
      %v2873 = vadd.f32 %v2838, %v2845
      %v2874 = vadd.f32 %v2839, %v2845
      %v2875 = vadd.f32 %v2840, %v2845
      %v2876 = vadd.f32 %v2841, %v2845
      %v2877 = vadd.f32 %v2842, %v2845
      %v2878 = vadd.f32 %v2843, %v2845
      %vm2879 = vcmp.gt.f32.partialorder %v2847, 0.0
      %vm2880 = vcmp.gt.f32.partialorder %v2848, 0.0
      %vm2881 = vcmp.gt.f32.partialorder %v2849, 0.0
      %vm2882 = vcmp.gt.f32.partialorder %v2850, 0.0
      %vm2883 = vcmp.gt.f32.partialorder %v2851, 0.0
      %vm2884 = vcmp.gt.f32.partialorder %v2852, 0.0
      %vm2885 = vcmp.gt.f32.partialorder %v2853, 0.0
      %vm2886 = vcmp.gt.f32.partialorder %v2854, 0.0
      %vm2887 = vcmp.gt.f32.partialorder %v2855, 0.0
      %vm2888 = vcmp.gt.f32.partialorder %v2856, 0.0
      %vm2889 = vcmp.gt.f32.partialorder %v2857, 0.0
      %vm2890 = vcmp.gt.f32.partialorder %v2858, 0.0
      %vm2891 = vcmp.gt.f32.partialorder %v2859, 0.0
      %vm2892 = vcmp.gt.f32.partialorder %v2860, 0.0
      %vm2893 = vcmp.gt.f32.partialorder %v2861, 0.0
      %vm2894 = vcmp.gt.f32.partialorder %v2862, 0.0
      %vm2895 = vcmp.gt.f32.partialorder %v2863, 0.0
      %vm2896 = vcmp.gt.f32.partialorder %v2864, 0.0
      %vm2897 = vcmp.gt.f32.partialorder %v2865, 0.0
      %vm2898 = vcmp.gt.f32.partialorder %v2866, 0.0
      %vm2899 = vcmp.gt.f32.partialorder %v2867, 0.0
      %vm2900 = vcmp.gt.f32.partialorder %v2868, 0.0
      %vm2901 = vcmp.gt.f32.partialorder %v2869, 0.0
      %vm2902 = vcmp.gt.f32.partialorder %v2870, 0.0
      %vm2903 = vcmp.gt.f32.partialorder %v2871, 0.0
      %vm2904 = vcmp.gt.f32.partialorder %v2872, 0.0
      %vm2905 = vcmp.gt.f32.partialorder %v2873, 0.0
      %vm2906 = vcmp.gt.f32.partialorder %v2874, 0.0
      %vm2907 = vcmp.gt.f32.partialorder %v2875, 0.0
      %vm2908 = vcmp.gt.f32.partialorder %v2876, 0.0
      %vm2909 = vcmp.gt.f32.partialorder %v2877, 0.0
      %vm2910 = vcmp.gt.f32.partialorder %v2878, 0.0
      %v2911 = vmul.f32 %v2847, 0.01
      %v2912 = vmul.f32 %v2848, 0.01
      %v2913 = vmul.f32 %v2849, 0.01
      %v2914 = vmul.f32 %v2850, 0.01
      %v2915 = vmul.f32 %v2851, 0.01
      %v2916 = vmul.f32 %v2852, 0.01
      %v2917 = vmul.f32 %v2853, 0.01
      %v2918 = vmul.f32 %v2854, 0.01
      %v2919 = vmul.f32 %v2855, 0.01
      %v2920 = vmul.f32 %v2856, 0.01
      %v2921 = vmul.f32 %v2857, 0.01
      %v2922 = vmul.f32 %v2858, 0.01
      %v2923 = vmul.f32 %v2859, 0.01
      %v2924 = vmul.f32 %v2860, 0.01
      %v2925 = vmul.f32 %v2861, 0.01
      %v2926 = vmul.f32 %v2862, 0.01
      %v2927 = vmul.f32 %v2863, 0.01
      %v2928 = vmul.f32 %v2864, 0.01
      %v2929 = vmul.f32 %v2865, 0.01
      %v2930 = vmul.f32 %v2866, 0.01
      %v2931 = vmul.f32 %v2867, 0.01
      %v2932 = vmul.f32 %v2868, 0.01
      %v2933 = vmul.f32 %v2869, 0.01
      %v2934 = vmul.f32 %v2870, 0.01
      %v2935 = vmul.f32 %v2871, 0.01
      %v2936 = vmul.f32 %v2872, 0.01
      %v2937 = vmul.f32 %v2873, 0.01
      %v2938 = vmul.f32 %v2874, 0.01
      %v2939 = vmul.f32 %v2875, 0.01
      %v2940 = vmul.f32 %v2876, 0.01
      %v2941 = vmul.f32 %v2877, 0.01
      %v2942 = vmul.f32 %v2878, 0.01
      %v2943 = vsel %vm2879, %v2847, %v2911
      %v2944 = vsel %vm2880, %v2848, %v2912
      %v2945 = vsel %vm2881, %v2849, %v2913
      %v2946 = vsel %vm2882, %v2850, %v2914
      %v2947 = vsel %vm2883, %v2851, %v2915
      %v2948 = vsel %vm2884, %v2852, %v2916
      %v2949 = vsel %vm2885, %v2853, %v2917
      %v2950 = vsel %vm2886, %v2854, %v2918
      %v2951 = vsel %vm2887, %v2855, %v2919
      %v2952 = vsel %vm2888, %v2856, %v2920
      %v2953 = vsel %vm2889, %v2857, %v2921
      %v2954 = vsel %vm2890, %v2858, %v2922
      %v2955 = vsel %vm2891, %v2859, %v2923
      %v2956 = vsel %vm2892, %v2860, %v2924
      %v2957 = vsel %vm2893, %v2861, %v2925
      %v2958 = vsel %vm2894, %v2862, %v2926
      %v2959 = vsel %vm2895, %v2863, %v2927
      %v2960 = vsel %vm2896, %v2864, %v2928
      %v2961 = vsel %vm2897, %v2865, %v2929
      %v2962 = vsel %vm2898, %v2866, %v2930
      %v2963 = vsel %vm2899, %v2867, %v2931
      %v2964 = vsel %vm2900, %v2868, %v2932
      %v2965 = vsel %vm2901, %v2869, %v2933
      %v2966 = vsel %vm2902, %v2870, %v2934
      %v2967 = vsel %vm2903, %v2871, %v2935
      %v2968 = vsel %vm2904, %v2872, %v2936
      %v2969 = vsel %vm2905, %v2873, %v2937
      %v2970 = vsel %vm2906, %v2874, %v2938
      %v2971 = vsel %vm2907, %v2875, %v2939
      %v2972 = vsel %vm2908, %v2876, %v2940
      %v2973 = vsel %vm2909, %v2877, %v2941
      %v2974 = vsel %vm2910, %v2878, %v2942
      %s2975 = scalar_lea.vmem [#allocation3], 32
      %vm2976 = vcmask 64512
      %2977 = vst.msk [vmem:[%s2975 + $0x8] sm:$0xff] %vm2976, %v2943
      %2978 = vst.msk [vmem:[%s2975 + $0x10] sm:$0xff] %vm2976, %v2944
      %2979 = vst.msk [vmem:[%s2975 + $0x28] sm:$0xff] %vm2976, %v2945
      %2980 = vst.msk [vmem:[%s2975 + $0x30] sm:$0xff] %vm2976, %v2946
      %2981 = vst.msk [vmem:[%s2975 + $0x48] sm:$0xff] %vm2976, %v2947
      %2982 = vst.msk [vmem:[%s2975 + $0x50] sm:$0xff] %vm2976, %v2948
      %2983 = vst.msk [vmem:[%s2975 + $0x68] sm:$0xff] %vm2976, %v2949
      %2984 = vst.msk [vmem:[%s2975 + $0x70] sm:$0xff] %vm2976, %v2950
      %2985 = vst.msk [vmem:[%s2975 + $0x88] sm:$0xff] %vm2976, %v2951
      %2986 = vst.msk [vmem:[%s2975 + $0x90] sm:$0xff] %vm2976, %v2952
      %2987 = vst.msk [vmem:[%s2975 + $0xa8] sm:$0xff] %vm2976, %v2953
      %2988 = vst.msk [vmem:[%s2975 + $0xb0] sm:$0xff] %vm2976, %v2954
      %2989 = vst.msk [vmem:[%s2975 + $0xc8] sm:$0xff] %vm2976, %v2955
      %2990 = vst.msk [vmem:[%s2975 + $0xd0] sm:$0xff] %vm2976, %v2956
      %2991 = vst.msk [vmem:[%s2975 + $0xe8] sm:$0xff] %vm2976, %v2957
      %2992 = vst.msk [vmem:[%s2975 + $0xf0] sm:$0xff] %vm2976, %v2958
      %2993 = vst.msk [vmem:[%s2975 + $0x108] sm:$0xff] %vm2976, %v2959
      %2994 = vst.msk [vmem:[%s2975 + $0x110] sm:$0xff] %vm2976, %v2960
      %2995 = vst.msk [vmem:[%s2975 + $0x128] sm:$0xff] %vm2976, %v2961
      %2996 = vst.msk [vmem:[%s2975 + $0x130] sm:$0xff] %vm2976, %v2962
      %2997 = vst.msk [vmem:[%s2975 + $0x148] sm:$0xff] %vm2976, %v2963
      %2998 = vst.msk [vmem:[%s2975 + $0x150] sm:$0xff] %vm2976, %v2964
      %2999 = vst.msk [vmem:[%s2975 + $0x168] sm:$0xff] %vm2976, %v2965
      %3000 = vst.msk [vmem:[%s2975 + $0x170] sm:$0xff] %vm2976, %v2966
      %3001 = vst.msk [vmem:[%s2975 + $0x188] sm:$0xff] %vm2976, %v2967
      %3002 = vst.msk [vmem:[%s2975 + $0x190] sm:$0xff] %vm2976, %v2968
      %3003 = vst.msk [vmem:[%s2975 + $0x1a8] sm:$0xff] %vm2976, %v2969
      %3004 = vst.msk [vmem:[%s2975 + $0x1b0] sm:$0xff] %vm2976, %v2970
      %3005 = vst.msk [vmem:[%s2975 + $0x1c8] sm:$0xff] %vm2976, %v2971
      %3006 = vst.msk [vmem:[%s2975 + $0x1d0] sm:$0xff] %vm2976, %v2972
      %3007 = vst.msk [vmem:[%s2975 + $0x1e8] sm:$0xff] %vm2976, %v2973
      %3008 = vst.msk [vmem:[%s2975 + $0x1f0] sm:$0xff] %vm2976, %v2974
      %3009 = vst.msk [vmem:[#allocation3 + $0x8] sm:$0xff] %vm2976, %v2943
      %3010 = vst.msk [vmem:[#allocation3 + $0x10] sm:$0xff] %vm2976, %v2944
      %s3011 = scalar_lea.vmem [#allocation3], 544
      %3012 = vst.msk [vmem:[%s3011 + $0x8] sm:$0xff] %vm2976, %v2973
      %3013 = vst.msk [vmem:[%s3011 + $0x10] sm:$0xff] %vm2976, %v2974
      %v3014 = vld [vmem:[#allocation3 + $0x8] sm:$0x1]
      %v3015 = vld [vmem:[#allocation3 + $0x28] sm:$0x1]
      %v3016 = vld [vmem:[#allocation3 + $0x48] sm:$0x1]
      %v3017 = vld [vmem:[#allocation3 + $0x68] sm:$0x1]
      %v3018 = vld [vmem:[#allocation3 + $0x88] sm:$0x1]
      %v3019 = vld [vmem:[#allocation3 + $0xa8] sm:$0x1]
      %v3020 = vld [vmem:[#allocation3 + $0xc8] sm:$0x1]
      %v3021 = vld [vmem:[#allocation3 + $0xe8] sm:$0x1]
      %v3022 = vld [vmem:[#allocation3 + $0x108] sm:$0x1]
      %v3023 = vld [vmem:[#allocation3 + $0x128] sm:$0x1]
      %v3024 = vld [vmem:[#allocation3 + $0x148] sm:$0x1]
      %v3025 = vld [vmem:[#allocation3 + $0x168] sm:$0x1]
      %v3026 = vld [vmem:[#allocation3 + $0x188] sm:$0x1]
      %v3027 = vld [vmem:[#allocation3 + $0x1a8] sm:$0x1]
      %v3028 = vld [vmem:[#allocation3 + $0x1c8] sm:$0x1]
      %v3029 = vld [vmem:[#allocation3 + $0x1e8] sm:$0x1]
      %v3030 = vld [vmem:[#allocation3 + $0x208] sm:$0x1]
      %v3031 = vld [vmem:[#allocation3 + $0x228] sm:$0x1]
      %v3032 = vperm.slane %v3014, 0
      %v3033 = vperm.slane %v3015, 0
      %v3034 = vperm.slane %v3016, 0
      %v3035 = vperm.slane %v3017, 0
      %v3036 = vperm.slane %v3018, 0
      %v3037 = vperm.slane %v3019, 0
      %v3038 = vperm.slane %v3020, 0
      %v3039 = vperm.slane %v3021, 0
      %v3040 = vperm.slane %v3022, 0
      %v3041 = vperm.slane %v3023, 0
      %v3042 = vperm.slane %v3024, 0
      %v3043 = vperm.slane %v3025, 0
      %v3044 = vperm.slane %v3026, 0
      %v3045 = vperm.slane %v3027, 0
      %v3046 = vperm.slane %v3028, 0
      %v3047 = vperm.slane %v3029, 0
      %v3048 = vperm.slane %v3030, 0
      %v3049 = vperm.slane %v3031, 0
      %3050 = vst.msk [vmem:[#allocation3] sm:$0xff] %vm2976, %v3032
      %3051 = vst.msk [vmem:[#allocation3 + $0x20] sm:$0xff] %vm2976, %v3033
      %3052 = vst.msk [vmem:[#allocation3 + $0x40] sm:$0xff] %vm2976, %v3034
      %3053 = vst.msk [vmem:[#allocation3 + $0x60] sm:$0xff] %vm2976, %v3035
      %3054 = vst.msk [vmem:[#allocation3 + $0x80] sm:$0xff] %vm2976, %v3036
      %3055 = vst.msk [vmem:[#allocation3 + $0xa0] sm:$0xff] %vm2976, %v3037
      %3056 = vst.msk [vmem:[#allocation3 + $0xc0] sm:$0xff] %vm2976, %v3038
      %3057 = vst.msk [vmem:[#allocation3 + $0xe0] sm:$0xff] %vm2976, %v3039
      %3058 = vst.msk [vmem:[#allocation3 + $0x100] sm:$0xff] %vm2976, %v3040
      %3059 = vst.msk [vmem:[#allocation3 + $0x120] sm:$0xff] %vm2976, %v3041
      %3060 = vst.msk [vmem:[#allocation3 + $0x140] sm:$0xff] %vm2976, %v3042
      %3061 = vst.msk [vmem:[#allocation3 + $0x160] sm:$0xff] %vm2976, %v3043
      %3062 = vst.msk [vmem:[#allocation3 + $0x180] sm:$0xff] %vm2976, %v3044
      %3063 = vst.msk [vmem:[#allocation3 + $0x1a0] sm:$0xff] %vm2976, %v3045
      %3064 = vst.msk [vmem:[#allocation3 + $0x1c0] sm:$0xff] %vm2976, %v3046
      %3065 = vst.msk [vmem:[#allocation3 + $0x1e0] sm:$0xff] %vm2976, %v3047
      %3066 = vst.msk [vmem:[#allocation3 + $0x200] sm:$0xff] %vm2976, %v3048
      %3067 = vst.msk [vmem:[#allocation3 + $0x220] sm:$0xff] %vm2976, %v3049
      %v3068 = vld [vmem:[#allocation3 + $0x17] sm:$0x1]
      %v3069 = vld [vmem:[#allocation3 + $0x37] sm:$0x1]
      %v3070 = vld [vmem:[#allocation3 + $0x57] sm:$0x1]
      %v3071 = vld [vmem:[#allocation3 + $0x77] sm:$0x1]
      %v3072 = vld [vmem:[#allocation3 + $0x97] sm:$0x1]
      %v3073 = vld [vmem:[#allocation3 + $0xb7] sm:$0x1]
      %v3074 = vld [vmem:[#allocation3 + $0xd7] sm:$0x1]
      %v3075 = vld [vmem:[#allocation3 + $0xf7] sm:$0x1]
      %v3076 = vld [vmem:[#allocation3 + $0x117] sm:$0x1]
      %v3077 = vld [vmem:[#allocation3 + $0x137] sm:$0x1]
      %v3078 = vld [vmem:[#allocation3 + $0x157] sm:$0x1]
      %v3079 = vld [vmem:[#allocation3 + $0x177] sm:$0x1]
      %v3080 = vld [vmem:[#allocation3 + $0x197] sm:$0x1]
      %v3081 = vld [vmem:[#allocation3 + $0x1b7] sm:$0x1]
      %v3082 = vld [vmem:[#allocation3 + $0x1d7] sm:$0x1]
      %v3083 = vld [vmem:[#allocation3 + $0x1f7] sm:$0x1]
      %v3084 = vld [vmem:[#allocation3 + $0x217] sm:$0x1]
      %v3085 = vld [vmem:[#allocation3 + $0x237] sm:$0x1]
      %v3086 = vperm.slane %v3068, 0
      %v3087 = vperm.slane %v3069, 0
      %v3088 = vperm.slane %v3070, 0
      %v3089 = vperm.slane %v3071, 0
      %v3090 = vperm.slane %v3072, 0
      %v3091 = vperm.slane %v3073, 0
      %v3092 = vperm.slane %v3074, 0
      %v3093 = vperm.slane %v3075, 0
      %v3094 = vperm.slane %v3076, 0
      %v3095 = vperm.slane %v3077, 0
      %v3096 = vperm.slane %v3078, 0
      %v3097 = vperm.slane %v3079, 0
      %v3098 = vperm.slane %v3080, 0
      %v3099 = vperm.slane %v3081, 0
      %v3100 = vperm.slane %v3082, 0
      %v3101 = vperm.slane %v3083, 0
      %v3102 = vperm.slane %v3084, 0
      %v3103 = vperm.slane %v3085, 0
      %3104 = vst.msk [vmem:[#allocation3 + $0x18] sm:$0xff] %vm2976, %v3086
      %3105 = vst.msk [vmem:[#allocation3 + $0x38] sm:$0xff] %vm2976, %v3087
      %3106 = vst.msk [vmem:[#allocation3 + $0x58] sm:$0xff] %vm2976, %v3088
      %3107 = vst.msk [vmem:[#allocation3 + $0x78] sm:$0xff] %vm2976, %v3089
      %3108 = vst.msk [vmem:[#allocation3 + $0x98] sm:$0xff] %vm2976, %v3090
      %3109 = vst.msk [vmem:[#allocation3 + $0xb8] sm:$0xff] %vm2976, %v3091
      %3110 = vst.msk [vmem:[#allocation3 + $0xd8] sm:$0xff] %vm2976, %v3092
      %3111 = vst.msk [vmem:[#allocation3 + $0xf8] sm:$0xff] %vm2976, %v3093
      %3112 = vst.msk [vmem:[#allocation3 + $0x118] sm:$0xff] %vm2976, %v3094
      %3113 = vst.msk [vmem:[#allocation3 + $0x138] sm:$0xff] %vm2976, %v3095
      %3114 = vst.msk [vmem:[#allocation3 + $0x158] sm:$0xff] %vm2976, %v3096
      %3115 = vst.msk [vmem:[#allocation3 + $0x178] sm:$0xff] %vm2976, %v3097
      %3116 = vst.msk [vmem:[#allocation3 + $0x198] sm:$0xff] %vm2976, %v3098
      %3117 = vst.msk [vmem:[#allocation3 + $0x1b8] sm:$0xff] %vm2976, %v3099
      %3118 = vst.msk [vmem:[#allocation3 + $0x1d8] sm:$0xff] %vm2976, %v3100
      %3119 = vst.msk [vmem:[#allocation3 + $0x1f8] sm:$0xff] %vm2976, %v3101
      %3120 = vst.msk [vmem:[#allocation3 + $0x218] sm:$0xff] %vm2976, %v3102
      %3121 = vst.msk [vmem:[#allocation3 + $0x238] sm:$0xff] %vm2976, %v3103
      %v3122 = vld [vmem:[%s4] sm:$0x1]
      %v3123 = vld [vmem:[#allocation3 + $0x7] sm:$0xff]
      %v3124 = vld [vmem:[#allocation3 + $0xf] sm:$0xff]
      %v3125 = vld [vmem:[#allocation3 + $0x27] sm:$0xff]
      %v3126 = vld [vmem:[#allocation3 + $0x2f] sm:$0xff]
      %v3127 = vld [vmem:[#allocation3 + $0x47] sm:$0xff]
      %v3128 = vld [vmem:[#allocation3 + $0x4f] sm:$0xff]
      %v3129 = vld [vmem:[#allocation3 + $0x67] sm:$0xff]
      %v3130 = vld [vmem:[#allocation3 + $0x6f] sm:$0xff]
      %v3131 = vld [vmem:[#allocation3 + $0x87] sm:$0xff]
      %v3132 = vld [vmem:[#allocation3 + $0x8f] sm:$0xff]
      %v3133 = vld [vmem:[#allocation3 + $0xa7] sm:$0xff]
      %v3134 = vld [vmem:[#allocation3 + $0xaf] sm:$0xff]
      %v3135 = vld [vmem:[#allocation3 + $0xc7] sm:$0xff]
      %v3136 = vld [vmem:[#allocation3 + $0xcf] sm:$0xff]
      %v3137 = vld [vmem:[#allocation3 + $0xe7] sm:$0xff]
      %v3138 = vld [vmem:[#allocation3 + $0xef] sm:$0xff]
      %v3139 = vld [vmem:[#allocation3 + $0x107] sm:$0xff]
      %v3140 = vld [vmem:[#allocation3 + $0x10f] sm:$0xff]
      %v3141 = vld [vmem:[#allocation3 + $0x127] sm:$0xff]
      %v3142 = vld [vmem:[#allocation3 + $0x12f] sm:$0xff]
      %v3143 = vld [vmem:[#allocation3 + $0x147] sm:$0xff]
      %v3144 = vld [vmem:[#allocation3 + $0x14f] sm:$0xff]
      %v3145 = vld [vmem:[#allocation3 + $0x167] sm:$0xff]
      %v3146 = vld [vmem:[#allocation3 + $0x16f] sm:$0xff]
      %v3147 = vld [vmem:[#allocation3 + $0x187] sm:$0xff]
      %v3148 = vld [vmem:[#allocation3 + $0x18f] sm:$0xff]
      %v3149 = vld [vmem:[#allocation3 + $0x1a7] sm:$0xff]
      %v3150 = vld [vmem:[#allocation3 + $0x1af] sm:$0xff]
      %v3151 = vld [vmem:[#allocation3 + $0x1c7] sm:$0xff]
      %v3152 = vld [vmem:[#allocation3 + $0x1cf] sm:$0xff]
      %v3153 = vld [vmem:[#allocation3 + $0x1e7] sm:$0xff]
      %v3154 = vld [vmem:[#allocation3 + $0x1ef] sm:$0xff]
      %v3155 = vld [vmem:[%s3] sm:$0xff]
      %v3156 = vld [vmem:[#allocation3 + $0x8] sm:$0xff]
      %v3157 = vld [vmem:[#allocation3 + $0x10] sm:$0xff]
      %v3158 = vld [vmem:[#allocation3 + $0x28] sm:$0xff]
      %v3159 = vld [vmem:[#allocation3 + $0x30] sm:$0xff]
      %v3160 = vld [vmem:[#allocation3 + $0x48] sm:$0xff]
      %v3161 = vld [vmem:[#allocation3 + $0x50] sm:$0xff]
      %v3162 = vld [vmem:[#allocation3 + $0x68] sm:$0xff]
      %v3163 = vld [vmem:[#allocation3 + $0x70] sm:$0xff]
      %v3164 = vld [vmem:[#allocation3 + $0x88] sm:$0xff]
      %v3165 = vld [vmem:[#allocation3 + $0x90] sm:$0xff]
      %v3166 = vld [vmem:[#allocation3 + $0xa8] sm:$0xff]
      %v3167 = vld [vmem:[#allocation3 + $0xb0] sm:$0xff]
      %v3168 = vld [vmem:[#allocation3 + $0xc8] sm:$0xff]
      %v3169 = vld [vmem:[#allocation3 + $0xd0] sm:$0xff]
      %v3170 = vld [vmem:[#allocation3 + $0xe8] sm:$0xff]
      %v3171 = vld [vmem:[#allocation3 + $0xf0] sm:$0xff]
      %v3172 = vld [vmem:[#allocation3 + $0x108] sm:$0xff]
      %v3173 = vld [vmem:[#allocation3 + $0x110] sm:$0xff]
      %v3174 = vld [vmem:[#allocation3 + $0x128] sm:$0xff]
      %v3175 = vld [vmem:[#allocation3 + $0x130] sm:$0xff]
      %v3176 = vld [vmem:[#allocation3 + $0x148] sm:$0xff]
      %v3177 = vld [vmem:[#allocation3 + $0x150] sm:$0xff]
      %v3178 = vld [vmem:[#allocation3 + $0x168] sm:$0xff]
      %v3179 = vld [vmem:[#allocation3 + $0x170] sm:$0xff]
      %v3180 = vld [vmem:[#allocation3 + $0x188] sm:$0xff]
      %v3181 = vld [vmem:[#allocation3 + $0x190] sm:$0xff]
      %v3182 = vld [vmem:[#allocation3 + $0x1a8] sm:$0xff]
      %v3183 = vld [vmem:[#allocation3 + $0x1b0] sm:$0xff]
      %v3184 = vld [vmem:[#allocation3 + $0x1c8] sm:$0xff]
      %v3185 = vld [vmem:[#allocation3 + $0x1d0] sm:$0xff]
      %v3186 = vld [vmem:[#allocation3 + $0x1e8] sm:$0xff]
      %v3187 = vld [vmem:[#allocation3 + $0x1f0] sm:$0xff]
      %s3188 = scalar_lea.vmem %s3, 8
      %v3189 = vld [vmem:[%s3188] sm:$0xff]
      %v3191 = vsel %vm2976, %v3156, 0
      %v3194 = vsel %vm2976, %v3157, 0
      %v3197 = vsel %vm2976, %v3158, 0
      %v3200 = vsel %vm2976, %v3159, 0
      %v3203 = vsel %vm2976, %v3160, 0
      %v3206 = vsel %vm2976, %v3161, 0
      %v3209 = vsel %vm2976, %v3162, 0
      %v3212 = vsel %vm2976, %v3163, 0
      %v3215 = vsel %vm2976, %v3164, 0
      %v3218 = vsel %vm2976, %v3165, 0
      %v3221 = vsel %vm2976, %v3166, 0
      %v3224 = vsel %vm2976, %v3167, 0
      %v3227 = vsel %vm2976, %v3168, 0
      %v3230 = vsel %vm2976, %v3169, 0
      %v3233 = vsel %vm2976, %v3170, 0
      %v3236 = vsel %vm2976, %v3171, 0
      %v3239 = vsel %vm2976, %v3172, 0
      %v3242 = vsel %vm2976, %v3173, 0
      %v3245 = vsel %vm2976, %v3174, 0
      %v3248 = vsel %vm2976, %v3175, 0
      %v3251 = vsel %vm2976, %v3176, 0
      %v3254 = vsel %vm2976, %v3177, 0
      %v3257 = vsel %vm2976, %v3178, 0
      %v3260 = vsel %vm2976, %v3179, 0
      %v3263 = vsel %vm2976, %v3180, 0
      %v3266 = vsel %vm2976, %v3181, 0
      %v3269 = vsel %vm2976, %v3182, 0
      %v3272 = vsel %vm2976, %v3183, 0
      %v3275 = vsel %vm2976, %v3184, 0
      %v3278 = vsel %vm2976, %v3185, 0
      %v3281 = vsel %vm2976, %v3186, 0
      %v3284 = vsel %vm2976, %v3187, 0
      %3286 = vmatpush.msra.mxu0 0.0
      %3287 = vmatpush.msra.mxu0 0.0
      %3288 = vmatpush.msra.mxu0 0.0
      %3289 = vmatpush.msra.mxu0 0.0
      %3290 = vmatpush.msra.mxu0 0.0
      %3291 = vmatpush.msra.mxu0 0.0
      %3292 = vmatpush.msra.mxu0 0.0
      %3293 = vmatpush.msra.mxu0 0.0
      %3294 = vmatpush.msra.mxu0 0.0
      %3295 = vmatpush.msra.mxu0 0.0
      %3296 = vmatpush.msra.mxu0 0.0
      %3297 = vmatpush.msra.mxu0 0.0
      %3298 = vmatpush.msra.mxu0 0.0
      %3299 = vmatpush.msra.mxu0 0.0
      %3300 = vmatpush.msra.mxu0 0.0
      %3301 = vmatpush.msra.mxu0 %v3189
      %3302 = vmatmul.f32.gmra.mxu0 %v3191
      %v3303 = vpop.f32.mrf.mxu0
      %v3304 = vadd.f32 0.0, %v3303
      %3305 = vmatmul.f32.gmra.mxu0 %v3194
      %v3306 = vpop.f32.mrf.mxu0
      %v3307 = vadd.f32 0.0, %v3306
      %3308 = vmatmul.f32.gmra.mxu0 %v3197
      %v3309 = vpop.f32.mrf.mxu0
      %v3310 = vadd.f32 0.0, %v3309
      %3311 = vmatmul.f32.gmra.mxu0 %v3200
      %v3312 = vpop.f32.mrf.mxu0
      %v3313 = vadd.f32 0.0, %v3312
      %3314 = vmatmul.f32.gmra.mxu0 %v3203
      %v3315 = vpop.f32.mrf.mxu0
      %v3316 = vadd.f32 0.0, %v3315
      %3317 = vmatmul.f32.gmra.mxu0 %v3206
      %v3318 = vpop.f32.mrf.mxu0
      %v3319 = vadd.f32 0.0, %v3318
      %3320 = vmatmul.f32.gmra.mxu0 %v3209
      %v3321 = vpop.f32.mrf.mxu0
      %v3322 = vadd.f32 0.0, %v3321
      %3323 = vmatmul.f32.gmra.mxu0 %v3212
      %v3324 = vpop.f32.mrf.mxu0
      %v3325 = vadd.f32 0.0, %v3324
      %3326 = vmatmul.f32.gmra.mxu0 %v3215
      %v3327 = vpop.f32.mrf.mxu0
      %v3328 = vadd.f32 0.0, %v3327
      %3329 = vmatmul.f32.gmra.mxu0 %v3218
      %v3330 = vpop.f32.mrf.mxu0
      %v3331 = vadd.f32 0.0, %v3330
      %3332 = vmatmul.f32.gmra.mxu0 %v3221
      %v3333 = vpop.f32.mrf.mxu0
      %v3334 = vadd.f32 0.0, %v3333
      %3335 = vmatmul.f32.gmra.mxu0 %v3224
      %v3336 = vpop.f32.mrf.mxu0
      %v3337 = vadd.f32 0.0, %v3336
      %3338 = vmatmul.f32.gmra.mxu0 %v3227
      %v3339 = vpop.f32.mrf.mxu0
      %v3340 = vadd.f32 0.0, %v3339
      %3341 = vmatmul.f32.gmra.mxu0 %v3230
      %v3342 = vpop.f32.mrf.mxu0
      %v3343 = vadd.f32 0.0, %v3342
      %3344 = vmatmul.f32.gmra.mxu0 %v3233
      %v3345 = vpop.f32.mrf.mxu0
      %v3346 = vadd.f32 0.0, %v3345
      %3347 = vmatmul.f32.gmra.mxu0 %v3236
      %v3348 = vpop.f32.mrf.mxu0
      %v3349 = vadd.f32 0.0, %v3348
      %3350 = vmatmul.f32.gmra.mxu0 %v3239
      %v3351 = vpop.f32.mrf.mxu0
      %v3352 = vadd.f32 0.0, %v3351
      %3353 = vmatmul.f32.gmra.mxu0 %v3242
      %v3354 = vpop.f32.mrf.mxu0
      %v3355 = vadd.f32 0.0, %v3354
      %3356 = vmatmul.f32.gmra.mxu0 %v3245
      %v3357 = vpop.f32.mrf.mxu0
      %v3358 = vadd.f32 0.0, %v3357
      %3359 = vmatmul.f32.gmra.mxu0 %v3248
      %v3360 = vpop.f32.mrf.mxu0
      %v3361 = vadd.f32 0.0, %v3360
      %3362 = vmatmul.f32.gmra.mxu0 %v3251
      %v3363 = vpop.f32.mrf.mxu0
      %v3364 = vadd.f32 0.0, %v3363
      %3365 = vmatmul.f32.gmra.mxu0 %v3254
      %v3366 = vpop.f32.mrf.mxu0
      %v3367 = vadd.f32 0.0, %v3366
      %3368 = vmatmul.f32.gmra.mxu0 %v3257
      %v3369 = vpop.f32.mrf.mxu0
      %v3370 = vadd.f32 0.0, %v3369
      %3371 = vmatmul.f32.gmra.mxu0 %v3260
      %v3372 = vpop.f32.mrf.mxu0
      %v3373 = vadd.f32 0.0, %v3372
      %3374 = vmatmul.f32.gmra.mxu0 %v3263
      %v3375 = vpop.f32.mrf.mxu0
      %v3376 = vadd.f32 0.0, %v3375
      %3377 = vmatmul.f32.gmra.mxu0 %v3266
      %v3378 = vpop.f32.mrf.mxu0
      %v3379 = vadd.f32 0.0, %v3378
      %3380 = vmatmul.f32.gmra.mxu0 %v3269
      %v3381 = vpop.f32.mrf.mxu0
      %v3382 = vadd.f32 0.0, %v3381
      %3383 = vmatmul.f32.gmra.mxu0 %v3272
      %v3384 = vpop.f32.mrf.mxu0
      %v3385 = vadd.f32 0.0, %v3384
      %3386 = vmatmul.f32.gmra.mxu0 %v3275
      %v3387 = vpop.f32.mrf.mxu0
      %v3388 = vadd.f32 0.0, %v3387
      %3389 = vmatmul.f32.gmra.mxu0 %v3278
      %v3390 = vpop.f32.mrf.mxu0
      %v3391 = vadd.f32 0.0, %v3390
      %3392 = vmatmul.f32.gmra.mxu0 %v3281
      %v3393 = vpop.f32.mrf.mxu0
      %v3394 = vadd.f32 0.0, %v3393
      %3395 = vmatmul.f32.gmra.mxu0 %v3284
      %v3396 = vpop.f32.mrf.mxu0
      %v3397 = vadd.f32 0.0, %v3396
      %3398 = vdwg.mxu0
      %v3400 = vsel %vm2976, %v3123, 0
      %v3403 = vsel %vm2976, %v3124, 0
      %v3406 = vsel %vm2976, %v3125, 0
      %v3409 = vsel %vm2976, %v3126, 0
      %v3412 = vsel %vm2976, %v3127, 0
      %v3415 = vsel %vm2976, %v3128, 0
      %v3418 = vsel %vm2976, %v3129, 0
      %v3421 = vsel %vm2976, %v3130, 0
      %v3424 = vsel %vm2976, %v3131, 0
      %v3427 = vsel %vm2976, %v3132, 0
      %v3430 = vsel %vm2976, %v3133, 0
      %v3433 = vsel %vm2976, %v3134, 0
      %v3436 = vsel %vm2976, %v3135, 0
      %v3439 = vsel %vm2976, %v3136, 0
      %v3442 = vsel %vm2976, %v3137, 0
      %v3445 = vsel %vm2976, %v3138, 0
      %v3448 = vsel %vm2976, %v3139, 0
      %v3451 = vsel %vm2976, %v3140, 0
      %v3454 = vsel %vm2976, %v3141, 0
      %v3457 = vsel %vm2976, %v3142, 0
      %v3460 = vsel %vm2976, %v3143, 0
      %v3463 = vsel %vm2976, %v3144, 0
      %v3466 = vsel %vm2976, %v3145, 0
      %v3469 = vsel %vm2976, %v3146, 0
      %v3472 = vsel %vm2976, %v3147, 0
      %v3475 = vsel %vm2976, %v3148, 0
      %v3478 = vsel %vm2976, %v3149, 0
      %v3481 = vsel %vm2976, %v3150, 0
      %v3484 = vsel %vm2976, %v3151, 0
      %v3487 = vsel %vm2976, %v3152, 0
      %v3490 = vsel %vm2976, %v3153, 0
      %v3493 = vsel %vm2976, %v3154, 0
      %3495 = vmatpush.msra.mxu0 0.0
      %3496 = vmatpush.msra.mxu0 0.0
      %3497 = vmatpush.msra.mxu0 0.0
      %3498 = vmatpush.msra.mxu0 0.0
      %3499 = vmatpush.msra.mxu0 0.0
      %3500 = vmatpush.msra.mxu0 0.0
      %3501 = vmatpush.msra.mxu0 0.0
      %3502 = vmatpush.msra.mxu0 0.0
      %3503 = vmatpush.msra.mxu0 0.0
      %3504 = vmatpush.msra.mxu0 0.0
      %3505 = vmatpush.msra.mxu0 0.0
      %3506 = vmatpush.msra.mxu0 0.0
      %3507 = vmatpush.msra.mxu0 0.0
      %3508 = vmatpush.msra.mxu0 0.0
      %3509 = vmatpush.msra.mxu0 0.0
      %3510 = vmatpush.msra.mxu0 %v3155
      %3511 = vmatmul.f32.gmra.mxu0 %v3400
      %v3512 = vpop.f32.mrf.mxu0
      %v3513 = vadd.f32 %v3304, %v3512
      %3514 = vmatmul.f32.gmra.mxu0 %v3403
      %v3515 = vpop.f32.mrf.mxu0
      %v3516 = vadd.f32 %v3307, %v3515
      %3517 = vmatmul.f32.gmra.mxu0 %v3406
      %v3518 = vpop.f32.mrf.mxu0
      %v3519 = vadd.f32 %v3310, %v3518
      %3520 = vmatmul.f32.gmra.mxu0 %v3409
      %v3521 = vpop.f32.mrf.mxu0
      %v3522 = vadd.f32 %v3313, %v3521
      %3523 = vmatmul.f32.gmra.mxu0 %v3412
      %v3524 = vpop.f32.mrf.mxu0
      %v3525 = vadd.f32 %v3316, %v3524
      %3526 = vmatmul.f32.gmra.mxu0 %v3415
      %v3527 = vpop.f32.mrf.mxu0
      %v3528 = vadd.f32 %v3319, %v3527
      %3529 = vmatmul.f32.gmra.mxu0 %v3418
      %v3530 = vpop.f32.mrf.mxu0
      %v3531 = vadd.f32 %v3322, %v3530
      %3532 = vmatmul.f32.gmra.mxu0 %v3421
      %v3533 = vpop.f32.mrf.mxu0
      %v3534 = vadd.f32 %v3325, %v3533
      %3535 = vmatmul.f32.gmra.mxu0 %v3424
      %v3536 = vpop.f32.mrf.mxu0
      %v3537 = vadd.f32 %v3328, %v3536
      %3538 = vmatmul.f32.gmra.mxu0 %v3427
      %v3539 = vpop.f32.mrf.mxu0
      %v3540 = vadd.f32 %v3331, %v3539
      %3541 = vmatmul.f32.gmra.mxu0 %v3430
      %v3542 = vpop.f32.mrf.mxu0
      %v3543 = vadd.f32 %v3334, %v3542
      %3544 = vmatmul.f32.gmra.mxu0 %v3433
      %v3545 = vpop.f32.mrf.mxu0
      %v3546 = vadd.f32 %v3337, %v3545
      %3547 = vmatmul.f32.gmra.mxu0 %v3436
      %v3548 = vpop.f32.mrf.mxu0
      %v3549 = vadd.f32 %v3340, %v3548
      %3550 = vmatmul.f32.gmra.mxu0 %v3439
      %v3551 = vpop.f32.mrf.mxu0
      %v3552 = vadd.f32 %v3343, %v3551
      %3553 = vmatmul.f32.gmra.mxu0 %v3442
      %v3554 = vpop.f32.mrf.mxu0
      %v3555 = vadd.f32 %v3346, %v3554
      %3556 = vmatmul.f32.gmra.mxu0 %v3445
      %v3557 = vpop.f32.mrf.mxu0
      %v3558 = vadd.f32 %v3349, %v3557
      %3559 = vmatmul.f32.gmra.mxu0 %v3448
      %v3560 = vpop.f32.mrf.mxu0
      %v3561 = vadd.f32 %v3352, %v3560
      %3562 = vmatmul.f32.gmra.mxu0 %v3451
      %v3563 = vpop.f32.mrf.mxu0
      %v3564 = vadd.f32 %v3355, %v3563
      %3565 = vmatmul.f32.gmra.mxu0 %v3454
      %v3566 = vpop.f32.mrf.mxu0
      %v3567 = vadd.f32 %v3358, %v3566
      %3568 = vmatmul.f32.gmra.mxu0 %v3457
      %v3569 = vpop.f32.mrf.mxu0
      %v3570 = vadd.f32 %v3361, %v3569
      %3571 = vmatmul.f32.gmra.mxu0 %v3460
      %v3572 = vpop.f32.mrf.mxu0
      %v3573 = vadd.f32 %v3364, %v3572
      %3574 = vmatmul.f32.gmra.mxu0 %v3463
      %v3575 = vpop.f32.mrf.mxu0
      %v3576 = vadd.f32 %v3367, %v3575
      %3577 = vmatmul.f32.gmra.mxu0 %v3466
      %v3578 = vpop.f32.mrf.mxu0
      %v3579 = vadd.f32 %v3370, %v3578
      %3580 = vmatmul.f32.gmra.mxu0 %v3469
      %v3581 = vpop.f32.mrf.mxu0
      %v3582 = vadd.f32 %v3373, %v3581
      %3583 = vmatmul.f32.gmra.mxu0 %v3472
      %v3584 = vpop.f32.mrf.mxu0
      %v3585 = vadd.f32 %v3376, %v3584
      %3586 = vmatmul.f32.gmra.mxu0 %v3475
      %v3587 = vpop.f32.mrf.mxu0
      %v3588 = vadd.f32 %v3379, %v3587
      %3589 = vmatmul.f32.gmra.mxu0 %v3478
      %v3590 = vpop.f32.mrf.mxu0
      %v3591 = vadd.f32 %v3382, %v3590
      %3592 = vmatmul.f32.gmra.mxu0 %v3481
      %v3593 = vpop.f32.mrf.mxu0
      %v3594 = vadd.f32 %v3385, %v3593
      %3595 = vmatmul.f32.gmra.mxu0 %v3484
      %v3596 = vpop.f32.mrf.mxu0
      %v3597 = vadd.f32 %v3388, %v3596
      %3598 = vmatmul.f32.gmra.mxu0 %v3487
      %v3599 = vpop.f32.mrf.mxu0
      %v3600 = vadd.f32 %v3391, %v3599
      %3601 = vmatmul.f32.gmra.mxu0 %v3490
      %v3602 = vpop.f32.mrf.mxu0
      %v3603 = vadd.f32 %v3394, %v3602
      %3604 = vmatmul.f32.gmra.mxu0 %v3493
      %v3605 = vpop.f32.mrf.mxu0
      %v3606 = vadd.f32 %v3397, %v3605
      %3607 = vdwg.mxu0
      %v3608 = vld [vmem:[#allocation3 + $0x9] sm:$0xff]
      %v3609 = vld [vmem:[#allocation3 + $0x11] sm:$0xff]
      %v3610 = vld [vmem:[#allocation3 + $0x29] sm:$0xff]
      %v3611 = vld [vmem:[#allocation3 + $0x31] sm:$0xff]
      %v3612 = vld [vmem:[#allocation3 + $0x49] sm:$0xff]
      %v3613 = vld [vmem:[#allocation3 + $0x51] sm:$0xff]
      %v3614 = vld [vmem:[#allocation3 + $0x69] sm:$0xff]
      %v3615 = vld [vmem:[#allocation3 + $0x71] sm:$0xff]
      %v3616 = vld [vmem:[#allocation3 + $0x89] sm:$0xff]
      %v3617 = vld [vmem:[#allocation3 + $0x91] sm:$0xff]
      %v3618 = vld [vmem:[#allocation3 + $0xa9] sm:$0xff]
      %v3619 = vld [vmem:[#allocation3 + $0xb1] sm:$0xff]
      %v3620 = vld [vmem:[#allocation3 + $0xc9] sm:$0xff]
      %v3621 = vld [vmem:[#allocation3 + $0xd1] sm:$0xff]
      %v3622 = vld [vmem:[#allocation3 + $0xe9] sm:$0xff]
      %v3623 = vld [vmem:[#allocation3 + $0xf1] sm:$0xff]
      %v3624 = vld [vmem:[#allocation3 + $0x109] sm:$0xff]
      %v3625 = vld [vmem:[#allocation3 + $0x111] sm:$0xff]
      %v3626 = vld [vmem:[#allocation3 + $0x129] sm:$0xff]
      %v3627 = vld [vmem:[#allocation3 + $0x131] sm:$0xff]
      %v3628 = vld [vmem:[#allocation3 + $0x149] sm:$0xff]
      %v3629 = vld [vmem:[#allocation3 + $0x151] sm:$0xff]
      %v3630 = vld [vmem:[#allocation3 + $0x169] sm:$0xff]
      %v3631 = vld [vmem:[#allocation3 + $0x171] sm:$0xff]
      %v3632 = vld [vmem:[#allocation3 + $0x189] sm:$0xff]
      %v3633 = vld [vmem:[#allocation3 + $0x191] sm:$0xff]
      %v3634 = vld [vmem:[#allocation3 + $0x1a9] sm:$0xff]
      %v3635 = vld [vmem:[#allocation3 + $0x1b1] sm:$0xff]
      %v3636 = vld [vmem:[#allocation3 + $0x1c9] sm:$0xff]
      %v3637 = vld [vmem:[#allocation3 + $0x1d1] sm:$0xff]
      %v3638 = vld [vmem:[#allocation3 + $0x1e9] sm:$0xff]
      %v3639 = vld [vmem:[#allocation3 + $0x1f1] sm:$0xff]
      %s3640 = scalar_lea.vmem %s3, 16
      %v3641 = vld [vmem:[%s3640] sm:$0xff]
      %v3643 = vsel %vm2976, %v3608, 0
      %v3646 = vsel %vm2976, %v3609, 0
      %v3649 = vsel %vm2976, %v3610, 0
      %v3652 = vsel %vm2976, %v3611, 0
      %v3655 = vsel %vm2976, %v3612, 0
      %v3658 = vsel %vm2976, %v3613, 0
      %v3661 = vsel %vm2976, %v3614, 0
      %v3664 = vsel %vm2976, %v3615, 0
      %v3667 = vsel %vm2976, %v3616, 0
      %v3670 = vsel %vm2976, %v3617, 0
      %v3673 = vsel %vm2976, %v3618, 0
      %v3676 = vsel %vm2976, %v3619, 0
      %v3679 = vsel %vm2976, %v3620, 0
      %v3682 = vsel %vm2976, %v3621, 0
      %v3685 = vsel %vm2976, %v3622, 0
      %v3688 = vsel %vm2976, %v3623, 0
      %v3691 = vsel %vm2976, %v3624, 0
      %v3694 = vsel %vm2976, %v3625, 0
      %v3697 = vsel %vm2976, %v3626, 0
      %v3700 = vsel %vm2976, %v3627, 0
      %v3703 = vsel %vm2976, %v3628, 0
      %v3706 = vsel %vm2976, %v3629, 0
      %v3709 = vsel %vm2976, %v3630, 0
      %v3712 = vsel %vm2976, %v3631, 0
      %v3715 = vsel %vm2976, %v3632, 0
      %v3718 = vsel %vm2976, %v3633, 0
      %v3721 = vsel %vm2976, %v3634, 0
      %v3724 = vsel %vm2976, %v3635, 0
      %v3727 = vsel %vm2976, %v3636, 0
      %v3730 = vsel %vm2976, %v3637, 0
      %v3733 = vsel %vm2976, %v3638, 0
      %v3736 = vsel %vm2976, %v3639, 0
      %3738 = vmatpush.msra.mxu0 0.0
      %3739 = vmatpush.msra.mxu0 0.0
      %3740 = vmatpush.msra.mxu0 0.0
      %3741 = vmatpush.msra.mxu0 0.0
      %3742 = vmatpush.msra.mxu0 0.0
      %3743 = vmatpush.msra.mxu0 0.0
      %3744 = vmatpush.msra.mxu0 0.0
      %3745 = vmatpush.msra.mxu0 0.0
      %3746 = vmatpush.msra.mxu0 0.0
      %3747 = vmatpush.msra.mxu0 0.0
      %3748 = vmatpush.msra.mxu0 0.0
      %3749 = vmatpush.msra.mxu0 0.0
      %3750 = vmatpush.msra.mxu0 0.0
      %3751 = vmatpush.msra.mxu0 0.0
      %3752 = vmatpush.msra.mxu0 0.0
      %3753 = vmatpush.msra.mxu0 %v3641
      %3754 = vmatmul.f32.gmra.mxu0 %v3643
      %v3755 = vpop.f32.mrf.mxu0
      %v3756 = vadd.f32 0.0, %v3755
      %3757 = vmatmul.f32.gmra.mxu0 %v3646
      %v3758 = vpop.f32.mrf.mxu0
      %v3759 = vadd.f32 0.0, %v3758
      %3760 = vmatmul.f32.gmra.mxu0 %v3649
      %v3761 = vpop.f32.mrf.mxu0
      %v3762 = vadd.f32 0.0, %v3761
      %3763 = vmatmul.f32.gmra.mxu0 %v3652
      %v3764 = vpop.f32.mrf.mxu0
      %v3765 = vadd.f32 0.0, %v3764
      %3766 = vmatmul.f32.gmra.mxu0 %v3655
      %v3767 = vpop.f32.mrf.mxu0
      %v3768 = vadd.f32 0.0, %v3767
      %3769 = vmatmul.f32.gmra.mxu0 %v3658
      %v3770 = vpop.f32.mrf.mxu0
      %v3771 = vadd.f32 0.0, %v3770
      %3772 = vmatmul.f32.gmra.mxu0 %v3661
      %v3773 = vpop.f32.mrf.mxu0
      %v3774 = vadd.f32 0.0, %v3773
      %3775 = vmatmul.f32.gmra.mxu0 %v3664
      %v3776 = vpop.f32.mrf.mxu0
      %v3777 = vadd.f32 0.0, %v3776
      %3778 = vmatmul.f32.gmra.mxu0 %v3667
      %v3779 = vpop.f32.mrf.mxu0
      %v3780 = vadd.f32 0.0, %v3779
      %3781 = vmatmul.f32.gmra.mxu0 %v3670
      %v3782 = vpop.f32.mrf.mxu0
      %v3783 = vadd.f32 0.0, %v3782
      %3784 = vmatmul.f32.gmra.mxu0 %v3673
      %v3785 = vpop.f32.mrf.mxu0
      %v3786 = vadd.f32 0.0, %v3785
      %3787 = vmatmul.f32.gmra.mxu0 %v3676
      %v3788 = vpop.f32.mrf.mxu0
      %v3789 = vadd.f32 0.0, %v3788
      %3790 = vmatmul.f32.gmra.mxu0 %v3679
      %v3791 = vpop.f32.mrf.mxu0
      %v3792 = vadd.f32 0.0, %v3791
      %3793 = vmatmul.f32.gmra.mxu0 %v3682
      %v3794 = vpop.f32.mrf.mxu0
      %v3795 = vadd.f32 0.0, %v3794
      %3796 = vmatmul.f32.gmra.mxu0 %v3685
      %v3797 = vpop.f32.mrf.mxu0
      %v3798 = vadd.f32 0.0, %v3797
      %3799 = vmatmul.f32.gmra.mxu0 %v3688
      %v3800 = vpop.f32.mrf.mxu0
      %v3801 = vadd.f32 0.0, %v3800
      %3802 = vmatmul.f32.gmra.mxu0 %v3691
      %v3803 = vpop.f32.mrf.mxu0
      %v3804 = vadd.f32 0.0, %v3803
      %3805 = vmatmul.f32.gmra.mxu0 %v3694
      %v3806 = vpop.f32.mrf.mxu0
      %v3807 = vadd.f32 0.0, %v3806
      %3808 = vmatmul.f32.gmra.mxu0 %v3697
      %v3809 = vpop.f32.mrf.mxu0
      %v3810 = vadd.f32 0.0, %v3809
      %3811 = vmatmul.f32.gmra.mxu0 %v3700
      %v3812 = vpop.f32.mrf.mxu0
      %v3813 = vadd.f32 0.0, %v3812
      %3814 = vmatmul.f32.gmra.mxu0 %v3703
      %v3815 = vpop.f32.mrf.mxu0
      %v3816 = vadd.f32 0.0, %v3815
      %3817 = vmatmul.f32.gmra.mxu0 %v3706
      %v3818 = vpop.f32.mrf.mxu0
      %v3819 = vadd.f32 0.0, %v3818
      %3820 = vmatmul.f32.gmra.mxu0 %v3709
      %v3821 = vpop.f32.mrf.mxu0
      %v3822 = vadd.f32 0.0, %v3821
      %3823 = vmatmul.f32.gmra.mxu0 %v3712
      %v3824 = vpop.f32.mrf.mxu0
      %v3825 = vadd.f32 0.0, %v3824
      %3826 = vmatmul.f32.gmra.mxu0 %v3715
      %v3827 = vpop.f32.mrf.mxu0
      %v3828 = vadd.f32 0.0, %v3827
      %3829 = vmatmul.f32.gmra.mxu0 %v3718
      %v3830 = vpop.f32.mrf.mxu0
      %v3831 = vadd.f32 0.0, %v3830
      %3832 = vmatmul.f32.gmra.mxu0 %v3721
      %v3833 = vpop.f32.mrf.mxu0
      %v3834 = vadd.f32 0.0, %v3833
      %3835 = vmatmul.f32.gmra.mxu0 %v3724
      %v3836 = vpop.f32.mrf.mxu0
      %v3837 = vadd.f32 0.0, %v3836
      %3838 = vmatmul.f32.gmra.mxu0 %v3727
      %v3839 = vpop.f32.mrf.mxu0
      %v3840 = vadd.f32 0.0, %v3839
      %3841 = vmatmul.f32.gmra.mxu0 %v3730
      %v3842 = vpop.f32.mrf.mxu0
      %v3843 = vadd.f32 0.0, %v3842
      %3844 = vmatmul.f32.gmra.mxu0 %v3733
      %v3845 = vpop.f32.mrf.mxu0
      %v3846 = vadd.f32 0.0, %v3845
      %3847 = vmatmul.f32.gmra.mxu0 %v3736
      %v3848 = vpop.f32.mrf.mxu0
      %v3849 = vadd.f32 0.0, %v3848
      %3850 = vdwg.mxu0
      %v3851 = vadd.f32 %v3513, %v3756
      %v3852 = vadd.f32 %v3516, %v3759
      %v3853 = vadd.f32 %v3519, %v3762
      %v3854 = vadd.f32 %v3522, %v3765
      %v3855 = vadd.f32 %v3525, %v3768
      %v3856 = vadd.f32 %v3528, %v3771
      %v3857 = vadd.f32 %v3531, %v3774
      %v3858 = vadd.f32 %v3534, %v3777
      %v3859 = vadd.f32 %v3537, %v3780
      %v3860 = vadd.f32 %v3540, %v3783
      %v3861 = vadd.f32 %v3543, %v3786
      %v3862 = vadd.f32 %v3546, %v3789
      %v3863 = vadd.f32 %v3549, %v3792
      %v3864 = vadd.f32 %v3552, %v3795
      %v3865 = vadd.f32 %v3555, %v3798
      %v3866 = vadd.f32 %v3558, %v3801
      %v3867 = vadd.f32 %v3561, %v3804
      %v3868 = vadd.f32 %v3564, %v3807
      %v3869 = vadd.f32 %v3567, %v3810
      %v3870 = vadd.f32 %v3570, %v3813
      %v3871 = vadd.f32 %v3573, %v3816
      %v3872 = vadd.f32 %v3576, %v3819
      %v3873 = vadd.f32 %v3579, %v3822
      %v3874 = vadd.f32 %v3582, %v3825
      %v3875 = vadd.f32 %v3585, %v3828
      %v3876 = vadd.f32 %v3588, %v3831
      %v3877 = vadd.f32 %v3591, %v3834
      %v3878 = vadd.f32 %v3594, %v3837
      %v3879 = vadd.f32 %v3597, %v3840
      %v3880 = vadd.f32 %v3600, %v3843
      %v3881 = vadd.f32 %v3603, %v3846
      %v3882 = vadd.f32 %v3606, %v3849
      %v3883 = vld [vmem:[%s2975 + $0x7] sm:$0xff]
      %v3884 = vld [vmem:[%s2975 + $0xf] sm:$0xff]
      %v3885 = vld [vmem:[%s2975 + $0x27] sm:$0xff]
      %v3886 = vld [vmem:[%s2975 + $0x2f] sm:$0xff]
      %v3887 = vld [vmem:[%s2975 + $0x47] sm:$0xff]
      %v3888 = vld [vmem:[%s2975 + $0x4f] sm:$0xff]
      %v3889 = vld [vmem:[%s2975 + $0x67] sm:$0xff]
      %v3890 = vld [vmem:[%s2975 + $0x6f] sm:$0xff]
      %v3891 = vld [vmem:[%s2975 + $0x87] sm:$0xff]
      %v3892 = vld [vmem:[%s2975 + $0x8f] sm:$0xff]
      %v3893 = vld [vmem:[%s2975 + $0xa7] sm:$0xff]
      %v3894 = vld [vmem:[%s2975 + $0xaf] sm:$0xff]
      %v3895 = vld [vmem:[%s2975 + $0xc7] sm:$0xff]
      %v3896 = vld [vmem:[%s2975 + $0xcf] sm:$0xff]
      %v3897 = vld [vmem:[%s2975 + $0xe7] sm:$0xff]
      %v3898 = vld [vmem:[%s2975 + $0xef] sm:$0xff]
      %v3899 = vld [vmem:[%s2975 + $0x107] sm:$0xff]
      %v3900 = vld [vmem:[%s2975 + $0x10f] sm:$0xff]
      %v3901 = vld [vmem:[%s2975 + $0x127] sm:$0xff]
      %v3902 = vld [vmem:[%s2975 + $0x12f] sm:$0xff]
      %v3903 = vld [vmem:[%s2975 + $0x147] sm:$0xff]
      %v3904 = vld [vmem:[%s2975 + $0x14f] sm:$0xff]
      %v3905 = vld [vmem:[%s2975 + $0x167] sm:$0xff]
      %v3906 = vld [vmem:[%s2975 + $0x16f] sm:$0xff]
      %v3907 = vld [vmem:[%s2975 + $0x187] sm:$0xff]
      %v3908 = vld [vmem:[%s2975 + $0x18f] sm:$0xff]
      %v3909 = vld [vmem:[%s2975 + $0x1a7] sm:$0xff]
      %v3910 = vld [vmem:[%s2975 + $0x1af] sm:$0xff]
      %v3911 = vld [vmem:[%s2975 + $0x1c7] sm:$0xff]
      %v3912 = vld [vmem:[%s2975 + $0x1cf] sm:$0xff]
      %v3913 = vld [vmem:[%s2975 + $0x1e7] sm:$0xff]
      %v3914 = vld [vmem:[%s2975 + $0x1ef] sm:$0xff]
      %s3915 = scalar_lea.vmem %s3, 24
      %v3916 = vld [vmem:[%s3915] sm:$0xff]
      %v3918 = vsel %vm2976, %v3883, 0
      %v3921 = vsel %vm2976, %v3884, 0
      %v3924 = vsel %vm2976, %v3885, 0
      %v3927 = vsel %vm2976, %v3886, 0
      %v3930 = vsel %vm2976, %v3887, 0
      %v3933 = vsel %vm2976, %v3888, 0
      %v3936 = vsel %vm2976, %v3889, 0
      %v3939 = vsel %vm2976, %v3890, 0
      %v3942 = vsel %vm2976, %v3891, 0
      %v3945 = vsel %vm2976, %v3892, 0
      %v3948 = vsel %vm2976, %v3893, 0
      %v3951 = vsel %vm2976, %v3894, 0
      %v3954 = vsel %vm2976, %v3895, 0
      %v3957 = vsel %vm2976, %v3896, 0
      %v3960 = vsel %vm2976, %v3897, 0
      %v3963 = vsel %vm2976, %v3898, 0
      %v3966 = vsel %vm2976, %v3899, 0
      %v3969 = vsel %vm2976, %v3900, 0
      %v3972 = vsel %vm2976, %v3901, 0
      %v3975 = vsel %vm2976, %v3902, 0
      %v3978 = vsel %vm2976, %v3903, 0
      %v3981 = vsel %vm2976, %v3904, 0
      %v3984 = vsel %vm2976, %v3905, 0
      %v3987 = vsel %vm2976, %v3906, 0
      %v3990 = vsel %vm2976, %v3907, 0
      %v3993 = vsel %vm2976, %v3908, 0
      %v3996 = vsel %vm2976, %v3909, 0
      %v3999 = vsel %vm2976, %v3910, 0
      %v4002 = vsel %vm2976, %v3911, 0
      %v4005 = vsel %vm2976, %v3912, 0
      %v4008 = vsel %vm2976, %v3913, 0
      %v4011 = vsel %vm2976, %v3914, 0
      %4013 = vmatpush.msra.mxu0 0.0
      %4014 = vmatpush.msra.mxu0 0.0
      %4015 = vmatpush.msra.mxu0 0.0
      %4016 = vmatpush.msra.mxu0 0.0
      %4017 = vmatpush.msra.mxu0 0.0
      %4018 = vmatpush.msra.mxu0 0.0
      %4019 = vmatpush.msra.mxu0 0.0
      %4020 = vmatpush.msra.mxu0 0.0
      %4021 = vmatpush.msra.mxu0 0.0
      %4022 = vmatpush.msra.mxu0 0.0
      %4023 = vmatpush.msra.mxu0 0.0
      %4024 = vmatpush.msra.mxu0 0.0
      %4025 = vmatpush.msra.mxu0 0.0
      %4026 = vmatpush.msra.mxu0 0.0
      %4027 = vmatpush.msra.mxu0 0.0
      %4028 = vmatpush.msra.mxu0 %v3916
      %4029 = vmatmul.f32.gmra.mxu0 %v3918
      %v4030 = vpop.f32.mrf.mxu0
      %v4031 = vadd.f32 0.0, %v4030
      %4032 = vmatmul.f32.gmra.mxu0 %v3921
      %v4033 = vpop.f32.mrf.mxu0
      %v4034 = vadd.f32 0.0, %v4033
      %4035 = vmatmul.f32.gmra.mxu0 %v3924
      %v4036 = vpop.f32.mrf.mxu0
      %v4037 = vadd.f32 0.0, %v4036
      %4038 = vmatmul.f32.gmra.mxu0 %v3927
      %v4039 = vpop.f32.mrf.mxu0
      %v4040 = vadd.f32 0.0, %v4039
      %4041 = vmatmul.f32.gmra.mxu0 %v3930
      %v4042 = vpop.f32.mrf.mxu0
      %v4043 = vadd.f32 0.0, %v4042
      %4044 = vmatmul.f32.gmra.mxu0 %v3933
      %v4045 = vpop.f32.mrf.mxu0
      %v4046 = vadd.f32 0.0, %v4045
      %4047 = vmatmul.f32.gmra.mxu0 %v3936
      %v4048 = vpop.f32.mrf.mxu0
      %v4049 = vadd.f32 0.0, %v4048
      %4050 = vmatmul.f32.gmra.mxu0 %v3939
      %v4051 = vpop.f32.mrf.mxu0
      %v4052 = vadd.f32 0.0, %v4051
      %4053 = vmatmul.f32.gmra.mxu0 %v3942
      %v4054 = vpop.f32.mrf.mxu0
      %v4055 = vadd.f32 0.0, %v4054
      %4056 = vmatmul.f32.gmra.mxu0 %v3945
      %v4057 = vpop.f32.mrf.mxu0
      %v4058 = vadd.f32 0.0, %v4057
      %4059 = vmatmul.f32.gmra.mxu0 %v3948
      %v4060 = vpop.f32.mrf.mxu0
      %v4061 = vadd.f32 0.0, %v4060
      %4062 = vmatmul.f32.gmra.mxu0 %v3951
      %v4063 = vpop.f32.mrf.mxu0
      %v4064 = vadd.f32 0.0, %v4063
      %4065 = vmatmul.f32.gmra.mxu0 %v3954
      %v4066 = vpop.f32.mrf.mxu0
      %v4067 = vadd.f32 0.0, %v4066
      %4068 = vmatmul.f32.gmra.mxu0 %v3957
      %v4069 = vpop.f32.mrf.mxu0
      %v4070 = vadd.f32 0.0, %v4069
      %4071 = vmatmul.f32.gmra.mxu0 %v3960
      %v4072 = vpop.f32.mrf.mxu0
      %v4073 = vadd.f32 0.0, %v4072
      %4074 = vmatmul.f32.gmra.mxu0 %v3963
      %v4075 = vpop.f32.mrf.mxu0
      %v4076 = vadd.f32 0.0, %v4075
      %4077 = vmatmul.f32.gmra.mxu0 %v3966
      %v4078 = vpop.f32.mrf.mxu0
      %v4079 = vadd.f32 0.0, %v4078
      %4080 = vmatmul.f32.gmra.mxu0 %v3969
      %v4081 = vpop.f32.mrf.mxu0
      %v4082 = vadd.f32 0.0, %v4081
      %4083 = vmatmul.f32.gmra.mxu0 %v3972
      %v4084 = vpop.f32.mrf.mxu0
      %v4085 = vadd.f32 0.0, %v4084
      %4086 = vmatmul.f32.gmra.mxu0 %v3975
      %v4087 = vpop.f32.mrf.mxu0
      %v4088 = vadd.f32 0.0, %v4087
      %4089 = vmatmul.f32.gmra.mxu0 %v3978
      %v4090 = vpop.f32.mrf.mxu0
      %v4091 = vadd.f32 0.0, %v4090
      %4092 = vmatmul.f32.gmra.mxu0 %v3981
      %v4093 = vpop.f32.mrf.mxu0
      %v4094 = vadd.f32 0.0, %v4093
      %4095 = vmatmul.f32.gmra.mxu0 %v3984
      %v4096 = vpop.f32.mrf.mxu0
      %v4097 = vadd.f32 0.0, %v4096
      %4098 = vmatmul.f32.gmra.mxu0 %v3987
      %v4099 = vpop.f32.mrf.mxu0
      %v4100 = vadd.f32 0.0, %v4099
      %4101 = vmatmul.f32.gmra.mxu0 %v3990
      %v4102 = vpop.f32.mrf.mxu0
      %v4103 = vadd.f32 0.0, %v4102
      %4104 = vmatmul.f32.gmra.mxu0 %v3993
      %v4105 = vpop.f32.mrf.mxu0
      %v4106 = vadd.f32 0.0, %v4105
      %4107 = vmatmul.f32.gmra.mxu0 %v3996
      %v4108 = vpop.f32.mrf.mxu0
      %v4109 = vadd.f32 0.0, %v4108
      %4110 = vmatmul.f32.gmra.mxu0 %v3999
      %v4111 = vpop.f32.mrf.mxu0
      %v4112 = vadd.f32 0.0, %v4111
      %4113 = vmatmul.f32.gmra.mxu0 %v4002
      %v4114 = vpop.f32.mrf.mxu0
      %v4115 = vadd.f32 0.0, %v4114
      %4116 = vmatmul.f32.gmra.mxu0 %v4005
      %v4117 = vpop.f32.mrf.mxu0
      %v4118 = vadd.f32 0.0, %v4117
      %4119 = vmatmul.f32.gmra.mxu0 %v4008
      %v4120 = vpop.f32.mrf.mxu0
      %v4121 = vadd.f32 0.0, %v4120
      %4122 = vmatmul.f32.gmra.mxu0 %v4011
      %v4123 = vpop.f32.mrf.mxu0
      %v4124 = vadd.f32 0.0, %v4123
      %4125 = vdwg.mxu0
      %v4126 = vadd.f32 %v3851, %v4031
      %v4127 = vadd.f32 %v3852, %v4034
      %v4128 = vadd.f32 %v3853, %v4037
      %v4129 = vadd.f32 %v3854, %v4040
      %v4130 = vadd.f32 %v3855, %v4043
      %v4131 = vadd.f32 %v3856, %v4046
      %v4132 = vadd.f32 %v3857, %v4049
      %v4133 = vadd.f32 %v3858, %v4052
      %v4134 = vadd.f32 %v3859, %v4055
      %v4135 = vadd.f32 %v3860, %v4058
      %v4136 = vadd.f32 %v3861, %v4061
      %v4137 = vadd.f32 %v3862, %v4064
      %v4138 = vadd.f32 %v3863, %v4067
      %v4139 = vadd.f32 %v3864, %v4070
      %v4140 = vadd.f32 %v3865, %v4073
      %v4141 = vadd.f32 %v3866, %v4076
      %v4142 = vadd.f32 %v3867, %v4079
      %v4143 = vadd.f32 %v3868, %v4082
      %v4144 = vadd.f32 %v3869, %v4085
      %v4145 = vadd.f32 %v3870, %v4088
      %v4146 = vadd.f32 %v3871, %v4091
      %v4147 = vadd.f32 %v3872, %v4094
      %v4148 = vadd.f32 %v3873, %v4097
      %v4149 = vadd.f32 %v3874, %v4100
      %v4150 = vadd.f32 %v3875, %v4103
      %v4151 = vadd.f32 %v3876, %v4106
      %v4152 = vadd.f32 %v3877, %v4109
      %v4153 = vadd.f32 %v3878, %v4112
      %v4154 = vadd.f32 %v3879, %v4115
      %v4155 = vadd.f32 %v3880, %v4118
      %v4156 = vadd.f32 %v3881, %v4121
      %v4157 = vadd.f32 %v3882, %v4124
      %v4158 = vld [vmem:[%s2975 + $0x8] sm:$0xff]
      %v4159 = vld [vmem:[%s2975 + $0x10] sm:$0xff]
      %v4160 = vld [vmem:[%s2975 + $0x28] sm:$0xff]
      %v4161 = vld [vmem:[%s2975 + $0x30] sm:$0xff]
      %v4162 = vld [vmem:[%s2975 + $0x48] sm:$0xff]
      %v4163 = vld [vmem:[%s2975 + $0x50] sm:$0xff]
      %v4164 = vld [vmem:[%s2975 + $0x68] sm:$0xff]
      %v4165 = vld [vmem:[%s2975 + $0x70] sm:$0xff]
      %v4166 = vld [vmem:[%s2975 + $0x88] sm:$0xff]
      %v4167 = vld [vmem:[%s2975 + $0x90] sm:$0xff]
      %v4168 = vld [vmem:[%s2975 + $0xa8] sm:$0xff]
      %v4169 = vld [vmem:[%s2975 + $0xb0] sm:$0xff]
      %v4170 = vld [vmem:[%s2975 + $0xc8] sm:$0xff]
      %v4171 = vld [vmem:[%s2975 + $0xd0] sm:$0xff]
      %v4172 = vld [vmem:[%s2975 + $0xe8] sm:$0xff]
      %v4173 = vld [vmem:[%s2975 + $0xf0] sm:$0xff]
      %v4174 = vld [vmem:[%s2975 + $0x108] sm:$0xff]
      %v4175 = vld [vmem:[%s2975 + $0x110] sm:$0xff]
      %v4176 = vld [vmem:[%s2975 + $0x128] sm:$0xff]
      %v4177 = vld [vmem:[%s2975 + $0x130] sm:$0xff]
      %v4178 = vld [vmem:[%s2975 + $0x148] sm:$0xff]
      %v4179 = vld [vmem:[%s2975 + $0x150] sm:$0xff]
      %v4180 = vld [vmem:[%s2975 + $0x168] sm:$0xff]
      %v4181 = vld [vmem:[%s2975 + $0x170] sm:$0xff]
      %v4182 = vld [vmem:[%s2975 + $0x188] sm:$0xff]
      %v4183 = vld [vmem:[%s2975 + $0x190] sm:$0xff]
      %v4184 = vld [vmem:[%s2975 + $0x1a8] sm:$0xff]
      %v4185 = vld [vmem:[%s2975 + $0x1b0] sm:$0xff]
      %v4186 = vld [vmem:[%s2975 + $0x1c8] sm:$0xff]
      %v4187 = vld [vmem:[%s2975 + $0x1d0] sm:$0xff]
      %v4188 = vld [vmem:[%s2975 + $0x1e8] sm:$0xff]
      %v4189 = vld [vmem:[%s2975 + $0x1f0] sm:$0xff]
      %s4190 = scalar_lea.vmem %s3, 32
      %v4191 = vld [vmem:[%s4190] sm:$0xff]
      %v4193 = vsel %vm2976, %v4158, 0
      %v4196 = vsel %vm2976, %v4159, 0
      %v4199 = vsel %vm2976, %v4160, 0
      %v4202 = vsel %vm2976, %v4161, 0
      %v4205 = vsel %vm2976, %v4162, 0
      %v4208 = vsel %vm2976, %v4163, 0
      %v4211 = vsel %vm2976, %v4164, 0
      %v4214 = vsel %vm2976, %v4165, 0
      %v4217 = vsel %vm2976, %v4166, 0
      %v4220 = vsel %vm2976, %v4167, 0
      %v4223 = vsel %vm2976, %v4168, 0
      %v4226 = vsel %vm2976, %v4169, 0
      %v4229 = vsel %vm2976, %v4170, 0
      %v4232 = vsel %vm2976, %v4171, 0
      %v4235 = vsel %vm2976, %v4172, 0
      %v4238 = vsel %vm2976, %v4173, 0
      %v4241 = vsel %vm2976, %v4174, 0
      %v4244 = vsel %vm2976, %v4175, 0
      %v4247 = vsel %vm2976, %v4176, 0
      %v4250 = vsel %vm2976, %v4177, 0
      %v4253 = vsel %vm2976, %v4178, 0
      %v4256 = vsel %vm2976, %v4179, 0
      %v4259 = vsel %vm2976, %v4180, 0
      %v4262 = vsel %vm2976, %v4181, 0
      %v4265 = vsel %vm2976, %v4182, 0
      %v4268 = vsel %vm2976, %v4183, 0
      %v4271 = vsel %vm2976, %v4184, 0
      %v4274 = vsel %vm2976, %v4185, 0
      %v4277 = vsel %vm2976, %v4186, 0
      %v4280 = vsel %vm2976, %v4187, 0
      %v4283 = vsel %vm2976, %v4188, 0
      %v4286 = vsel %vm2976, %v4189, 0
      %4288 = vmatpush.msra.mxu0 0.0
      %4289 = vmatpush.msra.mxu0 0.0
      %4290 = vmatpush.msra.mxu0 0.0
      %4291 = vmatpush.msra.mxu0 0.0
      %4292 = vmatpush.msra.mxu0 0.0
      %4293 = vmatpush.msra.mxu0 0.0
      %4294 = vmatpush.msra.mxu0 0.0
      %4295 = vmatpush.msra.mxu0 0.0
      %4296 = vmatpush.msra.mxu0 0.0
      %4297 = vmatpush.msra.mxu0 0.0
      %4298 = vmatpush.msra.mxu0 0.0
      %4299 = vmatpush.msra.mxu0 0.0
      %4300 = vmatpush.msra.mxu0 0.0
      %4301 = vmatpush.msra.mxu0 0.0
      %4302 = vmatpush.msra.mxu0 0.0
      %4303 = vmatpush.msra.mxu0 %v4191
      %4304 = vmatmul.f32.gmra.mxu0 %v4193
      %v4305 = vpop.f32.mrf.mxu0
      %v4306 = vadd.f32 0.0, %v4305
      %4307 = vmatmul.f32.gmra.mxu0 %v4196
      %v4308 = vpop.f32.mrf.mxu0
      %v4309 = vadd.f32 0.0, %v4308
      %4310 = vmatmul.f32.gmra.mxu0 %v4199
      %v4311 = vpop.f32.mrf.mxu0
      %v4312 = vadd.f32 0.0, %v4311
      %4313 = vmatmul.f32.gmra.mxu0 %v4202
      %v4314 = vpop.f32.mrf.mxu0
      %v4315 = vadd.f32 0.0, %v4314
      %4316 = vmatmul.f32.gmra.mxu0 %v4205
      %v4317 = vpop.f32.mrf.mxu0
      %v4318 = vadd.f32 0.0, %v4317
      %4319 = vmatmul.f32.gmra.mxu0 %v4208
      %v4320 = vpop.f32.mrf.mxu0
      %v4321 = vadd.f32 0.0, %v4320
      %4322 = vmatmul.f32.gmra.mxu0 %v4211
      %v4323 = vpop.f32.mrf.mxu0
      %v4324 = vadd.f32 0.0, %v4323
      %4325 = vmatmul.f32.gmra.mxu0 %v4214
      %v4326 = vpop.f32.mrf.mxu0
      %v4327 = vadd.f32 0.0, %v4326
      %4328 = vmatmul.f32.gmra.mxu0 %v4217
      %v4329 = vpop.f32.mrf.mxu0
      %v4330 = vadd.f32 0.0, %v4329
      %4331 = vmatmul.f32.gmra.mxu0 %v4220
      %v4332 = vpop.f32.mrf.mxu0
      %v4333 = vadd.f32 0.0, %v4332
      %4334 = vmatmul.f32.gmra.mxu0 %v4223
      %v4335 = vpop.f32.mrf.mxu0
      %v4336 = vadd.f32 0.0, %v4335
      %4337 = vmatmul.f32.gmra.mxu0 %v4226
      %v4338 = vpop.f32.mrf.mxu0
      %v4339 = vadd.f32 0.0, %v4338
      %4340 = vmatmul.f32.gmra.mxu0 %v4229
      %v4341 = vpop.f32.mrf.mxu0
      %v4342 = vadd.f32 0.0, %v4341
      %4343 = vmatmul.f32.gmra.mxu0 %v4232
      %v4344 = vpop.f32.mrf.mxu0
      %v4345 = vadd.f32 0.0, %v4344
      %4346 = vmatmul.f32.gmra.mxu0 %v4235
      %v4347 = vpop.f32.mrf.mxu0
      %v4348 = vadd.f32 0.0, %v4347
      %4349 = vmatmul.f32.gmra.mxu0 %v4238
      %v4350 = vpop.f32.mrf.mxu0
      %v4351 = vadd.f32 0.0, %v4350
      %4352 = vmatmul.f32.gmra.mxu0 %v4241
      %v4353 = vpop.f32.mrf.mxu0
      %v4354 = vadd.f32 0.0, %v4353
      %4355 = vmatmul.f32.gmra.mxu0 %v4244
      %v4356 = vpop.f32.mrf.mxu0
      %v4357 = vadd.f32 0.0, %v4356
      %4358 = vmatmul.f32.gmra.mxu0 %v4247
      %v4359 = vpop.f32.mrf.mxu0
      %v4360 = vadd.f32 0.0, %v4359
      %4361 = vmatmul.f32.gmra.mxu0 %v4250
      %v4362 = vpop.f32.mrf.mxu0
      %v4363 = vadd.f32 0.0, %v4362
      %4364 = vmatmul.f32.gmra.mxu0 %v4253
      %v4365 = vpop.f32.mrf.mxu0
      %v4366 = vadd.f32 0.0, %v4365
      %4367 = vmatmul.f32.gmra.mxu0 %v4256
      %v4368 = vpop.f32.mrf.mxu0
      %v4369 = vadd.f32 0.0, %v4368
      %4370 = vmatmul.f32.gmra.mxu0 %v4259
      %v4371 = vpop.f32.mrf.mxu0
      %v4372 = vadd.f32 0.0, %v4371
      %4373 = vmatmul.f32.gmra.mxu0 %v4262
      %v4374 = vpop.f32.mrf.mxu0
      %v4375 = vadd.f32 0.0, %v4374
      %4376 = vmatmul.f32.gmra.mxu0 %v4265
      %v4377 = vpop.f32.mrf.mxu0
      %v4378 = vadd.f32 0.0, %v4377
      %4379 = vmatmul.f32.gmra.mxu0 %v4268
      %v4380 = vpop.f32.mrf.mxu0
      %v4381 = vadd.f32 0.0, %v4380
      %4382 = vmatmul.f32.gmra.mxu0 %v4271
      %v4383 = vpop.f32.mrf.mxu0
      %v4384 = vadd.f32 0.0, %v4383
      %4385 = vmatmul.f32.gmra.mxu0 %v4274
      %v4386 = vpop.f32.mrf.mxu0
      %v4387 = vadd.f32 0.0, %v4386
      %4388 = vmatmul.f32.gmra.mxu0 %v4277
      %v4389 = vpop.f32.mrf.mxu0
      %v4390 = vadd.f32 0.0, %v4389
      %4391 = vmatmul.f32.gmra.mxu0 %v4280
      %v4392 = vpop.f32.mrf.mxu0
      %v4393 = vadd.f32 0.0, %v4392
      %4394 = vmatmul.f32.gmra.mxu0 %v4283
      %v4395 = vpop.f32.mrf.mxu0
      %v4396 = vadd.f32 0.0, %v4395
      %4397 = vmatmul.f32.gmra.mxu0 %v4286
      %v4398 = vpop.f32.mrf.mxu0
      %v4399 = vadd.f32 0.0, %v4398
      %4400 = vdwg.mxu0
      %v4401 = vadd.f32 %v4126, %v4306
      %v4402 = vadd.f32 %v4127, %v4309
      %v4403 = vadd.f32 %v4128, %v4312
      %v4404 = vadd.f32 %v4129, %v4315
      %v4405 = vadd.f32 %v4130, %v4318
      %v4406 = vadd.f32 %v4131, %v4321
      %v4407 = vadd.f32 %v4132, %v4324
      %v4408 = vadd.f32 %v4133, %v4327
      %v4409 = vadd.f32 %v4134, %v4330
      %v4410 = vadd.f32 %v4135, %v4333
      %v4411 = vadd.f32 %v4136, %v4336
      %v4412 = vadd.f32 %v4137, %v4339
      %v4413 = vadd.f32 %v4138, %v4342
      %v4414 = vadd.f32 %v4139, %v4345
      %v4415 = vadd.f32 %v4140, %v4348
      %v4416 = vadd.f32 %v4141, %v4351
      %v4417 = vadd.f32 %v4142, %v4354
      %v4418 = vadd.f32 %v4143, %v4357
      %v4419 = vadd.f32 %v4144, %v4360
      %v4420 = vadd.f32 %v4145, %v4363
      %v4421 = vadd.f32 %v4146, %v4366
      %v4422 = vadd.f32 %v4147, %v4369
      %v4423 = vadd.f32 %v4148, %v4372
      %v4424 = vadd.f32 %v4149, %v4375
      %v4425 = vadd.f32 %v4150, %v4378
      %v4426 = vadd.f32 %v4151, %v4381
      %v4427 = vadd.f32 %v4152, %v4384
      %v4428 = vadd.f32 %v4153, %v4387
      %v4429 = vadd.f32 %v4154, %v4390
      %v4430 = vadd.f32 %v4155, %v4393
      %v4431 = vadd.f32 %v4156, %v4396
      %v4432 = vadd.f32 %v4157, %v4399
      %v4433 = vld [vmem:[%s2975 + $0x9] sm:$0xff]
      %v4434 = vld [vmem:[%s2975 + $0x11] sm:$0xff]
      %v4435 = vld [vmem:[%s2975 + $0x29] sm:$0xff]
      %v4436 = vld [vmem:[%s2975 + $0x31] sm:$0xff]
      %v4437 = vld [vmem:[%s2975 + $0x49] sm:$0xff]
      %v4438 = vld [vmem:[%s2975 + $0x51] sm:$0xff]
      %v4439 = vld [vmem:[%s2975 + $0x69] sm:$0xff]
      %v4440 = vld [vmem:[%s2975 + $0x71] sm:$0xff]
      %v4441 = vld [vmem:[%s2975 + $0x89] sm:$0xff]
      %v4442 = vld [vmem:[%s2975 + $0x91] sm:$0xff]
      %v4443 = vld [vmem:[%s2975 + $0xa9] sm:$0xff]
      %v4444 = vld [vmem:[%s2975 + $0xb1] sm:$0xff]
      %v4445 = vld [vmem:[%s2975 + $0xc9] sm:$0xff]
      %v4446 = vld [vmem:[%s2975 + $0xd1] sm:$0xff]
      %v4447 = vld [vmem:[%s2975 + $0xe9] sm:$0xff]
      %v4448 = vld [vmem:[%s2975 + $0xf1] sm:$0xff]
      %v4449 = vld [vmem:[%s2975 + $0x109] sm:$0xff]
      %v4450 = vld [vmem:[%s2975 + $0x111] sm:$0xff]
      %v4451 = vld [vmem:[%s2975 + $0x129] sm:$0xff]
      %v4452 = vld [vmem:[%s2975 + $0x131] sm:$0xff]
      %v4453 = vld [vmem:[%s2975 + $0x149] sm:$0xff]
      %v4454 = vld [vmem:[%s2975 + $0x151] sm:$0xff]
      %v4455 = vld [vmem:[%s2975 + $0x169] sm:$0xff]
      %v4456 = vld [vmem:[%s2975 + $0x171] sm:$0xff]
      %v4457 = vld [vmem:[%s2975 + $0x189] sm:$0xff]
      %v4458 = vld [vmem:[%s2975 + $0x191] sm:$0xff]
      %v4459 = vld [vmem:[%s2975 + $0x1a9] sm:$0xff]
      %v4460 = vld [vmem:[%s2975 + $0x1b1] sm:$0xff]
      %v4461 = vld [vmem:[%s2975 + $0x1c9] sm:$0xff]
      %v4462 = vld [vmem:[%s2975 + $0x1d1] sm:$0xff]
      %v4463 = vld [vmem:[%s2975 + $0x1e9] sm:$0xff]
      %v4464 = vld [vmem:[%s2975 + $0x1f1] sm:$0xff]
      %s4465 = scalar_lea.vmem %s3, 40
      %v4466 = vld [vmem:[%s4465] sm:$0xff]
      %v4468 = vsel %vm2976, %v4433, 0
      %v4471 = vsel %vm2976, %v4434, 0
      %v4474 = vsel %vm2976, %v4435, 0
      %v4477 = vsel %vm2976, %v4436, 0
      %v4480 = vsel %vm2976, %v4437, 0
      %v4483 = vsel %vm2976, %v4438, 0
      %v4486 = vsel %vm2976, %v4439, 0
      %v4489 = vsel %vm2976, %v4440, 0
      %v4492 = vsel %vm2976, %v4441, 0
      %v4495 = vsel %vm2976, %v4442, 0
      %v4498 = vsel %vm2976, %v4443, 0
      %v4501 = vsel %vm2976, %v4444, 0
      %v4504 = vsel %vm2976, %v4445, 0
      %v4507 = vsel %vm2976, %v4446, 0
      %v4510 = vsel %vm2976, %v4447, 0
      %v4513 = vsel %vm2976, %v4448, 0
      %v4516 = vsel %vm2976, %v4449, 0
      %v4519 = vsel %vm2976, %v4450, 0
      %v4522 = vsel %vm2976, %v4451, 0
      %v4525 = vsel %vm2976, %v4452, 0
      %v4528 = vsel %vm2976, %v4453, 0
      %v4531 = vsel %vm2976, %v4454, 0
      %v4534 = vsel %vm2976, %v4455, 0
      %v4537 = vsel %vm2976, %v4456, 0
      %v4540 = vsel %vm2976, %v4457, 0
      %v4543 = vsel %vm2976, %v4458, 0
      %v4546 = vsel %vm2976, %v4459, 0
      %v4549 = vsel %vm2976, %v4460, 0
      %v4552 = vsel %vm2976, %v4461, 0
      %v4555 = vsel %vm2976, %v4462, 0
      %v4558 = vsel %vm2976, %v4463, 0
      %v4561 = vsel %vm2976, %v4464, 0
      %4563 = vmatpush.msra.mxu0 0.0
      %4564 = vmatpush.msra.mxu0 0.0
      %4565 = vmatpush.msra.mxu0 0.0
      %4566 = vmatpush.msra.mxu0 0.0
      %4567 = vmatpush.msra.mxu0 0.0
      %4568 = vmatpush.msra.mxu0 0.0
      %4569 = vmatpush.msra.mxu0 0.0
      %4570 = vmatpush.msra.mxu0 0.0
      %4571 = vmatpush.msra.mxu0 0.0
      %4572 = vmatpush.msra.mxu0 0.0
      %4573 = vmatpush.msra.mxu0 0.0
      %4574 = vmatpush.msra.mxu0 0.0
      %4575 = vmatpush.msra.mxu0 0.0
      %4576 = vmatpush.msra.mxu0 0.0
      %4577 = vmatpush.msra.mxu0 0.0
      %4578 = vmatpush.msra.mxu0 %v4466
      %4579 = vmatmul.f32.gmra.mxu0 %v4468
      %v4580 = vpop.f32.mrf.mxu0
      %v4581 = vadd.f32 0.0, %v4580
      %4582 = vmatmul.f32.gmra.mxu0 %v4471
      %v4583 = vpop.f32.mrf.mxu0
      %v4584 = vadd.f32 0.0, %v4583
      %4585 = vmatmul.f32.gmra.mxu0 %v4474
      %v4586 = vpop.f32.mrf.mxu0
      %v4587 = vadd.f32 0.0, %v4586
      %4588 = vmatmul.f32.gmra.mxu0 %v4477
      %v4589 = vpop.f32.mrf.mxu0
      %v4590 = vadd.f32 0.0, %v4589
      %4591 = vmatmul.f32.gmra.mxu0 %v4480
      %v4592 = vpop.f32.mrf.mxu0
      %v4593 = vadd.f32 0.0, %v4592
      %4594 = vmatmul.f32.gmra.mxu0 %v4483
      %v4595 = vpop.f32.mrf.mxu0
      %v4596 = vadd.f32 0.0, %v4595
      %4597 = vmatmul.f32.gmra.mxu0 %v4486
      %v4598 = vpop.f32.mrf.mxu0
      %v4599 = vadd.f32 0.0, %v4598
      %4600 = vmatmul.f32.gmra.mxu0 %v4489
      %v4601 = vpop.f32.mrf.mxu0
      %v4602 = vadd.f32 0.0, %v4601
      %4603 = vmatmul.f32.gmra.mxu0 %v4492
      %v4604 = vpop.f32.mrf.mxu0
      %v4605 = vadd.f32 0.0, %v4604
      %4606 = vmatmul.f32.gmra.mxu0 %v4495
      %v4607 = vpop.f32.mrf.mxu0
      %v4608 = vadd.f32 0.0, %v4607
      %4609 = vmatmul.f32.gmra.mxu0 %v4498
      %v4610 = vpop.f32.mrf.mxu0
      %v4611 = vadd.f32 0.0, %v4610
      %4612 = vmatmul.f32.gmra.mxu0 %v4501
      %v4613 = vpop.f32.mrf.mxu0
      %v4614 = vadd.f32 0.0, %v4613
      %4615 = vmatmul.f32.gmra.mxu0 %v4504
      %v4616 = vpop.f32.mrf.mxu0
      %v4617 = vadd.f32 0.0, %v4616
      %4618 = vmatmul.f32.gmra.mxu0 %v4507
      %v4619 = vpop.f32.mrf.mxu0
      %v4620 = vadd.f32 0.0, %v4619
      %4621 = vmatmul.f32.gmra.mxu0 %v4510
      %v4622 = vpop.f32.mrf.mxu0
      %v4623 = vadd.f32 0.0, %v4622
      %4624 = vmatmul.f32.gmra.mxu0 %v4513
      %v4625 = vpop.f32.mrf.mxu0
      %v4626 = vadd.f32 0.0, %v4625
      %4627 = vmatmul.f32.gmra.mxu0 %v4516
      %v4628 = vpop.f32.mrf.mxu0
      %v4629 = vadd.f32 0.0, %v4628
      %4630 = vmatmul.f32.gmra.mxu0 %v4519
      %v4631 = vpop.f32.mrf.mxu0
      %v4632 = vadd.f32 0.0, %v4631
      %4633 = vmatmul.f32.gmra.mxu0 %v4522
      %v4634 = vpop.f32.mrf.mxu0
      %v4635 = vadd.f32 0.0, %v4634
      %4636 = vmatmul.f32.gmra.mxu0 %v4525
      %v4637 = vpop.f32.mrf.mxu0
      %v4638 = vadd.f32 0.0, %v4637
      %4639 = vmatmul.f32.gmra.mxu0 %v4528
      %v4640 = vpop.f32.mrf.mxu0
      %v4641 = vadd.f32 0.0, %v4640
      %4642 = vmatmul.f32.gmra.mxu0 %v4531
      %v4643 = vpop.f32.mrf.mxu0
      %v4644 = vadd.f32 0.0, %v4643
      %4645 = vmatmul.f32.gmra.mxu0 %v4534
      %v4646 = vpop.f32.mrf.mxu0
      %v4647 = vadd.f32 0.0, %v4646
      %4648 = vmatmul.f32.gmra.mxu0 %v4537
      %v4649 = vpop.f32.mrf.mxu0
      %v4650 = vadd.f32 0.0, %v4649
      %4651 = vmatmul.f32.gmra.mxu0 %v4540
      %v4652 = vpop.f32.mrf.mxu0
      %v4653 = vadd.f32 0.0, %v4652
      %4654 = vmatmul.f32.gmra.mxu0 %v4543
      %v4655 = vpop.f32.mrf.mxu0
      %v4656 = vadd.f32 0.0, %v4655
      %4657 = vmatmul.f32.gmra.mxu0 %v4546
      %v4658 = vpop.f32.mrf.mxu0
      %v4659 = vadd.f32 0.0, %v4658
      %4660 = vmatmul.f32.gmra.mxu0 %v4549
      %v4661 = vpop.f32.mrf.mxu0
      %v4662 = vadd.f32 0.0, %v4661
      %4663 = vmatmul.f32.gmra.mxu0 %v4552
      %v4664 = vpop.f32.mrf.mxu0
      %v4665 = vadd.f32 0.0, %v4664
      %4666 = vmatmul.f32.gmra.mxu0 %v4555
      %v4667 = vpop.f32.mrf.mxu0
      %v4668 = vadd.f32 0.0, %v4667
      %4669 = vmatmul.f32.gmra.mxu0 %v4558
      %v4670 = vpop.f32.mrf.mxu0
      %v4671 = vadd.f32 0.0, %v4670
      %4672 = vmatmul.f32.gmra.mxu0 %v4561
      %v4673 = vpop.f32.mrf.mxu0
      %v4674 = vadd.f32 0.0, %v4673
      %4675 = vdwg.mxu0
      %v4676 = vadd.f32 %v4401, %v4581
      %v4677 = vadd.f32 %v4402, %v4584
      %v4678 = vadd.f32 %v4403, %v4587
      %v4679 = vadd.f32 %v4404, %v4590
      %v4680 = vadd.f32 %v4405, %v4593
      %v4681 = vadd.f32 %v4406, %v4596
      %v4682 = vadd.f32 %v4407, %v4599
      %v4683 = vadd.f32 %v4408, %v4602
      %v4684 = vadd.f32 %v4409, %v4605
      %v4685 = vadd.f32 %v4410, %v4608
      %v4686 = vadd.f32 %v4411, %v4611
      %v4687 = vadd.f32 %v4412, %v4614
      %v4688 = vadd.f32 %v4413, %v4617
      %v4689 = vadd.f32 %v4414, %v4620
      %v4690 = vadd.f32 %v4415, %v4623
      %v4691 = vadd.f32 %v4416, %v4626
      %v4692 = vadd.f32 %v4417, %v4629
      %v4693 = vadd.f32 %v4418, %v4632
      %v4694 = vadd.f32 %v4419, %v4635
      %v4695 = vadd.f32 %v4420, %v4638
      %v4696 = vadd.f32 %v4421, %v4641
      %v4697 = vadd.f32 %v4422, %v4644
      %v4698 = vadd.f32 %v4423, %v4647
      %v4699 = vadd.f32 %v4424, %v4650
      %v4700 = vadd.f32 %v4425, %v4653
      %v4701 = vadd.f32 %v4426, %v4656
      %v4702 = vadd.f32 %v4427, %v4659
      %v4703 = vadd.f32 %v4428, %v4662
      %v4704 = vadd.f32 %v4429, %v4665
      %v4705 = vadd.f32 %v4430, %v4668
      %v4706 = vadd.f32 %v4431, %v4671
      %v4707 = vadd.f32 %v4432, %v4674
      %s4708 = scalar_lea.vmem [#allocation3], 64
      %v4709 = vld [vmem:[%s4708 + $0x7] sm:$0xff]
      %v4710 = vld [vmem:[%s4708 + $0xf] sm:$0xff]
      %v4711 = vld [vmem:[%s4708 + $0x27] sm:$0xff]
      %v4712 = vld [vmem:[%s4708 + $0x2f] sm:$0xff]
      %v4713 = vld [vmem:[%s4708 + $0x47] sm:$0xff]
      %v4714 = vld [vmem:[%s4708 + $0x4f] sm:$0xff]
      %v4715 = vld [vmem:[%s4708 + $0x67] sm:$0xff]
      %v4716 = vld [vmem:[%s4708 + $0x6f] sm:$0xff]
      %v4717 = vld [vmem:[%s4708 + $0x87] sm:$0xff]
      %v4718 = vld [vmem:[%s4708 + $0x8f] sm:$0xff]
      %v4719 = vld [vmem:[%s4708 + $0xa7] sm:$0xff]
      %v4720 = vld [vmem:[%s4708 + $0xaf] sm:$0xff]
      %v4721 = vld [vmem:[%s4708 + $0xc7] sm:$0xff]
      %v4722 = vld [vmem:[%s4708 + $0xcf] sm:$0xff]
      %v4723 = vld [vmem:[%s4708 + $0xe7] sm:$0xff]
      %v4724 = vld [vmem:[%s4708 + $0xef] sm:$0xff]
      %v4725 = vld [vmem:[%s4708 + $0x107] sm:$0xff]
      %v4726 = vld [vmem:[%s4708 + $0x10f] sm:$0xff]
      %v4727 = vld [vmem:[%s4708 + $0x127] sm:$0xff]
      %v4728 = vld [vmem:[%s4708 + $0x12f] sm:$0xff]
      %v4729 = vld [vmem:[%s4708 + $0x147] sm:$0xff]
      %v4730 = vld [vmem:[%s4708 + $0x14f] sm:$0xff]
      %v4731 = vld [vmem:[%s4708 + $0x167] sm:$0xff]
      %v4732 = vld [vmem:[%s4708 + $0x16f] sm:$0xff]
      %v4733 = vld [vmem:[%s4708 + $0x187] sm:$0xff]
      %v4734 = vld [vmem:[%s4708 + $0x18f] sm:$0xff]
      %v4735 = vld [vmem:[%s4708 + $0x1a7] sm:$0xff]
      %v4736 = vld [vmem:[%s4708 + $0x1af] sm:$0xff]
      %v4737 = vld [vmem:[%s4708 + $0x1c7] sm:$0xff]
      %v4738 = vld [vmem:[%s4708 + $0x1cf] sm:$0xff]
      %v4739 = vld [vmem:[%s4708 + $0x1e7] sm:$0xff]
      %v4740 = vld [vmem:[%s4708 + $0x1ef] sm:$0xff]
      %s4741 = scalar_lea.vmem %s3, 48
      %v4742 = vld [vmem:[%s4741] sm:$0xff]
      %v4744 = vsel %vm2976, %v4709, 0
      %v4747 = vsel %vm2976, %v4710, 0
      %v4750 = vsel %vm2976, %v4711, 0
      %v4753 = vsel %vm2976, %v4712, 0
      %v4756 = vsel %vm2976, %v4713, 0
      %v4759 = vsel %vm2976, %v4714, 0
      %v4762 = vsel %vm2976, %v4715, 0
      %v4765 = vsel %vm2976, %v4716, 0
      %v4768 = vsel %vm2976, %v4717, 0
      %v4771 = vsel %vm2976, %v4718, 0
      %v4774 = vsel %vm2976, %v4719, 0
      %v4777 = vsel %vm2976, %v4720, 0
      %v4780 = vsel %vm2976, %v4721, 0
      %v4783 = vsel %vm2976, %v4722, 0
      %v4786 = vsel %vm2976, %v4723, 0
      %v4789 = vsel %vm2976, %v4724, 0
      %v4792 = vsel %vm2976, %v4725, 0
      %v4795 = vsel %vm2976, %v4726, 0
      %v4798 = vsel %vm2976, %v4727, 0
      %v4801 = vsel %vm2976, %v4728, 0
      %v4804 = vsel %vm2976, %v4729, 0
      %v4807 = vsel %vm2976, %v4730, 0
      %v4810 = vsel %vm2976, %v4731, 0
      %v4813 = vsel %vm2976, %v4732, 0
      %v4816 = vsel %vm2976, %v4733, 0
      %v4819 = vsel %vm2976, %v4734, 0
      %v4822 = vsel %vm2976, %v4735, 0
      %v4825 = vsel %vm2976, %v4736, 0
      %v4828 = vsel %vm2976, %v4737, 0
      %v4831 = vsel %vm2976, %v4738, 0
      %v4834 = vsel %vm2976, %v4739, 0
      %v4837 = vsel %vm2976, %v4740, 0
      %4839 = vmatpush.msra.mxu0 0.0
      %4840 = vmatpush.msra.mxu0 0.0
      %4841 = vmatpush.msra.mxu0 0.0
      %4842 = vmatpush.msra.mxu0 0.0
      %4843 = vmatpush.msra.mxu0 0.0
      %4844 = vmatpush.msra.mxu0 0.0
      %4845 = vmatpush.msra.mxu0 0.0
      %4846 = vmatpush.msra.mxu0 0.0
      %4847 = vmatpush.msra.mxu0 0.0
      %4848 = vmatpush.msra.mxu0 0.0
      %4849 = vmatpush.msra.mxu0 0.0
      %4850 = vmatpush.msra.mxu0 0.0
      %4851 = vmatpush.msra.mxu0 0.0
      %4852 = vmatpush.msra.mxu0 0.0
      %4853 = vmatpush.msra.mxu0 0.0
      %4854 = vmatpush.msra.mxu0 %v4742
      %4855 = vmatmul.f32.gmra.mxu0 %v4744
      %v4856 = vpop.f32.mrf.mxu0
      %v4857 = vadd.f32 0.0, %v4856
      %4858 = vmatmul.f32.gmra.mxu0 %v4747
      %v4859 = vpop.f32.mrf.mxu0
      %v4860 = vadd.f32 0.0, %v4859
      %4861 = vmatmul.f32.gmra.mxu0 %v4750
      %v4862 = vpop.f32.mrf.mxu0
      %v4863 = vadd.f32 0.0, %v4862
      %4864 = vmatmul.f32.gmra.mxu0 %v4753
      %v4865 = vpop.f32.mrf.mxu0
      %v4866 = vadd.f32 0.0, %v4865
      %4867 = vmatmul.f32.gmra.mxu0 %v4756
      %v4868 = vpop.f32.mrf.mxu0
      %v4869 = vadd.f32 0.0, %v4868
      %4870 = vmatmul.f32.gmra.mxu0 %v4759
      %v4871 = vpop.f32.mrf.mxu0
      %v4872 = vadd.f32 0.0, %v4871
      %4873 = vmatmul.f32.gmra.mxu0 %v4762
      %v4874 = vpop.f32.mrf.mxu0
      %v4875 = vadd.f32 0.0, %v4874
      %4876 = vmatmul.f32.gmra.mxu0 %v4765
      %v4877 = vpop.f32.mrf.mxu0
      %v4878 = vadd.f32 0.0, %v4877
      %4879 = vmatmul.f32.gmra.mxu0 %v4768
      %v4880 = vpop.f32.mrf.mxu0
      %v4881 = vadd.f32 0.0, %v4880
      %4882 = vmatmul.f32.gmra.mxu0 %v4771
      %v4883 = vpop.f32.mrf.mxu0
      %v4884 = vadd.f32 0.0, %v4883
      %4885 = vmatmul.f32.gmra.mxu0 %v4774
      %v4886 = vpop.f32.mrf.mxu0
      %v4887 = vadd.f32 0.0, %v4886
      %4888 = vmatmul.f32.gmra.mxu0 %v4777
      %v4889 = vpop.f32.mrf.mxu0
      %v4890 = vadd.f32 0.0, %v4889
      %4891 = vmatmul.f32.gmra.mxu0 %v4780
      %v4892 = vpop.f32.mrf.mxu0
      %v4893 = vadd.f32 0.0, %v4892
      %4894 = vmatmul.f32.gmra.mxu0 %v4783
      %v4895 = vpop.f32.mrf.mxu0
      %v4896 = vadd.f32 0.0, %v4895
      %4897 = vmatmul.f32.gmra.mxu0 %v4786
      %v4898 = vpop.f32.mrf.mxu0
      %v4899 = vadd.f32 0.0, %v4898
      %4900 = vmatmul.f32.gmra.mxu0 %v4789
      %v4901 = vpop.f32.mrf.mxu0
      %v4902 = vadd.f32 0.0, %v4901
      %4903 = vmatmul.f32.gmra.mxu0 %v4792
      %v4904 = vpop.f32.mrf.mxu0
      %v4905 = vadd.f32 0.0, %v4904
      %4906 = vmatmul.f32.gmra.mxu0 %v4795
      %v4907 = vpop.f32.mrf.mxu0
      %v4908 = vadd.f32 0.0, %v4907
      %4909 = vmatmul.f32.gmra.mxu0 %v4798
      %v4910 = vpop.f32.mrf.mxu0
      %v4911 = vadd.f32 0.0, %v4910
      %4912 = vmatmul.f32.gmra.mxu0 %v4801
      %v4913 = vpop.f32.mrf.mxu0
      %v4914 = vadd.f32 0.0, %v4913
      %4915 = vmatmul.f32.gmra.mxu0 %v4804
      %v4916 = vpop.f32.mrf.mxu0
      %v4917 = vadd.f32 0.0, %v4916
      %4918 = vmatmul.f32.gmra.mxu0 %v4807
      %v4919 = vpop.f32.mrf.mxu0
      %v4920 = vadd.f32 0.0, %v4919
      %4921 = vmatmul.f32.gmra.mxu0 %v4810
      %v4922 = vpop.f32.mrf.mxu0
      %v4923 = vadd.f32 0.0, %v4922
      %4924 = vmatmul.f32.gmra.mxu0 %v4813
      %v4925 = vpop.f32.mrf.mxu0
      %v4926 = vadd.f32 0.0, %v4925
      %4927 = vmatmul.f32.gmra.mxu0 %v4816
      %v4928 = vpop.f32.mrf.mxu0
      %v4929 = vadd.f32 0.0, %v4928
      %4930 = vmatmul.f32.gmra.mxu0 %v4819
      %v4931 = vpop.f32.mrf.mxu0
      %v4932 = vadd.f32 0.0, %v4931
      %4933 = vmatmul.f32.gmra.mxu0 %v4822
      %v4934 = vpop.f32.mrf.mxu0
      %v4935 = vadd.f32 0.0, %v4934
      %4936 = vmatmul.f32.gmra.mxu0 %v4825
      %v4937 = vpop.f32.mrf.mxu0
      %v4938 = vadd.f32 0.0, %v4937
      %4939 = vmatmul.f32.gmra.mxu0 %v4828
      %v4940 = vpop.f32.mrf.mxu0
      %v4941 = vadd.f32 0.0, %v4940
      %4942 = vmatmul.f32.gmra.mxu0 %v4831
      %v4943 = vpop.f32.mrf.mxu0
      %v4944 = vadd.f32 0.0, %v4943
      %4945 = vmatmul.f32.gmra.mxu0 %v4834
      %v4946 = vpop.f32.mrf.mxu0
      %v4947 = vadd.f32 0.0, %v4946
      %4948 = vmatmul.f32.gmra.mxu0 %v4837
      %v4949 = vpop.f32.mrf.mxu0
      %v4950 = vadd.f32 0.0, %v4949
      %4951 = vdwg.mxu0
      %v4952 = vadd.f32 %v4676, %v4857
      %v4953 = vadd.f32 %v4677, %v4860
      %v4954 = vadd.f32 %v4678, %v4863
      %v4955 = vadd.f32 %v4679, %v4866
      %v4956 = vadd.f32 %v4680, %v4869
      %v4957 = vadd.f32 %v4681, %v4872
      %v4958 = vadd.f32 %v4682, %v4875
      %v4959 = vadd.f32 %v4683, %v4878
      %v4960 = vadd.f32 %v4684, %v4881
      %v4961 = vadd.f32 %v4685, %v4884
      %v4962 = vadd.f32 %v4686, %v4887
      %v4963 = vadd.f32 %v4687, %v4890
      %v4964 = vadd.f32 %v4688, %v4893
      %v4965 = vadd.f32 %v4689, %v4896
      %v4966 = vadd.f32 %v4690, %v4899
      %v4967 = vadd.f32 %v4691, %v4902
      %v4968 = vadd.f32 %v4692, %v4905
      %v4969 = vadd.f32 %v4693, %v4908
      %v4970 = vadd.f32 %v4694, %v4911
      %v4971 = vadd.f32 %v4695, %v4914
      %v4972 = vadd.f32 %v4696, %v4917
      %v4973 = vadd.f32 %v4697, %v4920
      %v4974 = vadd.f32 %v4698, %v4923
      %v4975 = vadd.f32 %v4699, %v4926
      %v4976 = vadd.f32 %v4700, %v4929
      %v4977 = vadd.f32 %v4701, %v4932
      %v4978 = vadd.f32 %v4702, %v4935
      %v4979 = vadd.f32 %v4703, %v4938
      %v4980 = vadd.f32 %v4704, %v4941
      %v4981 = vadd.f32 %v4705, %v4944
      %v4982 = vadd.f32 %v4706, %v4947
      %v4983 = vadd.f32 %v4707, %v4950
      %v4984 = vld [vmem:[%s4708 + $0x8] sm:$0xff]
      %v4985 = vld [vmem:[%s4708 + $0x10] sm:$0xff]
      %v4986 = vld [vmem:[%s4708 + $0x28] sm:$0xff]
      %v4987 = vld [vmem:[%s4708 + $0x30] sm:$0xff]
      %v4988 = vld [vmem:[%s4708 + $0x48] sm:$0xff]
      %v4989 = vld [vmem:[%s4708 + $0x50] sm:$0xff]
      %v4990 = vld [vmem:[%s4708 + $0x68] sm:$0xff]
      %v4991 = vld [vmem:[%s4708 + $0x70] sm:$0xff]
      %v4992 = vld [vmem:[%s4708 + $0x88] sm:$0xff]
      %v4993 = vld [vmem:[%s4708 + $0x90] sm:$0xff]
      %v4994 = vld [vmem:[%s4708 + $0xa8] sm:$0xff]
      %v4995 = vld [vmem:[%s4708 + $0xb0] sm:$0xff]
      %v4996 = vld [vmem:[%s4708 + $0xc8] sm:$0xff]
      %v4997 = vld [vmem:[%s4708 + $0xd0] sm:$0xff]
      %v4998 = vld [vmem:[%s4708 + $0xe8] sm:$0xff]
      %v4999 = vld [vmem:[%s4708 + $0xf0] sm:$0xff]
      %v5000 = vld [vmem:[%s4708 + $0x108] sm:$0xff]
      %v5001 = vld [vmem:[%s4708 + $0x110] sm:$0xff]
      %v5002 = vld [vmem:[%s4708 + $0x128] sm:$0xff]
      %v5003 = vld [vmem:[%s4708 + $0x130] sm:$0xff]
      %v5004 = vld [vmem:[%s4708 + $0x148] sm:$0xff]
      %v5005 = vld [vmem:[%s4708 + $0x150] sm:$0xff]
      %v5006 = vld [vmem:[%s4708 + $0x168] sm:$0xff]
      %v5007 = vld [vmem:[%s4708 + $0x170] sm:$0xff]
      %v5008 = vld [vmem:[%s4708 + $0x188] sm:$0xff]
      %v5009 = vld [vmem:[%s4708 + $0x190] sm:$0xff]
      %v5010 = vld [vmem:[%s4708 + $0x1a8] sm:$0xff]
      %v5011 = vld [vmem:[%s4708 + $0x1b0] sm:$0xff]
      %v5012 = vld [vmem:[%s4708 + $0x1c8] sm:$0xff]
      %v5013 = vld [vmem:[%s4708 + $0x1d0] sm:$0xff]
      %v5014 = vld [vmem:[%s4708 + $0x1e8] sm:$0xff]
      %v5015 = vld [vmem:[%s4708 + $0x1f0] sm:$0xff]
      %s5016 = scalar_lea.vmem %s3, 56
      %v5017 = vld [vmem:[%s5016] sm:$0xff]
      %v5019 = vsel %vm2976, %v4984, 0
      %v5022 = vsel %vm2976, %v4985, 0
      %v5025 = vsel %vm2976, %v4986, 0
      %v5028 = vsel %vm2976, %v4987, 0
      %v5031 = vsel %vm2976, %v4988, 0
      %v5034 = vsel %vm2976, %v4989, 0
      %v5037 = vsel %vm2976, %v4990, 0
      %v5040 = vsel %vm2976, %v4991, 0
      %v5043 = vsel %vm2976, %v4992, 0
      %v5046 = vsel %vm2976, %v4993, 0
      %v5049 = vsel %vm2976, %v4994, 0
      %v5052 = vsel %vm2976, %v4995, 0
      %v5055 = vsel %vm2976, %v4996, 0
      %v5058 = vsel %vm2976, %v4997, 0
      %v5061 = vsel %vm2976, %v4998, 0
      %v5064 = vsel %vm2976, %v4999, 0
      %v5067 = vsel %vm2976, %v5000, 0
      %v5070 = vsel %vm2976, %v5001, 0
      %v5073 = vsel %vm2976, %v5002, 0
      %v5076 = vsel %vm2976, %v5003, 0
      %v5079 = vsel %vm2976, %v5004, 0
      %v5082 = vsel %vm2976, %v5005, 0
      %v5085 = vsel %vm2976, %v5006, 0
      %v5088 = vsel %vm2976, %v5007, 0
      %v5091 = vsel %vm2976, %v5008, 0
      %v5094 = vsel %vm2976, %v5009, 0
      %v5097 = vsel %vm2976, %v5010, 0
      %v5100 = vsel %vm2976, %v5011, 0
      %v5103 = vsel %vm2976, %v5012, 0
      %v5106 = vsel %vm2976, %v5013, 0
      %v5109 = vsel %vm2976, %v5014, 0
      %v5112 = vsel %vm2976, %v5015, 0
      %5114 = vmatpush.msra.mxu0 0.0
      %5115 = vmatpush.msra.mxu0 0.0
      %5116 = vmatpush.msra.mxu0 0.0
      %5117 = vmatpush.msra.mxu0 0.0
      %5118 = vmatpush.msra.mxu0 0.0
      %5119 = vmatpush.msra.mxu0 0.0
      %5120 = vmatpush.msra.mxu0 0.0
      %5121 = vmatpush.msra.mxu0 0.0
      %5122 = vmatpush.msra.mxu0 0.0
      %5123 = vmatpush.msra.mxu0 0.0
      %5124 = vmatpush.msra.mxu0 0.0
      %5125 = vmatpush.msra.mxu0 0.0
      %5126 = vmatpush.msra.mxu0 0.0
      %5127 = vmatpush.msra.mxu0 0.0
      %5128 = vmatpush.msra.mxu0 0.0
      %5129 = vmatpush.msra.mxu0 %v5017
      %5130 = vmatmul.f32.gmra.mxu0 %v5019
      %v5131 = vpop.f32.mrf.mxu0
      %v5132 = vadd.f32 0.0, %v5131
      %5133 = vmatmul.f32.gmra.mxu0 %v5022
      %v5134 = vpop.f32.mrf.mxu0
      %v5135 = vadd.f32 0.0, %v5134
      %5136 = vmatmul.f32.gmra.mxu0 %v5025
      %v5137 = vpop.f32.mrf.mxu0
      %v5138 = vadd.f32 0.0, %v5137
      %5139 = vmatmul.f32.gmra.mxu0 %v5028
      %v5140 = vpop.f32.mrf.mxu0
      %v5141 = vadd.f32 0.0, %v5140
      %5142 = vmatmul.f32.gmra.mxu0 %v5031
      %v5143 = vpop.f32.mrf.mxu0
      %v5144 = vadd.f32 0.0, %v5143
      %5145 = vmatmul.f32.gmra.mxu0 %v5034
      %v5146 = vpop.f32.mrf.mxu0
      %v5147 = vadd.f32 0.0, %v5146
      %5148 = vmatmul.f32.gmra.mxu0 %v5037
      %v5149 = vpop.f32.mrf.mxu0
      %v5150 = vadd.f32 0.0, %v5149
      %5151 = vmatmul.f32.gmra.mxu0 %v5040
      %v5152 = vpop.f32.mrf.mxu0
      %v5153 = vadd.f32 0.0, %v5152
      %5154 = vmatmul.f32.gmra.mxu0 %v5043
      %v5155 = vpop.f32.mrf.mxu0
      %v5156 = vadd.f32 0.0, %v5155
      %5157 = vmatmul.f32.gmra.mxu0 %v5046
      %v5158 = vpop.f32.mrf.mxu0
      %v5159 = vadd.f32 0.0, %v5158
      %5160 = vmatmul.f32.gmra.mxu0 %v5049
      %v5161 = vpop.f32.mrf.mxu0
      %v5162 = vadd.f32 0.0, %v5161
      %5163 = vmatmul.f32.gmra.mxu0 %v5052
      %v5164 = vpop.f32.mrf.mxu0
      %v5165 = vadd.f32 0.0, %v5164
      %5166 = vmatmul.f32.gmra.mxu0 %v5055
      %v5167 = vpop.f32.mrf.mxu0
      %v5168 = vadd.f32 0.0, %v5167
      %5169 = vmatmul.f32.gmra.mxu0 %v5058
      %v5170 = vpop.f32.mrf.mxu0
      %v5171 = vadd.f32 0.0, %v5170
      %5172 = vmatmul.f32.gmra.mxu0 %v5061
      %v5173 = vpop.f32.mrf.mxu0
      %v5174 = vadd.f32 0.0, %v5173
      %5175 = vmatmul.f32.gmra.mxu0 %v5064
      %v5176 = vpop.f32.mrf.mxu0
      %v5177 = vadd.f32 0.0, %v5176
      %5178 = vmatmul.f32.gmra.mxu0 %v5067
      %v5179 = vpop.f32.mrf.mxu0
      %v5180 = vadd.f32 0.0, %v5179
      %5181 = vmatmul.f32.gmra.mxu0 %v5070
      %v5182 = vpop.f32.mrf.mxu0
      %v5183 = vadd.f32 0.0, %v5182
      %5184 = vmatmul.f32.gmra.mxu0 %v5073
      %v5185 = vpop.f32.mrf.mxu0
      %v5186 = vadd.f32 0.0, %v5185
      %5187 = vmatmul.f32.gmra.mxu0 %v5076
      %v5188 = vpop.f32.mrf.mxu0
      %v5189 = vadd.f32 0.0, %v5188
      %5190 = vmatmul.f32.gmra.mxu0 %v5079
      %v5191 = vpop.f32.mrf.mxu0
      %v5192 = vadd.f32 0.0, %v5191
      %5193 = vmatmul.f32.gmra.mxu0 %v5082
      %v5194 = vpop.f32.mrf.mxu0
      %v5195 = vadd.f32 0.0, %v5194
      %5196 = vmatmul.f32.gmra.mxu0 %v5085
      %v5197 = vpop.f32.mrf.mxu0
      %v5198 = vadd.f32 0.0, %v5197
      %5199 = vmatmul.f32.gmra.mxu0 %v5088
      %v5200 = vpop.f32.mrf.mxu0
      %v5201 = vadd.f32 0.0, %v5200
      %5202 = vmatmul.f32.gmra.mxu0 %v5091
      %v5203 = vpop.f32.mrf.mxu0
      %v5204 = vadd.f32 0.0, %v5203
      %5205 = vmatmul.f32.gmra.mxu0 %v5094
      %v5206 = vpop.f32.mrf.mxu0
      %v5207 = vadd.f32 0.0, %v5206
      %5208 = vmatmul.f32.gmra.mxu0 %v5097
      %v5209 = vpop.f32.mrf.mxu0
      %v5210 = vadd.f32 0.0, %v5209
      %5211 = vmatmul.f32.gmra.mxu0 %v5100
      %v5212 = vpop.f32.mrf.mxu0
      %v5213 = vadd.f32 0.0, %v5212
      %5214 = vmatmul.f32.gmra.mxu0 %v5103
      %v5215 = vpop.f32.mrf.mxu0
      %v5216 = vadd.f32 0.0, %v5215
      %5217 = vmatmul.f32.gmra.mxu0 %v5106
      %v5218 = vpop.f32.mrf.mxu0
      %v5219 = vadd.f32 0.0, %v5218
      %5220 = vmatmul.f32.gmra.mxu0 %v5109
      %v5221 = vpop.f32.mrf.mxu0
      %v5222 = vadd.f32 0.0, %v5221
      %5223 = vmatmul.f32.gmra.mxu0 %v5112
      %v5224 = vpop.f32.mrf.mxu0
      %v5225 = vadd.f32 0.0, %v5224
      %5226 = vdwg.mxu0
      %v5227 = vadd.f32 %v4952, %v5132
      %v5228 = vadd.f32 %v4953, %v5135
      %v5229 = vadd.f32 %v4954, %v5138
      %v5230 = vadd.f32 %v4955, %v5141
      %v5231 = vadd.f32 %v4956, %v5144
      %v5232 = vadd.f32 %v4957, %v5147
      %v5233 = vadd.f32 %v4958, %v5150
      %v5234 = vadd.f32 %v4959, %v5153
      %v5235 = vadd.f32 %v4960, %v5156
      %v5236 = vadd.f32 %v4961, %v5159
      %v5237 = vadd.f32 %v4962, %v5162
      %v5238 = vadd.f32 %v4963, %v5165
      %v5239 = vadd.f32 %v4964, %v5168
      %v5240 = vadd.f32 %v4965, %v5171
      %v5241 = vadd.f32 %v4966, %v5174
      %v5242 = vadd.f32 %v4967, %v5177
      %v5243 = vadd.f32 %v4968, %v5180
      %v5244 = vadd.f32 %v4969, %v5183
      %v5245 = vadd.f32 %v4970, %v5186
      %v5246 = vadd.f32 %v4971, %v5189
      %v5247 = vadd.f32 %v4972, %v5192
      %v5248 = vadd.f32 %v4973, %v5195
      %v5249 = vadd.f32 %v4974, %v5198
      %v5250 = vadd.f32 %v4975, %v5201
      %v5251 = vadd.f32 %v4976, %v5204
      %v5252 = vadd.f32 %v4977, %v5207
      %v5253 = vadd.f32 %v4978, %v5210
      %v5254 = vadd.f32 %v4979, %v5213
      %v5255 = vadd.f32 %v4980, %v5216
      %v5256 = vadd.f32 %v4981, %v5219
      %v5257 = vadd.f32 %v4982, %v5222
      %v5258 = vadd.f32 %v4983, %v5225
      %v5259 = vld [vmem:[%s4708 + $0x9] sm:$0xff]
      %v5260 = vld [vmem:[%s4708 + $0x11] sm:$0xff]
      %v5261 = vld [vmem:[%s4708 + $0x29] sm:$0xff]
      %v5262 = vld [vmem:[%s4708 + $0x31] sm:$0xff]
      %v5263 = vld [vmem:[%s4708 + $0x49] sm:$0xff]
      %v5264 = vld [vmem:[%s4708 + $0x51] sm:$0xff]
      %v5265 = vld [vmem:[%s4708 + $0x69] sm:$0xff]
      %v5266 = vld [vmem:[%s4708 + $0x71] sm:$0xff]
      %v5267 = vld [vmem:[%s4708 + $0x89] sm:$0xff]
      %v5268 = vld [vmem:[%s4708 + $0x91] sm:$0xff]
      %v5269 = vld [vmem:[%s4708 + $0xa9] sm:$0xff]
      %v5270 = vld [vmem:[%s4708 + $0xb1] sm:$0xff]
      %v5271 = vld [vmem:[%s4708 + $0xc9] sm:$0xff]
      %v5272 = vld [vmem:[%s4708 + $0xd1] sm:$0xff]
      %v5273 = vld [vmem:[%s4708 + $0xe9] sm:$0xff]
      %v5274 = vld [vmem:[%s4708 + $0xf1] sm:$0xff]
      %v5275 = vld [vmem:[%s4708 + $0x109] sm:$0xff]
      %v5276 = vld [vmem:[%s4708 + $0x111] sm:$0xff]
      %v5277 = vld [vmem:[%s4708 + $0x129] sm:$0xff]
      %v5278 = vld [vmem:[%s4708 + $0x131] sm:$0xff]
      %v5279 = vld [vmem:[%s4708 + $0x149] sm:$0xff]
      %v5280 = vld [vmem:[%s4708 + $0x151] sm:$0xff]
      %v5281 = vld [vmem:[%s4708 + $0x169] sm:$0xff]
      %v5282 = vld [vmem:[%s4708 + $0x171] sm:$0xff]
      %v5283 = vld [vmem:[%s4708 + $0x189] sm:$0xff]
      %v5284 = vld [vmem:[%s4708 + $0x191] sm:$0xff]
      %v5285 = vld [vmem:[%s4708 + $0x1a9] sm:$0xff]
      %v5286 = vld [vmem:[%s4708 + $0x1b1] sm:$0xff]
      %v5287 = vld [vmem:[%s4708 + $0x1c9] sm:$0xff]
      %v5288 = vld [vmem:[%s4708 + $0x1d1] sm:$0xff]
      %v5289 = vld [vmem:[%s4708 + $0x1e9] sm:$0xff]
      %v5290 = vld [vmem:[%s4708 + $0x1f1] sm:$0xff]
      %s5291 = scalar_lea.vmem %s3, 64
      %v5292 = vld [vmem:[%s5291] sm:$0xff]
      %v5294 = vsel %vm2976, %v5259, 0
      %v5297 = vsel %vm2976, %v5260, 0
      %v5300 = vsel %vm2976, %v5261, 0
      %v5303 = vsel %vm2976, %v5262, 0
      %v5306 = vsel %vm2976, %v5263, 0
      %v5309 = vsel %vm2976, %v5264, 0
      %v5312 = vsel %vm2976, %v5265, 0
      %v5315 = vsel %vm2976, %v5266, 0
      %v5318 = vsel %vm2976, %v5267, 0
      %v5321 = vsel %vm2976, %v5268, 0
      %v5324 = vsel %vm2976, %v5269, 0
      %v5327 = vsel %vm2976, %v5270, 0
      %v5330 = vsel %vm2976, %v5271, 0
      %v5333 = vsel %vm2976, %v5272, 0
      %v5336 = vsel %vm2976, %v5273, 0
      %v5339 = vsel %vm2976, %v5274, 0
      %v5342 = vsel %vm2976, %v5275, 0
      %v5345 = vsel %vm2976, %v5276, 0
      %v5348 = vsel %vm2976, %v5277, 0
      %v5351 = vsel %vm2976, %v5278, 0
      %v5354 = vsel %vm2976, %v5279, 0
      %v5357 = vsel %vm2976, %v5280, 0
      %v5360 = vsel %vm2976, %v5281, 0
      %v5363 = vsel %vm2976, %v5282, 0
      %v5366 = vsel %vm2976, %v5283, 0
      %v5369 = vsel %vm2976, %v5284, 0
      %v5372 = vsel %vm2976, %v5285, 0
      %v5375 = vsel %vm2976, %v5286, 0
      %v5378 = vsel %vm2976, %v5287, 0
      %v5381 = vsel %vm2976, %v5288, 0
      %v5384 = vsel %vm2976, %v5289, 0
      %v5387 = vsel %vm2976, %v5290, 0
      %5389 = vmatpush.msra.mxu0 0.0
      %5390 = vmatpush.msra.mxu0 0.0
      %5391 = vmatpush.msra.mxu0 0.0
      %5392 = vmatpush.msra.mxu0 0.0
      %5393 = vmatpush.msra.mxu0 0.0
      %5394 = vmatpush.msra.mxu0 0.0
      %5395 = vmatpush.msra.mxu0 0.0
      %5396 = vmatpush.msra.mxu0 0.0
      %5397 = vmatpush.msra.mxu0 0.0
      %5398 = vmatpush.msra.mxu0 0.0
      %5399 = vmatpush.msra.mxu0 0.0
      %5400 = vmatpush.msra.mxu0 0.0
      %5401 = vmatpush.msra.mxu0 0.0
      %5402 = vmatpush.msra.mxu0 0.0
      %5403 = vmatpush.msra.mxu0 0.0
      %5404 = vmatpush.msra.mxu0 %v5292
      %5405 = vmatmul.f32.gmra.mxu0 %v5294
      %v5406 = vpop.f32.mrf.mxu0
      %v5407 = vadd.f32 0.0, %v5406
      %5408 = vmatmul.f32.gmra.mxu0 %v5297
      %v5409 = vpop.f32.mrf.mxu0
      %v5410 = vadd.f32 0.0, %v5409
      %5411 = vmatmul.f32.gmra.mxu0 %v5300
      %v5412 = vpop.f32.mrf.mxu0
      %v5413 = vadd.f32 0.0, %v5412
      %5414 = vmatmul.f32.gmra.mxu0 %v5303
      %v5415 = vpop.f32.mrf.mxu0
      %v5416 = vadd.f32 0.0, %v5415
      %5417 = vmatmul.f32.gmra.mxu0 %v5306
      %v5418 = vpop.f32.mrf.mxu0
      %v5419 = vadd.f32 0.0, %v5418
      %5420 = vmatmul.f32.gmra.mxu0 %v5309
      %v5421 = vpop.f32.mrf.mxu0
      %v5422 = vadd.f32 0.0, %v5421
      %5423 = vmatmul.f32.gmra.mxu0 %v5312
      %v5424 = vpop.f32.mrf.mxu0
      %v5425 = vadd.f32 0.0, %v5424
      %5426 = vmatmul.f32.gmra.mxu0 %v5315
      %v5427 = vpop.f32.mrf.mxu0
      %v5428 = vadd.f32 0.0, %v5427
      %5429 = vmatmul.f32.gmra.mxu0 %v5318
      %v5430 = vpop.f32.mrf.mxu0
      %v5431 = vadd.f32 0.0, %v5430
      %5432 = vmatmul.f32.gmra.mxu0 %v5321
      %v5433 = vpop.f32.mrf.mxu0
      %v5434 = vadd.f32 0.0, %v5433
      %5435 = vmatmul.f32.gmra.mxu0 %v5324
      %v5436 = vpop.f32.mrf.mxu0
      %v5437 = vadd.f32 0.0, %v5436
      %5438 = vmatmul.f32.gmra.mxu0 %v5327
      %v5439 = vpop.f32.mrf.mxu0
      %v5440 = vadd.f32 0.0, %v5439
      %5441 = vmatmul.f32.gmra.mxu0 %v5330
      %v5442 = vpop.f32.mrf.mxu0
      %v5443 = vadd.f32 0.0, %v5442
      %5444 = vmatmul.f32.gmra.mxu0 %v5333
      %v5445 = vpop.f32.mrf.mxu0
      %v5446 = vadd.f32 0.0, %v5445
      %5447 = vmatmul.f32.gmra.mxu0 %v5336
      %v5448 = vpop.f32.mrf.mxu0
      %v5449 = vadd.f32 0.0, %v5448
      %5450 = vmatmul.f32.gmra.mxu0 %v5339
      %v5451 = vpop.f32.mrf.mxu0
      %v5452 = vadd.f32 0.0, %v5451
      %5453 = vmatmul.f32.gmra.mxu0 %v5342
      %v5454 = vpop.f32.mrf.mxu0
      %v5455 = vadd.f32 0.0, %v5454
      %5456 = vmatmul.f32.gmra.mxu0 %v5345
      %v5457 = vpop.f32.mrf.mxu0
      %v5458 = vadd.f32 0.0, %v5457
      %5459 = vmatmul.f32.gmra.mxu0 %v5348
      %v5460 = vpop.f32.mrf.mxu0
      %v5461 = vadd.f32 0.0, %v5460
      %5462 = vmatmul.f32.gmra.mxu0 %v5351
      %v5463 = vpop.f32.mrf.mxu0
      %v5464 = vadd.f32 0.0, %v5463
      %5465 = vmatmul.f32.gmra.mxu0 %v5354
      %v5466 = vpop.f32.mrf.mxu0
      %v5467 = vadd.f32 0.0, %v5466
      %5468 = vmatmul.f32.gmra.mxu0 %v5357
      %v5469 = vpop.f32.mrf.mxu0
      %v5470 = vadd.f32 0.0, %v5469
      %5471 = vmatmul.f32.gmra.mxu0 %v5360
      %v5472 = vpop.f32.mrf.mxu0
      %v5473 = vadd.f32 0.0, %v5472
      %5474 = vmatmul.f32.gmra.mxu0 %v5363
      %v5475 = vpop.f32.mrf.mxu0
      %v5476 = vadd.f32 0.0, %v5475
      %5477 = vmatmul.f32.gmra.mxu0 %v5366
      %v5478 = vpop.f32.mrf.mxu0
      %v5479 = vadd.f32 0.0, %v5478
      %5480 = vmatmul.f32.gmra.mxu0 %v5369
      %v5481 = vpop.f32.mrf.mxu0
      %v5482 = vadd.f32 0.0, %v5481
      %5483 = vmatmul.f32.gmra.mxu0 %v5372
      %v5484 = vpop.f32.mrf.mxu0
      %v5485 = vadd.f32 0.0, %v5484
      %5486 = vmatmul.f32.gmra.mxu0 %v5375
      %v5487 = vpop.f32.mrf.mxu0
      %v5488 = vadd.f32 0.0, %v5487
      %5489 = vmatmul.f32.gmra.mxu0 %v5378
      %v5490 = vpop.f32.mrf.mxu0
      %v5491 = vadd.f32 0.0, %v5490
      %5492 = vmatmul.f32.gmra.mxu0 %v5381
      %v5493 = vpop.f32.mrf.mxu0
      %v5494 = vadd.f32 0.0, %v5493
      %5495 = vmatmul.f32.gmra.mxu0 %v5384
      %v5496 = vpop.f32.mrf.mxu0
      %v5497 = vadd.f32 0.0, %v5496
      %5498 = vmatmul.f32.gmra.mxu0 %v5387
      %v5499 = vpop.f32.mrf.mxu0
      %v5500 = vadd.f32 0.0, %v5499
      %5501 = vdwg.mxu0
      %v5502 = vadd.f32 %v5227, %v5407
      %v5503 = vadd.f32 %v5228, %v5410
      %v5504 = vadd.f32 %v5229, %v5413
      %v5505 = vadd.f32 %v5230, %v5416
      %v5506 = vadd.f32 %v5231, %v5419
      %v5507 = vadd.f32 %v5232, %v5422
      %v5508 = vadd.f32 %v5233, %v5425
      %v5509 = vadd.f32 %v5234, %v5428
      %v5510 = vadd.f32 %v5235, %v5431
      %v5511 = vadd.f32 %v5236, %v5434
      %v5512 = vadd.f32 %v5237, %v5437
      %v5513 = vadd.f32 %v5238, %v5440
      %v5514 = vadd.f32 %v5239, %v5443
      %v5515 = vadd.f32 %v5240, %v5446
      %v5516 = vadd.f32 %v5241, %v5449
      %v5517 = vadd.f32 %v5242, %v5452
      %v5518 = vadd.f32 %v5243, %v5455
      %v5519 = vadd.f32 %v5244, %v5458
      %v5520 = vadd.f32 %v5245, %v5461
      %v5521 = vadd.f32 %v5246, %v5464
      %v5522 = vadd.f32 %v5247, %v5467
      %v5523 = vadd.f32 %v5248, %v5470
      %v5524 = vadd.f32 %v5249, %v5473
      %v5525 = vadd.f32 %v5250, %v5476
      %v5526 = vadd.f32 %v5251, %v5479
      %v5527 = vadd.f32 %v5252, %v5482
      %v5528 = vadd.f32 %v5253, %v5485
      %v5529 = vadd.f32 %v5254, %v5488
      %v5530 = vadd.f32 %v5255, %v5491
      %v5531 = vadd.f32 %v5256, %v5494
      %v5532 = vadd.f32 %v5257, %v5497
      %v5533 = vadd.f32 %v5258, %v5500
      %v5535 = vperm.slane %v3122, 0
      %v5537 = vadd.f32 %v5502, %v5535
      %v5538 = vadd.f32 %v5503, %v5535
      %v5539 = vadd.f32 %v5504, %v5535
      %v5540 = vadd.f32 %v5505, %v5535
      %v5541 = vadd.f32 %v5506, %v5535
      %v5542 = vadd.f32 %v5507, %v5535
      %v5543 = vadd.f32 %v5508, %v5535
      %v5544 = vadd.f32 %v5509, %v5535
      %v5545 = vadd.f32 %v5510, %v5535
      %v5546 = vadd.f32 %v5511, %v5535
      %v5547 = vadd.f32 %v5512, %v5535
      %v5548 = vadd.f32 %v5513, %v5535
      %v5549 = vadd.f32 %v5514, %v5535
      %v5550 = vadd.f32 %v5515, %v5535
      %v5551 = vadd.f32 %v5516, %v5535
      %v5552 = vadd.f32 %v5517, %v5535
      %v5553 = vadd.f32 %v5518, %v5535
      %v5554 = vadd.f32 %v5519, %v5535
      %v5555 = vadd.f32 %v5520, %v5535
      %v5556 = vadd.f32 %v5521, %v5535
      %v5557 = vadd.f32 %v5522, %v5535
      %v5558 = vadd.f32 %v5523, %v5535
      %v5559 = vadd.f32 %v5524, %v5535
      %v5560 = vadd.f32 %v5525, %v5535
      %v5561 = vadd.f32 %v5526, %v5535
      %v5562 = vadd.f32 %v5527, %v5535
      %v5563 = vadd.f32 %v5528, %v5535
      %v5564 = vadd.f32 %v5529, %v5535
      %v5565 = vadd.f32 %v5530, %v5535
      %v5566 = vadd.f32 %v5531, %v5535
      %v5567 = vadd.f32 %v5532, %v5535
      %v5568 = vadd.f32 %v5533, %v5535
      %vm5569 = vcmp.gt.f32.partialorder %v5537, 0.0
      %vm5570 = vcmp.gt.f32.partialorder %v5538, 0.0
      %vm5571 = vcmp.gt.f32.partialorder %v5539, 0.0
      %vm5572 = vcmp.gt.f32.partialorder %v5540, 0.0
      %vm5573 = vcmp.gt.f32.partialorder %v5541, 0.0
      %vm5574 = vcmp.gt.f32.partialorder %v5542, 0.0
      %vm5575 = vcmp.gt.f32.partialorder %v5543, 0.0
      %vm5576 = vcmp.gt.f32.partialorder %v5544, 0.0
      %vm5577 = vcmp.gt.f32.partialorder %v5545, 0.0
      %vm5578 = vcmp.gt.f32.partialorder %v5546, 0.0
      %vm5579 = vcmp.gt.f32.partialorder %v5547, 0.0
      %vm5580 = vcmp.gt.f32.partialorder %v5548, 0.0
      %vm5581 = vcmp.gt.f32.partialorder %v5549, 0.0
      %vm5582 = vcmp.gt.f32.partialorder %v5550, 0.0
      %vm5583 = vcmp.gt.f32.partialorder %v5551, 0.0
      %vm5584 = vcmp.gt.f32.partialorder %v5552, 0.0
      %vm5585 = vcmp.gt.f32.partialorder %v5553, 0.0
      %vm5586 = vcmp.gt.f32.partialorder %v5554, 0.0
      %vm5587 = vcmp.gt.f32.partialorder %v5555, 0.0
      %vm5588 = vcmp.gt.f32.partialorder %v5556, 0.0
      %vm5589 = vcmp.gt.f32.partialorder %v5557, 0.0
      %vm5590 = vcmp.gt.f32.partialorder %v5558, 0.0
      %vm5591 = vcmp.gt.f32.partialorder %v5559, 0.0
      %vm5592 = vcmp.gt.f32.partialorder %v5560, 0.0
      %vm5593 = vcmp.gt.f32.partialorder %v5561, 0.0
      %vm5594 = vcmp.gt.f32.partialorder %v5562, 0.0
      %vm5595 = vcmp.gt.f32.partialorder %v5563, 0.0
      %vm5596 = vcmp.gt.f32.partialorder %v5564, 0.0
      %vm5597 = vcmp.gt.f32.partialorder %v5565, 0.0
      %vm5598 = vcmp.gt.f32.partialorder %v5566, 0.0
      %vm5599 = vcmp.gt.f32.partialorder %v5567, 0.0
      %vm5600 = vcmp.gt.f32.partialorder %v5568, 0.0
      %v5601 = vmul.f32 %v5537, 0.01
      %v5602 = vmul.f32 %v5538, 0.01
      %v5603 = vmul.f32 %v5539, 0.01
      %v5604 = vmul.f32 %v5540, 0.01
      %v5605 = vmul.f32 %v5541, 0.01
      %v5606 = vmul.f32 %v5542, 0.01
      %v5607 = vmul.f32 %v5543, 0.01
      %v5608 = vmul.f32 %v5544, 0.01
      %v5609 = vmul.f32 %v5545, 0.01
      %v5610 = vmul.f32 %v5546, 0.01
      %v5611 = vmul.f32 %v5547, 0.01
      %v5612 = vmul.f32 %v5548, 0.01
      %v5613 = vmul.f32 %v5549, 0.01
      %v5614 = vmul.f32 %v5550, 0.01
      %v5615 = vmul.f32 %v5551, 0.01
      %v5616 = vmul.f32 %v5552, 0.01
      %v5617 = vmul.f32 %v5553, 0.01
      %v5618 = vmul.f32 %v5554, 0.01
      %v5619 = vmul.f32 %v5555, 0.01
      %v5620 = vmul.f32 %v5556, 0.01
      %v5621 = vmul.f32 %v5557, 0.01
      %v5622 = vmul.f32 %v5558, 0.01
      %v5623 = vmul.f32 %v5559, 0.01
      %v5624 = vmul.f32 %v5560, 0.01
      %v5625 = vmul.f32 %v5561, 0.01
      %v5626 = vmul.f32 %v5562, 0.01
      %v5627 = vmul.f32 %v5563, 0.01
      %v5628 = vmul.f32 %v5564, 0.01
      %v5629 = vmul.f32 %v5565, 0.01
      %v5630 = vmul.f32 %v5566, 0.01
      %v5631 = vmul.f32 %v5567, 0.01
      %v5632 = vmul.f32 %v5568, 0.01
      %v5633 = vsel %vm5569, %v5537, %v5601
      %v5634 = vsel %vm5570, %v5538, %v5602
      %v5635 = vsel %vm5571, %v5539, %v5603
      %v5636 = vsel %vm5572, %v5540, %v5604
      %v5637 = vsel %vm5573, %v5541, %v5605
      %v5638 = vsel %vm5574, %v5542, %v5606
      %v5639 = vsel %vm5575, %v5543, %v5607
      %v5640 = vsel %vm5576, %v5544, %v5608
      %v5641 = vsel %vm5577, %v5545, %v5609
      %v5642 = vsel %vm5578, %v5546, %v5610
      %v5643 = vsel %vm5579, %v5547, %v5611
      %v5644 = vsel %vm5580, %v5548, %v5612
      %v5645 = vsel %vm5581, %v5549, %v5613
      %v5646 = vsel %vm5582, %v5550, %v5614
      %v5647 = vsel %vm5583, %v5551, %v5615
      %v5648 = vsel %vm5584, %v5552, %v5616
      %v5649 = vsel %vm5585, %v5553, %v5617
      %v5650 = vsel %vm5586, %v5554, %v5618
      %v5651 = vsel %vm5587, %v5555, %v5619
      %v5652 = vsel %vm5588, %v5556, %v5620
      %v5653 = vsel %vm5589, %v5557, %v5621
      %v5654 = vsel %vm5590, %v5558, %v5622
      %v5655 = vsel %vm5591, %v5559, %v5623
      %v5656 = vsel %vm5592, %v5560, %v5624
      %v5657 = vsel %vm5593, %v5561, %v5625
      %v5658 = vsel %vm5594, %v5562, %v5626
      %v5659 = vsel %vm5595, %v5563, %v5627
      %v5660 = vsel %vm5596, %v5564, %v5628
      %v5661 = vsel %vm5597, %v5565, %v5629
      %v5662 = vsel %vm5598, %v5566, %v5630
      %v5663 = vsel %vm5599, %v5567, %v5631
      %v5664 = vsel %vm5600, %v5568, %v5632
      %v5665 = vmax.f32 %v5633, %v5635
      %v5666 = vmax.f32 %v5634, %v5636
      %v5667 = vmax.f32 %v5637, %v5639
      %v5668 = vmax.f32 %v5638, %v5640
      %v5669 = vmax.f32 %v5641, %v5643
      %v5670 = vmax.f32 %v5642, %v5644
      %v5671 = vmax.f32 %v5645, %v5647
      %v5672 = vmax.f32 %v5646, %v5648
      %v5673 = vmax.f32 %v5649, %v5651
      %v5674 = vmax.f32 %v5650, %v5652
      %v5675 = vmax.f32 %v5653, %v5655
      %v5676 = vmax.f32 %v5654, %v5656
      %v5677 = vmax.f32 %v5657, %v5659
      %v5678 = vmax.f32 %v5658, %v5660
      %v5679 = vmax.f32 %v5661, %v5663
      %v5680 = vmax.f32 %v5662, %v5664
      %5681 = vst.msk [vmem:[#allocation4] sm:$0xff] %vm2976, %v5665
      %5682 = vst.msk [vmem:[#allocation4 + $0x8] sm:$0xff] %vm2976, %v5666
      %5683 = vst.msk [vmem:[#allocation4 + $0x10] sm:$0xff] %vm2976, %v5667
      %5684 = vst.msk [vmem:[#allocation4 + $0x18] sm:$0xff] %vm2976, %v5668
      %5685 = vst.msk [vmem:[#allocation4 + $0x20] sm:$0xff] %vm2976, %v5669
      %5686 = vst.msk [vmem:[#allocation4 + $0x28] sm:$0xff] %vm2976, %v5670
      %5687 = vst.msk [vmem:[#allocation4 + $0x30] sm:$0xff] %vm2976, %v5671
      %5688 = vst.msk [vmem:[#allocation4 + $0x38] sm:$0xff] %vm2976, %v5672
      %5689 = vst.msk [vmem:[#allocation4 + $0x40] sm:$0xff] %vm2976, %v5673
      %5690 = vst.msk [vmem:[#allocation4 + $0x48] sm:$0xff] %vm2976, %v5674
      %5691 = vst.msk [vmem:[#allocation4 + $0x50] sm:$0xff] %vm2976, %v5675
      %5692 = vst.msk [vmem:[#allocation4 + $0x58] sm:$0xff] %vm2976, %v5676
      %5693 = vst.msk [vmem:[#allocation4 + $0x60] sm:$0xff] %vm2976, %v5677
      %5694 = vst.msk [vmem:[#allocation4 + $0x68] sm:$0xff] %vm2976, %v5678
      %5695 = vst.msk [vmem:[#allocation4 + $0x70] sm:$0xff] %vm2976, %v5679
      %5696 = vst.msk [vmem:[#allocation4 + $0x78] sm:$0xff] %vm2976, %v5680
      %v5697 = vld [vmem:[#allocation4] ss:$2 sm:$0xff]
      %s5698 = scalar_lea.vmem [#allocation4], 16
      %v5699 = vld [vmem:[%s5698] ss:$2 sm:$0xff]
      %s5700 = scalar_lea.vmem [#allocation4], 32
      %v5701 = vld [vmem:[%s5700] ss:$2 sm:$0xff]
      %s5702 = scalar_lea.vmem [#allocation4], 48
      %v5703 = vld [vmem:[%s5702] ss:$2 sm:$0xff]
      %s5704 = scalar_lea.vmem [#allocation4], 64
      %v5705 = vld [vmem:[%s5704] ss:$2 sm:$0xff]
      %s5706 = scalar_lea.vmem [#allocation4], 80
      %v5707 = vld [vmem:[%s5706] ss:$2 sm:$0xff]
      %s5708 = scalar_lea.vmem [#allocation4], 96
      %v5709 = vld [vmem:[%s5708] ss:$2 sm:$0xff]
      %s5710 = scalar_lea.vmem [#allocation4], 112
      %v5711 = vld [vmem:[%s5710] ss:$2 sm:$0xff]
      %s5712 = scalar_lea.vmem [#allocation4], 1
      %v5713 = vld [vmem:[%s5712] ss:$2 sm:$0xff]
      %s5714 = scalar_lea.vmem [#allocation4], 17
      %v5715 = vld [vmem:[%s5714] ss:$2 sm:$0xff]
      %s5716 = scalar_lea.vmem [#allocation4], 33
      %v5717 = vld [vmem:[%s5716] ss:$2 sm:$0xff]
      %s5718 = scalar_lea.vmem [#allocation4], 49
      %v5719 = vld [vmem:[%s5718] ss:$2 sm:$0xff]
      %s5720 = scalar_lea.vmem [#allocation4], 65
      %v5721 = vld [vmem:[%s5720] ss:$2 sm:$0xff]
      %s5722 = scalar_lea.vmem [#allocation4], 81
      %v5723 = vld [vmem:[%s5722] ss:$2 sm:$0xff]
      %s5724 = scalar_lea.vmem [#allocation4], 97
      %v5725 = vld [vmem:[%s5724] ss:$2 sm:$0xff]
      %s5726 = scalar_lea.vmem [#allocation4], 113
      %v5727 = vld [vmem:[%s5726] ss:$2 sm:$0xff]
      %v5728 = vmax.f32 %v5697, %v5713
      %v5729 = vmax.f32 %v5699, %v5715
      %v5730 = vmax.f32 %v5701, %v5717
      %v5731 = vmax.f32 %v5703, %v5719
      %v5732 = vmax.f32 %v5705, %v5721
      %v5733 = vmax.f32 %v5707, %v5723
      %v5734 = vmax.f32 %v5709, %v5725
      %v5735 = vmax.f32 %v5711, %v5727
      %5736 = vst.msk [vmem:[%s224] sm:$0xff] %vm2976, %v5728
      %5737 = vst.msk [vmem:[%s224 + $0x8] sm:$0xff] %vm2976, %v5729
      %5738 = vst.msk [vmem:[%s224 + $0x10] sm:$0xff] %vm2976, %v5730
      %5739 = vst.msk [vmem:[%s224 + $0x18] sm:$0xff] %vm2976, %v5731
      %5740 = vst.msk [vmem:[%s224 + $0x20] sm:$0xff] %vm2976, %v5732
      %5741 = vst.msk [vmem:[%s224 + $0x28] sm:$0xff] %vm2976, %v5733
      %5742 = vst.msk [vmem:[%s224 + $0x30] sm:$0xff] %vm2976, %v5734
      %5743 = vst.msk [vmem:[%s224 + $0x38] sm:$0xff] %vm2976, %v5735
      %p5744 = scmp.lt.s32.totalorder %s16, 1
      %s5745 = scalar_select %p5744, %s16, 1
      %s5746 = smul.addr %s5745, 8
      %s5747 = smul.addr %s5746, 8
      %s5748 = scalar_lea.vmem %s5, %s5747
      // Predicated region
      $region41: #{double_conv_block.1} parent=39 // pred_check
        %p5749 = pneg %p144
      $region42: #{double_conv_block.1} parent=39 // pred_check_branch
        %5751 = sbr.rel (%p5749) target = $region44
      $region43: #{double_conv_block.1} parent=39 // pred_region
        _
      $region44: #{double_conv_block.1} parent=39 // pred_fallthru
        _
    $region40: #{double_conv_block.1} parent=5 // pred_fallthru
      _
    %p5752 = scmp.le.s32.totalorder 2, %s11
    // Predicated region
    $region45: #{double_conv_block.1} parent=5 // pred_check
      %p5753 = pneg %p5752
    $region46: #{double_conv_block.1} parent=5 // pred_check_branch
      %5755 = sbr.rel (%p5753) target = $region48
    $region47: #{double_conv_block.1} parent=5 // pred_region
      %s5756 = ssub.s32 %s11, 2
      // Predicated region
      $region49: #{double_conv_block.1} parent=47 // pred_check
        %p5757 = pneg %p150
      $region50: #{double_conv_block.1} parent=47 // pred_check_branch
        %5759 = sbr.rel (%p5757) target = $region52
      $region51: #{double_conv_block.1} parent=47 // pred_region
        %p5760 = scmp.lt.s32.totalorder %s17, 1
        %s5761 = scalar_select %p5760, %s17, 1
        %s5762 = smul.addr %s5761, 8
        %s5763 = smul.addr %s5762, 8
        %s5764 = scalar_lea.vmem %s5, %s5763
      $region52: #{double_conv_block.1} parent=47 // pred_fallthru
        _
    $region48: #{double_conv_block.1} parent=5 // pred_fallthru
      _
  $region6: #{double_conv_block.1} parent=0 // loop_footer
    %s15 = sadd.s32 1, %s11
  $region7: #{double_conv_block.1} parent=0 // loop_footer_branch
    %10 = sbr.rel target = $region3
  $region8: #{double_conv_block.1} parent=0 // loop_exit
    _

</llo_original>
